<compile_context>
chip_gen: v5e
topology: v5e:2x2
jax: 0.10.0
libtpu: 0.0.40
codegen_flags: <defaults>
</compile_context>

<pallas_src>
import jax
import jax.numpy as jnp
import numpy as np
from jax import lax
from jax.experimental import pallas as pl
from jax.experimental.pallas import tpu as pltpu

POOL_KS = (5, 9, 13)
PH = 6   # top/bottom -inf pad rows (= 13 // 2); H is not the sublane axis
WL = 8   # left -inf pad cols rounded up to the sublane size (8) -> aligned stores
WR = 8   # right -inf pad cols (>= 6 needed by the cascade; 8 keeps WP 8-aligned)


def _hswish(v):
    # Hswish: x * relu6(x + 3) / 6
    return v * jnp.clip(v + 3.0, 0.0, 6.0) * (1.0 / 6.0)


def _pool5_level(a, wp):
    """One SPPF level on a full-width padded slab.

    H axis: VALID max over a window of 5 (log-tree of whole-(W,C)-tile slices,
            output has 4 fewer rows).
    W axis: SAME-centered max over a window of 5 (log-tree of pltpu.roll, XLU
            slot, full width kept; wrap-around only touches pad columns that are
            never read by the needed output region).
    """
    h = a.shape[0]
    # H axis (outer dim -> no sublane relayout), 3 maxes
    b = jnp.maximum(a[0:h - 1], a[1:h])            # window 2
    c = jnp.maximum(b[0:h - 3], b[2:h - 1])        # window 4
    d = jnp.maximum(c[0:h - 4], a[4:h])            # window 5 -> (h-4, wp, C)
    # W axis: rolls (XLU) overlap the VPU maxes, 3 maxes + 4 rolls
    s1 = jnp.maximum(d, pltpu.roll(d, wp - 1, axis=1))     # cols {j, j+1}
    s2 = jnp.maximum(s1, pltpu.roll(s1, wp - 2, axis=1))   # cols {j .. j+3}
    s3 = jnp.maximum(s2, pltpu.roll(d, wp - 4, axis=1))    # cols {j .. j+4}
    return pltpu.roll(s3, 2, axis=1)                       # center: {j-2 .. j+2}


# ---------------------------------------------------------------------------
# Fused kernel: cv1 -> [identity, pool5, pool9, pool13] -> cv2 (one image)
# ---------------------------------------------------------------------------
def _spp_fused_kernel(x_ref, w1_ref, b1_ref, w2_ref, b2_ref, o_ref, pad_ref):
    """
    x_ref  : (H, W, C1)            input image (batch dim squeezed)
    w1_ref : (C1, C)               cv1 weight with BN folded (matmul dtype)
    b1_ref : (1, C)                cv1 folded bias (f32)
    w2_ref : (4, C, C2)            cv2 weight split per SPP branch (matmul dtype)
    b2_ref : (1, C2)               cv2 folded bias (f32)
    o_ref  : (H, W, C2)            output block (f32)
    pad_ref: (H+2*PH, W+WL+WR, C)  VMEM scratch: -inf padded slab of y1 (f32)
    """
    H, W, C2 = o_ref.shape
    C1 = x_ref.shape[-1]
    C = w1_ref.shape[1]
    Hp, WP, _ = pad_ref.shape
    HW = H * W
    f32 = jnp.float32
    mm_dtype = w1_ref.dtype            # matmul operand dtype (f32 or bf16)

    # ---- cv1: 1x1 conv (BN folded) + Hswish, f32 accumulation ---------------
    x2d = x_ref[...].reshape(HW, C1)
    y1 = jnp.dot(x2d, w1_ref[...], preferred_element_type=f32)
    y1 = _hswish(y1 + b1_ref[...])                          # (HW, C), f32

    # ---- cv2 branch 0 (identity) fused immediately ---------------------------
    acc = jnp.dot(y1.astype(mm_dtype), w2_ref[0], preferred_element_type=f32)

    # ---- -inf padded slab: write only the 4 border strips + aligned interior -
    # (interior is fully overwritten each grid step; strips-every-step keeps it
    #  correct even when the batch axis is split across TensorCores)
    pad_ref[0:PH, :, :] = jnp.full((PH, WP, C), -jnp.inf, f32)
    pad_ref[PH + H:Hp, :, :] = jnp.full((Hp - PH - H, WP, C), -jnp.inf, f32)
    pad_ref[PH:PH + H, 0:WL, :] = jnp.full((H, WL, C), -jnp.inf, f32)
    pad_ref[PH:PH + H, WL + W:WP, :] = jnp.full((H, WP - WL - W, C), -jnp.inf, f32)
    pad_ref[PH:PH + H, WL:WL + W, :] = y1.reshape(H, W, C)  # W offset 8: aligned

    # ---- SPPF cascade interleaved with the cv2 partial matmuls --------------
    a1 = _pool5_level(pad_ref[...], WP)                     # == maxpool5 (H+8, WP)
    p5 = a1[4:4 + H, WL:WL + W, :].reshape(HW, C)
    acc = acc + jnp.dot(p5.astype(mm_dtype), w2_ref[1], preferred_element_type=f32)

    a2 = _pool5_level(a1, WP)                               # == maxpool9 (H+4, WP)
    p9 = a2[2:2 + H, WL:WL + W, :].reshape(HW, C)
    acc = acc + jnp.dot(p9.astype(mm_dtype), w2_ref[2], preferred_element_type=f32)

    a3 = _pool5_level(a2, WP)                               # == maxpool13 (H, WP)
    p13 = a3[0:H, WL:WL + W, :].reshape(HW, C)
    acc = acc + jnp.dot(p13.astype(mm_dtype), w2_ref[3], preferred_element_type=f32)

    y2 = _hswish(acc + b2_ref[...])                         # (HW, C2), f32
    o_ref[...] = y2.reshape(H, W, C2).astype(o_ref.dtype)


# ---------------------------------------------------------------------------
# Module glue: parameter folding + forward
# ---------------------------------------------------------------------------
def fold_bn(w, gamma, beta, mean, var, eps=1e-3):
    # nn.BatchNorm2d(eps=0.001), conv has no bias -> fold into scale/bias
    scale = gamma / jnp.sqrt(var + eps)
    w_eff = w * scale[None, :]
    bias = beta - mean * scale
    return w_eff.astype(jnp.float32), bias.astype(jnp.float32)


def _vmem_limit_bytes():
    # Per-generation scoped-VMEM limit with headroom (~48 MiB on v7x, ~96 MiB on
    # v5e/v6e) instead of a flat 64 MiB (100% of v7x physical VMEM).
    try:
        cap = int(pltpu.get_tpu_info().vmem_capacity_bytes)
        if cap <= 0:
            raise ValueError
    except Exception:
        return 64 * 1024 * 1024
    return int(min(cap * 3 // 4, 100 * 1024 * 1024))


def spp_forward(x_nchw, params, *, matmul_dtype=jnp.float32):
    N, C1, H, W = x_nchw.shape
    x = jnp.transpose(x_nchw, (0, 2, 3, 1)).astype(matmul_dtype)  # NCHW -> NHWC

    w1 = params["w1_eff"].astype(matmul_dtype)
    b1 = params["b1"].astype(jnp.float32)
    w2 = params["w2_eff"].astype(matmul_dtype)
    b2 = params["b2"].astype(jnp.float32)
    C = w1.shape[1]
    C2 = w2.shape[1]
    nb = len(POOL_KS) + 1
    w2_split = w2.reshape(nb, C, C2)                # per-branch cv2 slices
    Hp, WP = H + 2 * PH, W + WL + WR

    itemsize = jnp.dtype(matmul_dtype).itemsize
    flops = 2 * N * H * W * (C1 * C + nb * C * C2) + 24 * N * H * W * C
    bytes_accessed = (x.size * itemsize + N * H * W * C2 * 4
                      + w1.size * itemsize + w2.size * itemsize
                      + (b1.size + b2.size) * 4)

    y2 = pl.pallas_call(
        _spp_fused_kernel,
        out_shape=jax.ShapeDtypeStruct((N, H, W, C2), jnp.float32),
        grid_spec=pltpu.PrefetchScalarGridSpec(
            num_scalar_prefetch=0,
            grid=(N,),
            in_specs=[
                pl.BlockSpec((None, H, W, C1), lambda n: (n, 0, 0, 0)),
                pl.BlockSpec((C1, C), lambda n: (0, 0)),
                pl.BlockSpec((1, C), lambda n: (0, 0)),
                pl.BlockSpec((nb, C, C2), lambda n: (0, 0, 0)),
                pl.BlockSpec((1, C2), lambda n: (0, 0)),
            ],
            out_specs=pl.BlockSpec((None, H, W, C2), lambda n: (n, 0, 0, 0)),
            scratch_shapes=[pltpu.VMEM((Hp, WP, C), jnp.float32)],
        ),
        compiler_params=pltpu.CompilerParams(
            dimension_semantics=("parallel",),
            vmem_limit_bytes=_vmem_limit_bytes(),
        ),
        cost_estimate=pl.CostEstimate(
            flops=int(flops),
            transcendentals=0,
            bytes_accessed=int(bytes_accessed),
        ),
    )(x, w1, b1.reshape(1, C), w2_split, b2.reshape(1, C2))

    return jnp.transpose(y2, (0, 3, 1, 2))          # NHWC -> NCHW (glue)


# ---------------------------------------------------------------------------
# Pure-JAX reference (for correctness check only)
# ---------------------------------------------------------------------------
def ref_forward(x_nchw, params, matmul_dtype=jnp.float32):
    def conv_bn_hswish(x, w, b):
        y = jnp.einsum("nhwc,cd->nhwd", x.astype(matmul_dtype),
                       w.astype(matmul_dtype),
                       preferred_element_type=jnp.float32) + b
        return y * jnp.clip(y + 3.0, 0.0, 6.0) / 6.0

    x = jnp.transpose(x_nchw, (0, 2, 3, 1))
    y1 = conv_bn_hswish(x, params["w1_eff"], params["b1"])
    pools = [y1]
    for k in POOL_KS:
        p = k // 2
        pools.append(
            lax.reduce_window(
                y1, -jnp.inf, lax.max,
                (1, k, k, 1), (1, 1, 1, 1),
                ((0, 0), (p, p), (p, p), (0, 0)),
            )
        )
    cat = jnp.concatenate(pools, axis=-1)
    y2 = conv_bn_hswish(cat, params["w2_eff"], params["b2"])
    return jnp.transpose(y2, (0, 3, 1, 2))


if __name__ == "__main__":
    # small shapes consistent with the module: SPP(c1=8, c2=8), input NCHW
    N, C1, H, W = 2, 8, 16, 16
    C2 = 8
    C_ = C1 // 2

    key = jax.random.PRNGKey(0)
    ks = jax.random.split(key, 11)
    x = jax.random.normal(ks[0], (N, C1, H, W), jnp.float32)

    # cv1 params: Conv2d(c1, c_, 1) weight stored as (c1, c_) for matmul
    w1 = jax.random.normal(ks[1], (C1, C_), jnp.float32) * 0.2
    g1 = jax.random.uniform(ks[2], (C_,), minval=0.5, maxval=1.5)
    be1 = jax.random.normal(ks[3], (C_,)) * 0.1
    m1 = jax.random.normal(ks[4], (C_,)) * 0.1
    v1 = jax.random.uniform(ks[5], (C_,), minval=0.5, maxval=1.5)

    # cv2 params: Conv2d(4*c_, c2, 1) weight stored as (4*c_, c2)
    w2 = jax.random.normal(ks[6], (C_ * (len(POOL_KS) + 1), C2), jnp.float32) * 0.2
    g2 = jax.random.uniform(ks[7], (C2,), minval=0.5, maxval=1.5)
    be2 = jax.random.normal(ks[8], (C2,)) * 0.1
    m2 = jax.random.normal(ks[9], (C2,)) * 0.1
    v2 = jax.random.uniform(ks[10], (C2,), minval=0.5, maxval=1.5)

    w1_eff, b1 = fold_bn(w1, g1, be1, m1, v1)
    w2_eff, b2 = fold_bn(w2, g2, be2, m2, v2)
    params = dict(w1_eff=w1_eff, b1=b1, w2_eff=w2_eff, b2=b2)

    # f32 matmul path (exact vs the module semantics)
    out = jax.block_until_ready(spp_forward(x, params, matmul_dtype=jnp.float32))
    ref = jax.block_until_ready(ref_forward(x, params, matmul_dtype=jnp.float32))
    np.testing.assert_allclose(np.asarray(out), np.asarray(ref), rtol=2e-3, atol=2e-3)
    assert out.shape == (N, C2, H, W)

    # bf16 matmul operands + f32 accumulation (production path per perf review),
    # checked against a bf16-matched reference
    out_bf = jax.block_until_ready(spp_forward(x, params, matmul_dtype=jnp.bfloat16))
    ref_bf = jax.block_until_ready(ref_forward(x, params, matmul_dtype=jnp.bfloat16))
    np.testing.assert_allclose(np.asarray(out_bf), np.asarray(ref_bf),
                               rtol=2e-3, atol=2e-3)

    print("KERNEL_OK")
</pallas_src>

<mosaic_0001>
module attributes {stable_mosaic.version = 11 : i64} {
  func.func @_spp_fused_kernel(%arg0: i32, %arg1: memref<1x16x16x8xf32, #tpu.memory_space<vmem>>, %arg2: memref<8x4xf32, #tpu.memory_space<vmem>>, %arg3: memref<1x4xf32, #tpu.memory_space<vmem>>, %arg4: memref<4x4x8xf32, #tpu.memory_space<vmem>>, %arg5: memref<1x8xf32, #tpu.memory_space<vmem>>, %arg6: memref<1x16x16x8xf32, #tpu.memory_space<vmem>>, %arg7: memref<28x32x4xf32, #tpu.memory_space<vmem>>) attributes {dimension_semantics = [#tpu.dimension_semantics<parallel>], iteration_bounds = array<i64: 2>, scalar_prefetch = 0 : i64, scratch_operands = 1 : i64, tpu.core_type = #tpu.core_type<tc>, window_params = [{transform_indices = @transform_0, window_bounds = array<i64: 1, 16, 16, 8>}, {pipeline_mode = #tpu.pipeline_mode<synchronous>, transform_indices = @transform_1, window_bounds = array<i64: 8, 4>}, {pipeline_mode = #tpu.pipeline_mode<synchronous>, transform_indices = @transform_2, window_bounds = array<i64: 1, 4>}, {pipeline_mode = #tpu.pipeline_mode<synchronous>, transform_indices = @transform_3, window_bounds = array<i64: 4, 4, 8>}, {pipeline_mode = #tpu.pipeline_mode<synchronous>, transform_indices = @transform_4, window_bounds = array<i64: 1, 8>}, {transform_indices = @transform_5, window_bounds = array<i64: 1, 16, 16, 8>}]} {
    %c0 = arith.constant 0 : index
    %c0_0 = arith.constant 0 : index
    %c0_1 = arith.constant 0 : index
    %c0_2 = arith.constant 0 : index
    %0 = vector.load %arg1[%c0, %c0_0, %c0_1, %c0_2] : memref<1x16x16x8xf32, #tpu.memory_space<vmem>>, vector<1x16x16x8xf32>
    %1 = vector.shape_cast %0 : vector<1x16x16x8xf32> to vector<16x16x8xf32>
    %2 = vector.shape_cast %1 : vector<16x16x8xf32> to vector<256x8xf32>
    %c0_3 = arith.constant 0 : index
    %c0_4 = arith.constant 0 : index
    %3 = vector.load %arg2[%c0_3, %c0_4] : memref<8x4xf32, #tpu.memory_space<vmem>>, vector<8x4xf32>
    %cst = arith.constant dense<0.000000e+00> : vector<256x4xf32>
    %4 = tpu.matmul %2, %3, %cst {dimension_numbers = #tpu.dot_dimension_numbers<[1], [0], [0], [1], [0, 0, 1, 1], [], []>} : vector<256x8xf32>, vector<8x4xf32>, vector<256x4xf32> -> vector<256x4xf32>
    %c0_5 = arith.constant 0 : index
    %c0_6 = arith.constant 0 : index
    %5 = vector.load %arg3[%c0_5, %c0_6] : memref<1x4xf32, #tpu.memory_space<vmem>>, vector<1x4xf32>
    %6 = vector.broadcast %5 : vector<1x4xf32> to vector<256x4xf32>
    %7 = arith.addf %4, %6 : vector<256x4xf32>
    %cst_7 = arith.constant 3.000000e+00 : f32
    %8 = vector.broadcast %cst_7 : f32 to vector<256x4xf32>
    %9 = arith.addf %7, %8 : vector<256x4xf32>
    %cst_8 = arith.constant 0.000000e+00 : f32
    %cst_9 = arith.constant 6.000000e+00 : f32
    %10 = vector.broadcast %cst_8 : f32 to vector<256x4xf32>
    %11 = arith.maximumf %10, %9 : vector<256x4xf32>
    %12 = vector.broadcast %cst_9 : f32 to vector<256x4xf32>
    %13 = arith.minimumf %12, %11 : vector<256x4xf32>
    %14 = arith.mulf %7, %13 : vector<256x4xf32>
    %cst_10 = arith.constant 0.166666672 : f32
    %15 = vector.broadcast %cst_10 : f32 to vector<256x4xf32>
    %16 = arith.mulf %14, %15 : vector<256x4xf32>
    %c0_11 = arith.constant 0 : index
    %c0_12 = arith.constant 0 : index
    %c0_13 = arith.constant 0 : index
    %17 = vector.load %arg4[%c0_11, %c0_12, %c0_13] : memref<4x4x8xf32, #tpu.memory_space<vmem>>, vector<1x4x8xf32>
    %18 = vector.shape_cast %17 : vector<1x4x8xf32> to vector<4x8xf32>
    %cst_14 = arith.constant dense<0.000000e+00> : vector<256x8xf32>
    %19 = tpu.matmul %16, %18, %cst_14 {dimension_numbers = #tpu.dot_dimension_numbers<[1], [0], [0], [1], [0, 0, 1, 1], [], []>} : vector<256x4xf32>, vector<4x8xf32>, vector<256x8xf32> -> vector<256x8xf32>
    %cst_15 = arith.constant 0xFF800000 : f32
    %20 = vector.broadcast %cst_15 : f32 to vector<6x32x4xf32>
    %c0_16 = arith.constant 0 : index
    %c0_17 = arith.constant 0 : index
    %c0_18 = arith.constant 0 : index
    %21 = vector.load %arg7[%c0_16, %c0_17, %c0_18] : memref<28x32x4xf32, #tpu.memory_space<vmem>>, vector<6x32x4xf32>
    tpu.vector_store %arg7[%c0_16, %c0_17, %c0_18], %20 {strides = array<i32>} : memref<28x32x4xf32, #tpu.memory_space<vmem>>, vector<6x32x4xf32>,
    %cst_19 = arith.constant 0xFF800000 : f32
    %22 = vector.broadcast %cst_19 : f32 to vector<6x32x4xf32>
    %c22 = arith.constant 22 : index
    %c0_20 = arith.constant 0 : index
    %c0_21 = arith.constant 0 : index
    %23 = vector.load %arg7[%c22, %c0_20, %c0_21] : memref<28x32x4xf32, #tpu.memory_space<vmem>>, vector<6x32x4xf32>
    tpu.vector_store %arg7[%c22, %c0_20, %c0_21], %22 {strides = array<i32>} : memref<28x32x4xf32, #tpu.memory_space<vmem>>, vector<6x32x4xf32>,
    %cst_22 = arith.constant 0xFF800000 : f32
    %24 = vector.broadcast %cst_22 : f32 to vector<16x8x4xf32>
    %c6 = arith.constant 6 : index
    %c0_23 = arith.constant 0 : index
    %c0_24 = arith.constant 0 : index
    %25 = vector.load %arg7[%c6, %c0_23, %c0_24] : memref<28x32x4xf32, #tpu.memory_space<vmem>>, vector<16x8x4xf32>
    tpu.vector_store %arg7[%c6, %c0_23, %c0_24], %24 {strides = array<i32>} : memref<28x32x4xf32, #tpu.memory_space<vmem>>, vector<16x8x4xf32>,
    %cst_25 = arith.constant 0xFF800000 : f32
    %26 = vector.broadcast %cst_25 : f32 to vector<16x8x4xf32>
    %c6_26 = arith.constant 6 : index
    %c24 = arith.constant 24 : index
    %c0_27 = arith.constant 0 : index
    %27 = vector.load %arg7[%c6_26, %c24, %c0_27] : memref<28x32x4xf32, #tpu.memory_space<vmem>>, vector<16x8x4xf32>
    tpu.vector_store %arg7[%c6_26, %c24, %c0_27], %26 {strides = array<i32>} : memref<28x32x4xf32, #tpu.memory_space<vmem>>, vector<16x8x4xf32>,
    %28 = vector.shape_cast %16 : vector<256x4xf32> to vector<16x16x4xf32>
    %c6_28 = arith.constant 6 : index
    %c8 = arith.constant 8 : index
    %c0_29 = arith.constant 0 : index
    %29 = vector.load %arg7[%c6_28, %c8, %c0_29] : memref<28x32x4xf32, #tpu.memory_space<vmem>>, vector<16x16x4xf32>
    tpu.vector_store %arg7[%c6_28, %c8, %c0_29], %28 {strides = array<i32>} : memref<28x32x4xf32, #tpu.memory_space<vmem>>, vector<16x16x4xf32>,
    %c0_30 = arith.constant 0 : index
    %c0_31 = arith.constant 0 : index
    %c0_32 = arith.constant 0 : index
    %30 = vector.load %arg7[%c0_30, %c0_31, %c0_32] : memref<28x32x4xf32, #tpu.memory_space<vmem>>, vector<28x32x4xf32>
    %31 = vector.extract_strided_slice %30 {offsets = [0, 0, 0], sizes = [27, 32, 4], strides = [1, 1, 1]} : vector<28x32x4xf32> to vector<27x32x4xf32>
    %32 = vector.extract_strided_slice %30 {offsets = [1, 0, 0], sizes = [27, 32, 4], strides = [1, 1, 1]} : vector<28x32x4xf32> to vector<27x32x4xf32>
    %33 = arith.maximumf %31, %32 : vector<27x32x4xf32>
    %34 = vector.extract_strided_slice %33 {offsets = [0, 0, 0], sizes = [25, 32, 4], strides = [1, 1, 1]} : vector<27x32x4xf32> to vector<25x32x4xf32>
    %35 = vector.extract_strided_slice %33 {offsets = [2, 0, 0], sizes = [25, 32, 4], strides = [1, 1, 1]} : vector<27x32x4xf32> to vector<25x32x4xf32>
    %36 = arith.maximumf %34, %35 : vector<25x32x4xf32>
    %37 = vector.extract_strided_slice %36 {offsets = [0, 0, 0], sizes = [24, 32, 4], strides = [1, 1, 1]} : vector<25x32x4xf32> to vector<24x32x4xf32>
    %38 = vector.extract_strided_slice %30 {offsets = [4, 0, 0], sizes = [24, 32, 4], strides = [1, 1, 1]} : vector<28x32x4xf32> to vector<24x32x4xf32>
    %39 = arith.maximumf %37, %38 : vector<24x32x4xf32>
    %c31_i32 = arith.constant 31 : i32
    %40 = tpu.dynamic_rotate %39 by %c31_i32 dim 1 : vector<24x32x4xf32>, i32 -> vector<24x32x4xf32>
    %41 = arith.maximumf %39, %40 : vector<24x32x4xf32>
    %c30_i32 = arith.constant 30 : i32
    %42 = tpu.dynamic_rotate %41 by %c30_i32 dim 1 : vector<24x32x4xf32>, i32 -> vector<24x32x4xf32>
    %43 = arith.maximumf %41, %42 : vector<24x32x4xf32>
    %c28_i32 = arith.constant 28 : i32
    %44 = tpu.dynamic_rotate %39 by %c28_i32 dim 1 : vector<24x32x4xf32>, i32 -> vector<24x32x4xf32>
    %45 = arith.maximumf %43, %44 : vector<24x32x4xf32>
    %c2_i32 = arith.constant 2 : i32
    %46 = tpu.dynamic_rotate %45 by %c2_i32 dim 1 : vector<24x32x4xf32>, i32 -> vector<24x32x4xf32>
    %47 = vector.extract_strided_slice %46 {offsets = [4, 8, 0], sizes = [16, 16, 4], strides = [1, 1, 1]} : vector<24x32x4xf32> to vector<16x16x4xf32>
    %48 = vector.shape_cast %47 : vector<16x16x4xf32> to vector<256x4xf32>
    %c1 = arith.constant 1 : index
    %c0_33 = arith.constant 0 : index
    %c0_34 = arith.constant 0 : index
    %49 = vector.load %arg4[%c1, %c0_33, %c0_34] : memref<4x4x8xf32, #tpu.memory_space<vmem>>, vector<1x4x8xf32>
    %50 = vector.shape_cast %49 : vector<1x4x8xf32> to vector<4x8xf32>
    %cst_35 = arith.constant dense<0.000000e+00> : vector<256x8xf32>
    %51 = tpu.matmul %48, %50, %cst_35 {dimension_numbers = #tpu.dot_dimension_numbers<[1], [0], [0], [1], [0, 0, 1, 1], [], []>} : vector<256x4xf32>, vector<4x8xf32>, vector<256x8xf32> -> vector<256x8xf32>
    %52 = arith.addf %19, %51 : vector<256x8xf32>
    %53 = vector.extract_strided_slice %46 {offsets = [0, 0, 0], sizes = [23, 32, 4], strides = [1, 1, 1]} : vector<24x32x4xf32> to vector<23x32x4xf32>
    %54 = vector.extract_strided_slice %46 {offsets = [1, 0, 0], sizes = [23, 32, 4], strides = [1, 1, 1]} : vector<24x32x4xf32> to vector<23x32x4xf32>
    %55 = arith.maximumf %53, %54 : vector<23x32x4xf32>
    %56 = vector.extract_strided_slice %55 {offsets = [0, 0, 0], sizes = [21, 32, 4], strides = [1, 1, 1]} : vector<23x32x4xf32> to vector<21x32x4xf32>
    %57 = vector.extract_strided_slice %55 {offsets = [2, 0, 0], sizes = [21, 32, 4], strides = [1, 1, 1]} : vector<23x32x4xf32> to vector<21x32x4xf32>
    %58 = arith.maximumf %56, %57 : vector<21x32x4xf32>
    %59 = vector.extract_strided_slice %58 {offsets = [0, 0, 0], sizes = [20, 32, 4], strides = [1, 1, 1]} : vector<21x32x4xf32> to vector<20x32x4xf32>
    %60 = vector.extract_strided_slice %46 {offsets = [4, 0, 0], sizes = [20, 32, 4], strides = [1, 1, 1]} : vector<24x32x4xf32> to vector<20x32x4xf32>
    %61 = arith.maximumf %59, %60 : vector<20x32x4xf32>
    %c31_i32_36 = arith.constant 31 : i32
    %62 = tpu.dynamic_rotate %61 by %c31_i32_36 dim 1 : vector<20x32x4xf32>, i32 -> vector<20x32x4xf32>
    %63 = arith.maximumf %61, %62 : vector<20x32x4xf32>
    %c30_i32_37 = arith.constant 30 : i32
    %64 = tpu.dynamic_rotate %63 by %c30_i32_37 dim 1 : vector<20x32x4xf32>, i32 -> vector<20x32x4xf32>
    %65 = arith.maximumf %63, %64 : vector<20x32x4xf32>
    %c28_i32_38 = arith.constant 28 : i32
    %66 = tpu.dynamic_rotate %61 by %c28_i32_38 dim 1 : vector<20x32x4xf32>, i32 -> vector<20x32x4xf32>
    %67 = arith.maximumf %65, %66 : vector<20x32x4xf32>
    %c2_i32_39 = arith.constant 2 : i32
    %68 = tpu.dynamic_rotate %67 by %c2_i32_39 dim 1 : vector<20x32x4xf32>, i32 -> vector<20x32x4xf32>
    %69 = vector.extract_strided_slice %68 {offsets = [2, 8, 0], sizes = [16, 16, 4], strides = [1, 1, 1]} : vector<20x32x4xf32> to vector<16x16x4xf32>
    %70 = vector.shape_cast %69 : vector<16x16x4xf32> to vector<256x4xf32>
    %c2 = arith.constant 2 : index
    %c0_40 = arith.constant 0 : index
    %c0_41 = arith.constant 0 : index
    %71 = vector.load %arg4[%c2, %c0_40, %c0_41] : memref<4x4x8xf32, #tpu.memory_space<vmem>>, vector<1x4x8xf32>
    %72 = vector.shape_cast %71 : vector<1x4x8xf32> to vector<4x8xf32>
    %cst_42 = arith.constant dense<0.000000e+00> : vector<256x8xf32>
    %73 = tpu.matmul %70, %72, %cst_42 {dimension_numbers = #tpu.dot_dimension_numbers<[1], [0], [0], [1], [0, 0, 1, 1], [], []>} : vector<256x4xf32>, vector<4x8xf32>, vector<256x8xf32> -> vector<256x8xf32>
    %74 = arith.addf %52, %73 : vector<256x8xf32>
    %75 = vector.extract_strided_slice %68 {offsets = [0, 0, 0], sizes = [19, 32, 4], strides = [1, 1, 1]} : vector<20x32x4xf32> to vector<19x32x4xf32>
    %76 = vector.extract_strided_slice %68 {offsets = [1, 0, 0], sizes = [19, 32, 4], strides = [1, 1, 1]} : vector<20x32x4xf32> to vector<19x32x4xf32>
    %77 = arith.maximumf %75, %76 : vector<19x32x4xf32>
    %78 = vector.extract_strided_slice %77 {offsets = [0, 0, 0], sizes = [17, 32, 4], strides = [1, 1, 1]} : vector<19x32x4xf32> to vector<17x32x4xf32>
    %79 = vector.extract_strided_slice %77 {offsets = [2, 0, 0], sizes = [17, 32, 4], strides = [1, 1, 1]} : vector<19x32x4xf32> to vector<17x32x4xf32>
    %80 = arith.maximumf %78, %79 : vector<17x32x4xf32>
    %81 = vector.extract_strided_slice %80 {offsets = [0, 0, 0], sizes = [16, 32, 4], strides = [1, 1, 1]} : vector<17x32x4xf32> to vector<16x32x4xf32>
    %82 = vector.extract_strided_slice %68 {offsets = [4, 0, 0], sizes = [16, 32, 4], strides = [1, 1, 1]} : vector<20x32x4xf32> to vector<16x32x4xf32>
    %83 = arith.maximumf %81, %82 : vector<16x32x4xf32>
    %c31_i32_43 = arith.constant 31 : i32
    %84 = tpu.dynamic_rotate %83 by %c31_i32_43 dim 1 : vector<16x32x4xf32>, i32 -> vector<16x32x4xf32>
    %85 = arith.maximumf %83, %84 : vector<16x32x4xf32>
    %c30_i32_44 = arith.constant 30 : i32
    %86 = tpu.dynamic_rotate %85 by %c30_i32_44 dim 1 : vector<16x32x4xf32>, i32 -> vector<16x32x4xf32>
    %87 = arith.maximumf %85, %86 : vector<16x32x4xf32>
    %c28_i32_45 = arith.constant 28 : i32
    %88 = tpu.dynamic_rotate %83 by %c28_i32_45 dim 1 : vector<16x32x4xf32>, i32 -> vector<16x32x4xf32>
    %89 = arith.maximumf %87, %88 : vector<16x32x4xf32>
    %c2_i32_46 = arith.constant 2 : i32
    %90 = tpu.dynamic_rotate %89 by %c2_i32_46 dim 1 : vector<16x32x4xf32>, i32 -> vector<16x32x4xf32>
    %91 = vector.extract_strided_slice %90 {offsets = [0, 8, 0], sizes = [16, 16, 4], strides = [1, 1, 1]} : vector<16x32x4xf32> to vector<16x16x4xf32>
    %92 = vector.shape_cast %91 : vector<16x16x4xf32> to vector<256x4xf32>
    %c3 = arith.constant 3 : index
    %c0_47 = arith.constant 0 : index
    %c0_48 = arith.constant 0 : index
    %93 = vector.load %arg4[%c3, %c0_47, %c0_48] : memref<4x4x8xf32, #tpu.memory_space<vmem>>, vector<1x4x8xf32>
    %94 = vector.shape_cast %93 : vector<1x4x8xf32> to vector<4x8xf32>
    %cst_49 = arith.constant dense<0.000000e+00> : vector<256x8xf32>
    %95 = tpu.matmul %92, %94, %cst_49 {dimension_numbers = #tpu.dot_dimension_numbers<[1], [0], [0], [1], [0, 0, 1, 1], [], []>} : vector<256x4xf32>, vector<4x8xf32>, vector<256x8xf32> -> vector<256x8xf32>
    %96 = arith.addf %74, %95 : vector<256x8xf32>
    %c0_50 = arith.constant 0 : index
    %c0_51 = arith.constant 0 : index
    %97 = vector.load %arg5[%c0_50, %c0_51] : memref<1x8xf32, #tpu.memory_space<vmem>>, vector<1x8xf32>
    %98 = vector.broadcast %97 : vector<1x8xf32> to vector<256x8xf32>
    %99 = arith.addf %96, %98 : vector<256x8xf32>
    %cst_52 = arith.constant 3.000000e+00 : f32
    %100 = vector.broadcast %cst_52 : f32 to vector<256x8xf32>
    %101 = arith.addf %99, %100 : vector<256x8xf32>
    %cst_53 = arith.constant 0.000000e+00 : f32
    %cst_54 = arith.constant 6.000000e+00 : f32
    %102 = vector.broadcast %cst_53 : f32 to vector<256x8xf32>
    %103 = arith.maximumf %102, %101 : vector<256x8xf32>
    %104 = vector.broadcast %cst_54 : f32 to vector<256x8xf32>
    %105 = arith.minimumf %104, %103 : vector<256x8xf32>
    %106 = arith.mulf %99, %105 : vector<256x8xf32>
    %cst_55 = arith.constant 0.166666672 : f32
    %107 = vector.broadcast %cst_55 : f32 to vector<256x8xf32>
    %108 = arith.mulf %106, %107 : vector<256x8xf32>
    %109 = vector.shape_cast %108 : vector<256x8xf32> to vector<16x16x8xf32>
    %c0_56 = arith.constant 0 : index
    %c0_57 = arith.constant 0 : index
    %c0_58 = arith.constant 0 : index
    %c0_59 = arith.constant 0 : index
    %110 = vector.load %arg6[%c0_56, %c0_57, %c0_58, %c0_59] : memref<1x16x16x8xf32, #tpu.memory_space<vmem>>, vector<1x16x16x8xf32>
    %111 = vector.shape_cast %110 : vector<1x16x16x8xf32> to vector<16x16x8xf32>
    %112 = vector.shape_cast %109 : vector<16x16x8xf32> to vector<1x16x16x8xf32>
    tpu.vector_store %arg6[%c0_56, %c0_57, %c0_58, %c0_59], %112 {strides = array<i32>} : memref<1x16x16x8xf32, #tpu.memory_space<vmem>>, vector<1x16x16x8xf32>,
    return
  }
  func.func @transform_0(%arg0: i32) -> (i32, i32, i32, i32) {
    %c0_i32 = arith.constant 0 : i32
    %c0_i32_0 = arith.constant 0 : i32
    %c0_i32_1 = arith.constant 0 : i32
    %c0_i32_2 = arith.constant 0 : i32
    return %arg0, %c0_i32, %c0_i32_0, %c0_i32_1 : i32, i32, i32, i32
  }
  func.func @transform_1(%arg0: i32) -> (i32, i32) {
    %c0_i32 = arith.constant 0 : i32
    %c0_i32_0 = arith.constant 0 : i32
    %c0_i32_1 = arith.constant 0 : i32
    return %c0_i32, %c0_i32_0 : i32, i32
  }
  func.func @transform_2(%arg0: i32) -> (i32, i32) {
    %c0_i32 = arith.constant 0 : i32
    %c0_i32_0 = arith.constant 0 : i32
    %c0_i32_1 = arith.constant 0 : i32
    return %c0_i32, %c0_i32_0 : i32, i32
  }
  func.func @transform_3(%arg0: i32) -> (i32, i32, i32) {
    %c0_i32 = arith.constant 0 : i32
    %c0_i32_0 = arith.constant 0 : i32
    %c0_i32_1 = arith.constant 0 : i32
    %c0_i32_2 = arith.constant 0 : i32
    return %c0_i32, %c0_i32_0, %c0_i32_1 : i32, i32, i32
  }
  func.func @transform_4(%arg0: i32) -> (i32, i32) {
    %c0_i32 = arith.constant 0 : i32
    %c0_i32_0 = arith.constant 0 : i32
    %c0_i32_1 = arith.constant 0 : i32
    return %c0_i32, %c0_i32_0 : i32, i32
  }
  func.func @transform_5(%arg0: i32) -> (i32, i32, i32, i32) {
    %c0_i32 = arith.constant 0 : i32
    %c0_i32_0 = arith.constant 0 : i32
    %c0_i32_1 = arith.constant 0 : i32
    %c0_i32_2 = arith.constant 0 : i32
    return %arg0, %c0_i32, %c0_i32_0, %c0_i32_1 : i32, i32, i32, i32
  }
}

</mosaic_0001>

<llo_original>
// kernel: tpu_custom_call.1
$region0: #{tpu_custom_call.1}
  #allocation0 [shape = 'u32[]', space=smem, size = 0x4, offset = 0x4, fixed_abs, tag = 'smem constant byte address 0x4 - core index']
  #allocation1 [shape = 'u32[72,128]{1,0:T(1,128)}', space=vmem, size = 0x9000, scoped, tag = 'internal scratch']
  #allocation2 [shape = 'f32[28,32,4]{2,1,0:T(8,128)}', space=vmem, size = 0x70000, scoped, tag = 'scratch operand']
  %s0 = inlined_call_operand.vmem [shape: f32[2,16,16,8], index: 0, kind: input, shape index: {}]
  %s1 = inlined_call_operand.vmem [shape: f32[8,4], index: 1, kind: input, shape index: {}]
  %s2 = inlined_call_operand.vmem [shape: f32[1,4], index: 2, kind: input, shape index: {}]
  %s3 = inlined_call_operand.vmem [shape: f32[4,4,8], index: 3, kind: input, shape index: {}]
  %s4 = inlined_call_operand.vmem [shape: f32[1,8], index: 4, kind: input, shape index: {}]
  %s5 = inlined_call_operand.vmem [shape: f32[2,16,16,8], index: 5, kind: output, shape index: {}]
  %s6 = sld [smem:[#allocation0]]
  $region53: #{tpu_custom_call.1} parent=0
    _
  %s8 = ssub.s32 1, %s6
  %s9 = scalar_select 0, %s8, %s6
  loop: start=0, step=1, limit=4
  $region2: #{tpu_custom_call.1} parent=0 // loop_pre_header
    _
  $region3: #{tpu_custom_call.1} parent=0 // loop_header
    %s11 = sphi 0, %s15
    %p12 = scmp.ge.s32.totalorder %s11, 4
    %s21 = sphi 0, %s23
    %s24 = sphi 0, %s21
    %s25 = sphi 0, %s24
    %s41 = sphi 0, %s25
    %s45 = sphi 0, %s45
    %s47 = sphi 0, %s45
    %s48 = sphi 0, %s47
    %s62 = sphi 0, %s48
    %s66 = sphi 0, %s66
    %s68 = sphi 0, %s66
    %s69 = sphi 0, %s68
    %s83 = sphi 0, %s69
    %s87 = sphi 0, %s87
    %s89 = sphi 0, %s87
    %s90 = sphi 0, %s89
    %s104 = sphi 0, %s90
    %s108 = sphi 0, %s108
    %s110 = sphi 0, %s108
    %s111 = sphi 0, %s110
    %s125 = sphi 0, %s111
    %s131 = sphi 0, %s133
    %s134 = sphi 0, %s131
    %s135 = sphi 0, %s134
    %s151 = sphi 0, %s135
  $region4: #{tpu_custom_call.1} parent=0 // loop_header_branch
    %14 = sbr.rel (%p12) target = $region8
  $region5: #{tpu_custom_call.1} parent=0 // loop_body
    %s16 = ssub.s32 %s11, 1
    %s17 = ssub.s32 %s11, 2
    %s18 = sadd.s32 %s11, 1
    %s19 = ssub.s32 %s11, %s18
    %p20 = scmp.eq.s32.totalorder %s19, 0
    %s22 = sadd.s32 %s21, 1
    %s23 = scalar_select %p20, %s21, %s22
    %p26 = pneg %p20
    %p27 = scmp.eq.s32.totalorder %s11, 1
    %p28 = por %p26, %p27
    %p29 = scmp.ne.s32.totalorder %s21, %s24
    %p30 = scmp.eq.s32.totalorder %s11, 0
    %p31 = por %p29, %p30
    %p32 = scmp.ne.s32.totalorder %s21, %s24
    %p33 = scmp.eq.s32.totalorder %s16, 1
    %p34 = por %p32, %p33
    %p35 = scmp.ne.s32.totalorder %s24, %s25
    %p36 = scmp.eq.s32.totalorder %s16, 0
    %p37 = por %p35, %p36
    %p38 = scmp.ne.s32.totalorder %s24, %s25
    %p39 = scmp.eq.s32.totalorder %s17, 1
    %p40 = por %p38, %p39
    %p42 = scmp.ne.s32.totalorder %s25, %s41
    %p43 = scmp.eq.s32.totalorder %s17, 0
    %p44 = por %p42, %p43
    %s46 = sadd.s32 %s45, 1
    %p49 = scmp.eq.s32.totalorder %s11, 1
    %p50 = scmp.ne.s32.totalorder %s45, %s47
    %p51 = scmp.eq.s32.totalorder %s11, 0
    %p52 = por %p50, %p51
    %p53 = scmp.ne.s32.totalorder %s45, %s47
    %p54 = scmp.eq.s32.totalorder %s16, 1
    %p55 = por %p53, %p54
    %p56 = scmp.ne.s32.totalorder %s47, %s48
    %p57 = scmp.eq.s32.totalorder %s16, 0
    %p58 = por %p56, %p57
    %p59 = scmp.ne.s32.totalorder %s47, %s48
    %p60 = scmp.eq.s32.totalorder %s17, 1
    %p61 = por %p59, %p60
    %p63 = scmp.ne.s32.totalorder %s48, %s62
    %p64 = scmp.eq.s32.totalorder %s17, 0
    %p65 = por %p63, %p64
    %s67 = sadd.s32 %s66, 1
    %p70 = scmp.eq.s32.totalorder %s11, 1
    %p71 = scmp.ne.s32.totalorder %s66, %s68
    %p72 = scmp.eq.s32.totalorder %s11, 0
    %p73 = por %p71, %p72
    %p74 = scmp.ne.s32.totalorder %s66, %s68
    %p75 = scmp.eq.s32.totalorder %s16, 1
    %p76 = por %p74, %p75
    %p77 = scmp.ne.s32.totalorder %s68, %s69
    %p78 = scmp.eq.s32.totalorder %s16, 0
    %p79 = por %p77, %p78
    %p80 = scmp.ne.s32.totalorder %s68, %s69
    %p81 = scmp.eq.s32.totalorder %s17, 1
    %p82 = por %p80, %p81
    %p84 = scmp.ne.s32.totalorder %s69, %s83
    %p85 = scmp.eq.s32.totalorder %s17, 0
    %p86 = por %p84, %p85
    %s88 = sadd.s32 %s87, 1
    %p91 = scmp.eq.s32.totalorder %s11, 1
    %p92 = scmp.ne.s32.totalorder %s87, %s89
    %p93 = scmp.eq.s32.totalorder %s11, 0
    %p94 = por %p92, %p93
    %p95 = scmp.ne.s32.totalorder %s87, %s89
    %p96 = scmp.eq.s32.totalorder %s16, 1
    %p97 = por %p95, %p96
    %p98 = scmp.ne.s32.totalorder %s89, %s90
    %p99 = scmp.eq.s32.totalorder %s16, 0
    %p100 = por %p98, %p99
    %p101 = scmp.ne.s32.totalorder %s89, %s90
    %p102 = scmp.eq.s32.totalorder %s17, 1
    %p103 = por %p101, %p102
    %p105 = scmp.ne.s32.totalorder %s90, %s104
    %p106 = scmp.eq.s32.totalorder %s17, 0
    %p107 = por %p105, %p106
    %s109 = sadd.s32 %s108, 1
    %p112 = scmp.eq.s32.totalorder %s11, 1
    %p113 = scmp.ne.s32.totalorder %s108, %s110
    %p114 = scmp.eq.s32.totalorder %s11, 0
    %p115 = por %p113, %p114
    %p116 = scmp.ne.s32.totalorder %s108, %s110
    %p117 = scmp.eq.s32.totalorder %s16, 1
    %p118 = por %p116, %p117
    %p119 = scmp.ne.s32.totalorder %s110, %s111
    %p120 = scmp.eq.s32.totalorder %s16, 0
    %p121 = por %p119, %p120
    %p122 = scmp.ne.s32.totalorder %s110, %s111
    %p123 = scmp.eq.s32.totalorder %s17, 1
    %p124 = por %p122, %p123
    %p126 = scmp.ne.s32.totalorder %s111, %s125
    %p127 = scmp.eq.s32.totalorder %s17, 0
    %p128 = por %p126, %p127
    %s129 = ssub.s32 %s11, %s18
    %p130 = scmp.eq.s32.totalorder %s129, 0
    %s132 = sadd.s32 %s131, 1
    %s133 = scalar_select %p130, %s131, %s132
    %p136 = pneg %p130
    %p137 = scmp.eq.s32.totalorder %s11, 1
    %p138 = por %p136, %p137
    %p139 = scmp.ne.s32.totalorder %s131, %s134
    %p140 = scmp.eq.s32.totalorder %s11, 0
    %p141 = por %p139, %p140
    %p142 = scmp.ne.s32.totalorder %s131, %s134
    %p143 = scmp.eq.s32.totalorder %s16, 1
    %p144 = por %p142, %p143
    %p145 = scmp.ne.s32.totalorder %s134, %s135
    %p146 = scmp.eq.s32.totalorder %s16, 0
    %p147 = por %p145, %p146
    %p148 = scmp.ne.s32.totalorder %s134, %s135
    %p149 = scmp.eq.s32.totalorder %s17, 1
    %p150 = por %p148, %p149
    %p152 = scmp.ne.s32.totalorder %s135, %s151
    %p153 = scmp.eq.s32.totalorder %s17, 0
    %p154 = por %p152, %p153
    %p155 = scmp.le.s32.totalorder 1, %s11
    %p156 = scmp.lt.s32.totalorder %s11, 3
    %p157 = pnand %p155, %p156
    %p158 = pneg %p157
    // Predicated region
    $region9: #{tpu_custom_call.1} parent=5 // pred_check
      _
    $region10: #{tpu_custom_call.1} parent=5 // pred_check_branch
      %160 = sbr.rel (%p157) target = $region12
    $region11: #{tpu_custom_call.1} parent=5 // pred_region
      %s161 = ssub.s32 %s11, 1
      // Predicated region
      $region13: #{tpu_custom_call.1} parent=11 // pred_check
        %p162 = pneg %p58
      $region14: #{tpu_custom_call.1} parent=11 // pred_check_branch
        %164 = sbr.rel (%p162) target = $region16
      $region15: #{tpu_custom_call.1} parent=11 // pred_region
        _
      $region16: #{tpu_custom_call.1} parent=11 // pred_fallthru
        _
      // Predicated region
      $region17: #{tpu_custom_call.1} parent=11 // pred_check
        %p165 = pneg %p79
      $region18: #{tpu_custom_call.1} parent=11 // pred_check_branch
        %167 = sbr.rel (%p165) target = $region20
      $region19: #{tpu_custom_call.1} parent=11 // pred_region
        _
      $region20: #{tpu_custom_call.1} parent=11 // pred_fallthru
        _
      // Predicated region
      $region21: #{tpu_custom_call.1} parent=11 // pred_check
        %p168 = pneg %p100
      $region22: #{tpu_custom_call.1} parent=11 // pred_check_branch
        %170 = sbr.rel (%p168) target = $region24
      $region23: #{tpu_custom_call.1} parent=11 // pred_region
        _
      $region24: #{tpu_custom_call.1} parent=11 // pred_fallthru
        _
      // Predicated region
      $region25: #{tpu_custom_call.1} parent=11 // pred_check
        %p171 = pneg %p121
      $region26: #{tpu_custom_call.1} parent=11 // pred_check_branch
        %173 = sbr.rel (%p171) target = $region28
      $region27: #{tpu_custom_call.1} parent=11 // pred_region
        _
      $region28: #{tpu_custom_call.1} parent=11 // pred_fallthru
        _
    $region12: #{tpu_custom_call.1} parent=5 // pred_fallthru
      _
    %p174 = scmp.lt.s32.totalorder %s11, 2
    // Predicated region
    $region29: #{tpu_custom_call.1} parent=5 // pred_check
      %p175 = pneg %p174
    $region30: #{tpu_custom_call.1} parent=5 // pred_check_branch
      %177 = sbr.rel (%p175) target = $region32
    $region31: #{tpu_custom_call.1} parent=5 // pred_region
      // Predicated region
      $region33: #{tpu_custom_call.1} parent=31 // pred_check
        %p178 = pneg %p31
      $region34: #{tpu_custom_call.1} parent=31 // pred_check_branch
        %180 = sbr.rel (%p178) target = $region36
      $region35: #{tpu_custom_call.1} parent=31 // pred_region
        %p181 = scmp.lt.s32.totalorder %s11, 1
        %s182 = scalar_select %p181, %s11, 1
        %s183 = smul.addr %s182, 32
        %s184 = smul.addr %s183, 8
        %s185 = scalar_lea.vmem %s0, %s184
      $region36: #{tpu_custom_call.1} parent=31 // pred_fallthru
        _
    $region32: #{tpu_custom_call.1} parent=5 // pred_fallthru
      _
    %p186 = scmp.le.s32.totalorder 1, %s11
    %p187 = scmp.lt.s32.totalorder %s11, 3
    %p188 = pnand %p186, %p187
    %p189 = pneg %p188
    // Predicated region
    $region37: #{tpu_custom_call.1} parent=5 // pred_check
      _
    $region38: #{tpu_custom_call.1} parent=5 // pred_check_branch
      %191 = sbr.rel (%p188) target = $region40
    $region39: #{tpu_custom_call.1} parent=5 // pred_region
      %s192 = ssub.s32 %s11, 1
      %p193 = scmp.lt.s32.totalorder %s16, 1
      %s194 = scalar_select %p193, %s16, 1
      %s195 = smul.addr %s194, 32
      %s196 = smul.addr %s195, 8
      %s197 = scalar_lea.vmem %s0, %s196
      %p198 = pneg %p37
      %p199 = pneg %p34
      %p200 = pneg %p58
      %p201 = pneg %p55
      %p202 = pneg %p79
      %p203 = pneg %p76
      %p204 = pneg %p100
      %p205 = pneg %p97
      %p206 = pneg %p121
      %p207 = pneg %p118
      %p208 = pneg %p147
      %p209 = pneg %p144
      %p210 = scmp.lt.s32.totalorder %s16, 1
      %s211 = scalar_select %p210, %s16, 1
      %s212 = smul.addr %s211, 32
      %s213 = smul.addr %s212, 8
      %s214 = scalar_lea.vmem %s5, %s213
      %p215 = scmp.lt.s32.totalorder %s16, 1
      %s216 = scalar_select %p215, %s16, 1
      %s217 = smul.addr %s216, 32
      %s218 = smul.addr %s217, 8
      %s219 = scalar_lea.vmem %s0, %s218
      %p220 = scmp.lt.s32.totalorder %s16, 1
      %s221 = scalar_select %p220, %s16, 1
      %s222 = smul.addr %s221, 32
      %s223 = smul.addr %s222, 8
      %s224 = scalar_lea.vmem %s5, %s223
      %v225 = vld [vmem:[%s219] sm:$0xff]
      %v226 = vld [vmem:[%s219 + $0x8] sm:$0xff]
      %v227 = vld [vmem:[%s219 + $0x10] sm:$0xff]
      %v228 = vld [vmem:[%s219 + $0x18] sm:$0xff]
      %v229 = vld [vmem:[%s219 + $0x20] sm:$0xff]
      %v230 = vld [vmem:[%s219 + $0x28] sm:$0xff]
      %v231 = vld [vmem:[%s219 + $0x30] sm:$0xff]
      %v232 = vld [vmem:[%s219 + $0x38] sm:$0xff]
      %v233 = vld [vmem:[%s219 + $0x40] sm:$0xff]
      %v234 = vld [vmem:[%s219 + $0x48] sm:$0xff]
      %v235 = vld [vmem:[%s219 + $0x50] sm:$0xff]
      %v236 = vld [vmem:[%s219 + $0x58] sm:$0xff]
      %v237 = vld [vmem:[%s219 + $0x60] sm:$0xff]
      %v238 = vld [vmem:[%s219 + $0x68] sm:$0xff]
      %v239 = vld [vmem:[%s219 + $0x70] sm:$0xff]
      %v240 = vld [vmem:[%s219 + $0x78] sm:$0xff]
      %v241 = vld [vmem:[%s219 + $0x80] sm:$0xff]
      %v242 = vld [vmem:[%s219 + $0x88] sm:$0xff]
      %v243 = vld [vmem:[%s219 + $0x90] sm:$0xff]
      %v244 = vld [vmem:[%s219 + $0x98] sm:$0xff]
      %v245 = vld [vmem:[%s219 + $0xa0] sm:$0xff]
      %v246 = vld [vmem:[%s219 + $0xa8] sm:$0xff]
      %v247 = vld [vmem:[%s219 + $0xb0] sm:$0xff]
      %v248 = vld [vmem:[%s219 + $0xb8] sm:$0xff]
      %v249 = vld [vmem:[%s219 + $0xc0] sm:$0xff]
      %v250 = vld [vmem:[%s219 + $0xc8] sm:$0xff]
      %v251 = vld [vmem:[%s219 + $0xd0] sm:$0xff]
      %v252 = vld [vmem:[%s219 + $0xd8] sm:$0xff]
      %v253 = vld [vmem:[%s219 + $0xe0] sm:$0xff]
      %v254 = vld [vmem:[%s219 + $0xe8] sm:$0xff]
      %v255 = vld [vmem:[%s219 + $0xf0] sm:$0xff]
      %v256 = vld [vmem:[%s219 + $0xf8] sm:$0xff]
      %v257 = vld [vmem:[%s1] sm:$0xff]
      %v258 = vld [vmem:[%s2] sm:$0x1]
      %v260 = vperm.slane %v258, 0
      %vm262 = vcmask 64512
      %v264 = vsel %vm262, %v225, 0
      %v267 = vsel %vm262, %v226, 0
      %v270 = vsel %vm262, %v227, 0
      %v273 = vsel %vm262, %v228, 0
      %v276 = vsel %vm262, %v229, 0
      %v279 = vsel %vm262, %v230, 0
      %v282 = vsel %vm262, %v231, 0
      %v285 = vsel %vm262, %v232, 0
      %v288 = vsel %vm262, %v233, 0
      %v291 = vsel %vm262, %v234, 0
      %v294 = vsel %vm262, %v235, 0
      %v297 = vsel %vm262, %v236, 0
      %v300 = vsel %vm262, %v237, 0
      %v303 = vsel %vm262, %v238, 0
      %v306 = vsel %vm262, %v239, 0
      %v309 = vsel %vm262, %v240, 0
      %v312 = vsel %vm262, %v241, 0
      %v315 = vsel %vm262, %v242, 0
      %v318 = vsel %vm262, %v243, 0
      %v321 = vsel %vm262, %v244, 0
      %v324 = vsel %vm262, %v245, 0
      %v327 = vsel %vm262, %v246, 0
      %v330 = vsel %vm262, %v247, 0
      %v333 = vsel %vm262, %v248, 0
      %v336 = vsel %vm262, %v249, 0
      %v339 = vsel %vm262, %v250, 0
      %v342 = vsel %vm262, %v251, 0
      %v345 = vsel %vm262, %v252, 0
      %v348 = vsel %vm262, %v253, 0
      %v351 = vsel %vm262, %v254, 0
      %v354 = vsel %vm262, %v255, 0
      %v357 = vsel %vm262, %v256, 0
      %359 = vmatpush.msra.mxu0 0.0
      %360 = vmatpush.msra.mxu0 0.0
      %361 = vmatpush.msra.mxu0 0.0
      %362 = vmatpush.msra.mxu0 0.0
      %363 = vmatpush.msra.mxu0 0.0
      %364 = vmatpush.msra.mxu0 0.0
      %365 = vmatpush.msra.mxu0 0.0
      %366 = vmatpush.msra.mxu0 0.0
      %367 = vmatpush.msra.mxu0 0.0
      %368 = vmatpush.msra.mxu0 0.0
      %369 = vmatpush.msra.mxu0 0.0
      %370 = vmatpush.msra.mxu0 0.0
      %371 = vmatpush.msra.mxu0 0.0
      %372 = vmatpush.msra.mxu0 0.0
      %373 = vmatpush.msra.mxu0 0.0
      %374 = vmatpush.msra.mxu0 %v257
      %375 = vmatmul.f32.gmra.mxu0 %v264
      %v376 = vpop.f32.mrf.mxu0
      %v377 = vadd.f32 %v260, %v376
      %378 = vmatmul.f32.gmra.mxu0 %v267
      %v379 = vpop.f32.mrf.mxu0
      %v380 = vadd.f32 %v260, %v379
      %381 = vmatmul.f32.gmra.mxu0 %v270
      %v382 = vpop.f32.mrf.mxu0
      %v383 = vadd.f32 %v260, %v382
      %384 = vmatmul.f32.gmra.mxu0 %v273
      %v385 = vpop.f32.mrf.mxu0
      %v386 = vadd.f32 %v260, %v385
      %387 = vmatmul.f32.gmra.mxu0 %v276
      %v388 = vpop.f32.mrf.mxu0
      %v389 = vadd.f32 %v260, %v388
      %390 = vmatmul.f32.gmra.mxu0 %v279
      %v391 = vpop.f32.mrf.mxu0
      %v392 = vadd.f32 %v260, %v391
      %393 = vmatmul.f32.gmra.mxu0 %v282
      %v394 = vpop.f32.mrf.mxu0
      %v395 = vadd.f32 %v260, %v394
      %396 = vmatmul.f32.gmra.mxu0 %v285
      %v397 = vpop.f32.mrf.mxu0
      %v398 = vadd.f32 %v260, %v397
      %399 = vmatmul.f32.gmra.mxu0 %v288
      %v400 = vpop.f32.mrf.mxu0
      %v401 = vadd.f32 %v260, %v400
      %402 = vmatmul.f32.gmra.mxu0 %v291
      %v403 = vpop.f32.mrf.mxu0
      %v404 = vadd.f32 %v260, %v403
      %405 = vmatmul.f32.gmra.mxu0 %v294
      %v406 = vpop.f32.mrf.mxu0
      %v407 = vadd.f32 %v260, %v406
      %408 = vmatmul.f32.gmra.mxu0 %v297
      %v409 = vpop.f32.mrf.mxu0
      %v410 = vadd.f32 %v260, %v409
      %411 = vmatmul.f32.gmra.mxu0 %v300
      %v412 = vpop.f32.mrf.mxu0
      %v413 = vadd.f32 %v260, %v412
      %414 = vmatmul.f32.gmra.mxu0 %v303
      %v415 = vpop.f32.mrf.mxu0
      %v416 = vadd.f32 %v260, %v415
      %417 = vmatmul.f32.gmra.mxu0 %v306
      %v418 = vpop.f32.mrf.mxu0
      %v419 = vadd.f32 %v260, %v418
      %420 = vmatmul.f32.gmra.mxu0 %v309
      %v421 = vpop.f32.mrf.mxu0
      %v422 = vadd.f32 %v260, %v421
      %423 = vmatmul.f32.gmra.mxu0 %v312
      %v424 = vpop.f32.mrf.mxu0
      %v425 = vadd.f32 %v260, %v424
      %426 = vmatmul.f32.gmra.mxu0 %v315
      %v427 = vpop.f32.mrf.mxu0
      %v428 = vadd.f32 %v260, %v427
      %429 = vmatmul.f32.gmra.mxu0 %v318
      %v430 = vpop.f32.mrf.mxu0
      %v431 = vadd.f32 %v260, %v430
      %432 = vmatmul.f32.gmra.mxu0 %v321
      %v433 = vpop.f32.mrf.mxu0
      %v434 = vadd.f32 %v260, %v433
      %435 = vmatmul.f32.gmra.mxu0 %v324
      %v436 = vpop.f32.mrf.mxu0
      %v437 = vadd.f32 %v260, %v436
      %438 = vmatmul.f32.gmra.mxu0 %v327
      %v439 = vpop.f32.mrf.mxu0
      %v440 = vadd.f32 %v260, %v439
      %441 = vmatmul.f32.gmra.mxu0 %v330
      %v442 = vpop.f32.mrf.mxu0
      %v443 = vadd.f32 %v260, %v442
      %444 = vmatmul.f32.gmra.mxu0 %v333
      %v445 = vpop.f32.mrf.mxu0
      %v446 = vadd.f32 %v260, %v445
      %447 = vmatmul.f32.gmra.mxu0 %v336
      %v448 = vpop.f32.mrf.mxu0
      %v449 = vadd.f32 %v260, %v448
      %450 = vmatmul.f32.gmra.mxu0 %v339
      %v451 = vpop.f32.mrf.mxu0
      %v452 = vadd.f32 %v260, %v451
      %453 = vmatmul.f32.gmra.mxu0 %v342
      %v454 = vpop.f32.mrf.mxu0
      %v455 = vadd.f32 %v260, %v454
      %456 = vmatmul.f32.gmra.mxu0 %v345
      %v457 = vpop.f32.mrf.mxu0
      %v458 = vadd.f32 %v260, %v457
      %459 = vmatmul.f32.gmra.mxu0 %v348
      %v460 = vpop.f32.mrf.mxu0
      %v461 = vadd.f32 %v260, %v460
      %462 = vmatmul.f32.gmra.mxu0 %v351
      %v463 = vpop.f32.mrf.mxu0
      %v464 = vadd.f32 %v260, %v463
      %465 = vmatmul.f32.gmra.mxu0 %v354
      %v466 = vpop.f32.mrf.mxu0
      %v467 = vadd.f32 %v260, %v466
      %468 = vmatmul.f32.gmra.mxu0 %v357
      %v469 = vpop.f32.mrf.mxu0
      %v470 = vadd.f32 %v260, %v469
      %471 = vdwg.mxu0
      %v472 = vadd.f32 %v377, 3.0
      %v473 = vadd.f32 %v380, 3.0
      %v474 = vadd.f32 %v383, 3.0
      %v475 = vadd.f32 %v386, 3.0
      %v476 = vadd.f32 %v389, 3.0
      %v477 = vadd.f32 %v392, 3.0
      %v478 = vadd.f32 %v395, 3.0
      %v479 = vadd.f32 %v398, 3.0
      %v480 = vadd.f32 %v401, 3.0
      %v481 = vadd.f32 %v404, 3.0
      %v482 = vadd.f32 %v407, 3.0
      %v483 = vadd.f32 %v410, 3.0
      %v484 = vadd.f32 %v413, 3.0
      %v485 = vadd.f32 %v416, 3.0
      %v486 = vadd.f32 %v419, 3.0
      %v487 = vadd.f32 %v422, 3.0
      %v488 = vadd.f32 %v425, 3.0
      %v489 = vadd.f32 %v428, 3.0
      %v490 = vadd.f32 %v431, 3.0
      %v491 = vadd.f32 %v434, 3.0
      %v492 = vadd.f32 %v437, 3.0
      %v493 = vadd.f32 %v440, 3.0
      %v494 = vadd.f32 %v443, 3.0
      %v495 = vadd.f32 %v446, 3.0
      %v496 = vadd.f32 %v449, 3.0
      %v497 = vadd.f32 %v452, 3.0
      %v498 = vadd.f32 %v455, 3.0
      %v499 = vadd.f32 %v458, 3.0
      %v500 = vadd.f32 %v461, 3.0
      %v501 = vadd.f32 %v464, 3.0
      %v502 = vadd.f32 %v467, 3.0
      %v503 = vadd.f32 %v470, 3.0
      %v504 = vmax.f32 %v472, 0.0
      %v505 = vmax.f32 %v473, 0.0
      %v506 = vmax.f32 %v474, 0.0
      %v507 = vmax.f32 %v475, 0.0
      %v508 = vmax.f32 %v476, 0.0
      %v509 = vmax.f32 %v477, 0.0
      %v510 = vmax.f32 %v478, 0.0
      %v511 = vmax.f32 %v479, 0.0
      %v512 = vmax.f32 %v480, 0.0
      %v513 = vmax.f32 %v481, 0.0
      %v514 = vmax.f32 %v482, 0.0
      %v515 = vmax.f32 %v483, 0.0
      %v516 = vmax.f32 %v484, 0.0
      %v517 = vmax.f32 %v485, 0.0
      %v518 = vmax.f32 %v486, 0.0
      %v519 = vmax.f32 %v487, 0.0
      %v520 = vmax.f32 %v488, 0.0
      %v521 = vmax.f32 %v489, 0.0
      %v522 = vmax.f32 %v490, 0.0
      %v523 = vmax.f32 %v491, 0.0
      %v524 = vmax.f32 %v492, 0.0
      %v525 = vmax.f32 %v493, 0.0
      %v526 = vmax.f32 %v494, 0.0
      %v527 = vmax.f32 %v495, 0.0
      %v528 = vmax.f32 %v496, 0.0
      %v529 = vmax.f32 %v497, 0.0
      %v530 = vmax.f32 %v498, 0.0
      %v531 = vmax.f32 %v499, 0.0
      %v532 = vmax.f32 %v500, 0.0
      %v533 = vmax.f32 %v501, 0.0
      %v534 = vmax.f32 %v502, 0.0
      %v535 = vmax.f32 %v503, 0.0
      %v536 = vmin.f32 %v504, 6.0
      %v537 = vmin.f32 %v505, 6.0
      %v538 = vmin.f32 %v506, 6.0
      %v539 = vmin.f32 %v507, 6.0
      %v540 = vmin.f32 %v508, 6.0
      %v541 = vmin.f32 %v509, 6.0
      %v542 = vmin.f32 %v510, 6.0
      %v543 = vmin.f32 %v511, 6.0
      %v544 = vmin.f32 %v512, 6.0
      %v545 = vmin.f32 %v513, 6.0
      %v546 = vmin.f32 %v514, 6.0
      %v547 = vmin.f32 %v515, 6.0
      %v548 = vmin.f32 %v516, 6.0
      %v549 = vmin.f32 %v517, 6.0
      %v550 = vmin.f32 %v518, 6.0
      %v551 = vmin.f32 %v519, 6.0
      %v552 = vmin.f32 %v520, 6.0
      %v553 = vmin.f32 %v521, 6.0
      %v554 = vmin.f32 %v522, 6.0
      %v555 = vmin.f32 %v523, 6.0
      %v556 = vmin.f32 %v524, 6.0
      %v557 = vmin.f32 %v525, 6.0
      %v558 = vmin.f32 %v526, 6.0
      %v559 = vmin.f32 %v527, 6.0
      %v560 = vmin.f32 %v528, 6.0
      %v561 = vmin.f32 %v529, 6.0
      %v562 = vmin.f32 %v530, 6.0
      %v563 = vmin.f32 %v531, 6.0
      %v564 = vmin.f32 %v532, 6.0
      %v565 = vmin.f32 %v533, 6.0
      %v566 = vmin.f32 %v534, 6.0
      %v567 = vmin.f32 %v535, 6.0
      %v568 = vmul.f32 %v377, %v536
      %v569 = vmul.f32 %v380, %v537
      %v570 = vmul.f32 %v383, %v538
      %v571 = vmul.f32 %v386, %v539
      %v572 = vmul.f32 %v389, %v540
      %v573 = vmul.f32 %v392, %v541
      %v574 = vmul.f32 %v395, %v542
      %v575 = vmul.f32 %v398, %v543
      %v576 = vmul.f32 %v401, %v544
      %v577 = vmul.f32 %v404, %v545
      %v578 = vmul.f32 %v407, %v546
      %v579 = vmul.f32 %v410, %v547
      %v580 = vmul.f32 %v413, %v548
      %v581 = vmul.f32 %v416, %v549
      %v582 = vmul.f32 %v419, %v550
      %v583 = vmul.f32 %v422, %v551
      %v584 = vmul.f32 %v425, %v552
      %v585 = vmul.f32 %v428, %v553
      %v586 = vmul.f32 %v431, %v554
      %v587 = vmul.f32 %v434, %v555
      %v588 = vmul.f32 %v437, %v556
      %v589 = vmul.f32 %v440, %v557
      %v590 = vmul.f32 %v443, %v558
      %v591 = vmul.f32 %v446, %v559
      %v592 = vmul.f32 %v449, %v560
      %v593 = vmul.f32 %v452, %v561
      %v594 = vmul.f32 %v455, %v562
      %v595 = vmul.f32 %v458, %v563
      %v596 = vmul.f32 %v461, %v564
      %v597 = vmul.f32 %v464, %v565
      %v598 = vmul.f32 %v467, %v566
      %v599 = vmul.f32 %v470, %v567
      %v600 = vmul.f32 %v568, 0.16666667
      %v601 = vmul.f32 %v569, 0.16666667
      %v602 = vmul.f32 %v570, 0.16666667
      %v603 = vmul.f32 %v571, 0.16666667
      %v604 = vmul.f32 %v572, 0.16666667
      %v605 = vmul.f32 %v573, 0.16666667
      %v606 = vmul.f32 %v574, 0.16666667
      %v607 = vmul.f32 %v575, 0.16666667
      %v608 = vmul.f32 %v576, 0.16666667
      %v609 = vmul.f32 %v577, 0.16666667
      %v610 = vmul.f32 %v578, 0.16666667
      %v611 = vmul.f32 %v579, 0.16666667
      %v612 = vmul.f32 %v580, 0.16666667
      %v613 = vmul.f32 %v581, 0.16666667
      %v614 = vmul.f32 %v582, 0.16666667
      %v615 = vmul.f32 %v583, 0.16666667
      %v616 = vmul.f32 %v584, 0.16666667
      %v617 = vmul.f32 %v585, 0.16666667
      %v618 = vmul.f32 %v586, 0.16666667
      %v619 = vmul.f32 %v587, 0.16666667
      %v620 = vmul.f32 %v588, 0.16666667
      %v621 = vmul.f32 %v589, 0.16666667
      %v622 = vmul.f32 %v590, 0.16666667
      %v623 = vmul.f32 %v591, 0.16666667
      %v624 = vmul.f32 %v592, 0.16666667
      %v625 = vmul.f32 %v593, 0.16666667
      %v626 = vmul.f32 %v594, 0.16666667
      %v627 = vmul.f32 %v595, 0.16666667
      %v628 = vmul.f32 %v596, 0.16666667
      %v629 = vmul.f32 %v597, 0.16666667
      %v630 = vmul.f32 %v598, 0.16666667
      %v631 = vmul.f32 %v599, 0.16666667
      %v632 = vld [vmem:[%s3] sm:$0xf]
      %vm633 = vcmask 31744
      %634 = vst.msk [vmem:[#allocation2] sm:$0xff] %vm633, -inf
      %635 = vst.msk [vmem:[#allocation2 + $0x8] sm:$0xff] %vm633, -inf
      %636 = vst.msk [vmem:[#allocation2 + $0x10] sm:$0xff] %vm633, -inf
      %637 = vst.msk [vmem:[#allocation2 + $0x18] sm:$0xff] %vm633, -inf
      %638 = vst.msk [vmem:[#allocation2 + $0x20] sm:$0xff] %vm633, -inf
      %639 = vst.msk [vmem:[#allocation2 + $0x28] sm:$0xff] %vm633, -inf
      %640 = vst.msk [vmem:[#allocation2 + $0x30] sm:$0xff] %vm633, -inf
      %641 = vst.msk [vmem:[#allocation2 + $0x38] sm:$0xff] %vm633, -inf
      %642 = vst.msk [vmem:[#allocation2 + $0x40] sm:$0xff] %vm633, -inf
      %643 = vst.msk [vmem:[#allocation2 + $0x48] sm:$0xff] %vm633, -inf
      %644 = vst.msk [vmem:[#allocation2 + $0x50] sm:$0xff] %vm633, -inf
      %645 = vst.msk [vmem:[#allocation2 + $0x58] sm:$0xff] %vm633, -inf
      %646 = vst.msk [vmem:[#allocation2 + $0x60] sm:$0xff] %vm633, -inf
      %647 = vst.msk [vmem:[#allocation2 + $0x68] sm:$0xff] %vm633, -inf
      %648 = vst.msk [vmem:[#allocation2 + $0x70] sm:$0xff] %vm633, -inf
      %649 = vst.msk [vmem:[#allocation2 + $0x78] sm:$0xff] %vm633, -inf
      %650 = vst.msk [vmem:[#allocation2 + $0x80] sm:$0xff] %vm633, -inf
      %651 = vst.msk [vmem:[#allocation2 + $0x88] sm:$0xff] %vm633, -inf
      %652 = vst.msk [vmem:[#allocation2 + $0x90] sm:$0xff] %vm633, -inf
      %653 = vst.msk [vmem:[#allocation2 + $0x98] sm:$0xff] %vm633, -inf
      %654 = vst.msk [vmem:[#allocation2 + $0xa0] sm:$0xff] %vm633, -inf
      %655 = vst.msk [vmem:[#allocation2 + $0xa8] sm:$0xff] %vm633, -inf
      %656 = vst.msk [vmem:[#allocation2 + $0xb0] sm:$0xff] %vm633, -inf
      %657 = vst.msk [vmem:[#allocation2 + $0xb8] sm:$0xff] %vm633, -inf
      %s658 = scalar_lea.vmem [#allocation2], 704
      %659 = vst.msk [vmem:[%s658] sm:$0xff] %vm633, -inf
      %660 = vst.msk [vmem:[%s658 + $0x8] sm:$0xff] %vm633, -inf
      %661 = vst.msk [vmem:[%s658 + $0x10] sm:$0xff] %vm633, -inf
      %662 = vst.msk [vmem:[%s658 + $0x18] sm:$0xff] %vm633, -inf
      %663 = vst.msk [vmem:[%s658 + $0x20] sm:$0xff] %vm633, -inf
      %664 = vst.msk [vmem:[%s658 + $0x28] sm:$0xff] %vm633, -inf
      %665 = vst.msk [vmem:[%s658 + $0x30] sm:$0xff] %vm633, -inf
      %666 = vst.msk [vmem:[%s658 + $0x38] sm:$0xff] %vm633, -inf
      %667 = vst.msk [vmem:[%s658 + $0x40] sm:$0xff] %vm633, -inf
      %668 = vst.msk [vmem:[%s658 + $0x48] sm:$0xff] %vm633, -inf
      %669 = vst.msk [vmem:[%s658 + $0x50] sm:$0xff] %vm633, -inf
      %670 = vst.msk [vmem:[%s658 + $0x58] sm:$0xff] %vm633, -inf
      %671 = vst.msk [vmem:[%s658 + $0x60] sm:$0xff] %vm633, -inf
      %672 = vst.msk [vmem:[%s658 + $0x68] sm:$0xff] %vm633, -inf
      %673 = vst.msk [vmem:[%s658 + $0x70] sm:$0xff] %vm633, -inf
      %674 = vst.msk [vmem:[%s658 + $0x78] sm:$0xff] %vm633, -inf
      %675 = vst.msk [vmem:[%s658 + $0x80] sm:$0xff] %vm633, -inf
      %676 = vst.msk [vmem:[%s658 + $0x88] sm:$0xff] %vm633, -inf
      %677 = vst.msk [vmem:[%s658 + $0x90] sm:$0xff] %vm633, -inf
      %678 = vst.msk [vmem:[%s658 + $0x98] sm:$0xff] %vm633, -inf
      %679 = vst.msk [vmem:[%s658 + $0xa0] sm:$0xff] %vm633, -inf
      %680 = vst.msk [vmem:[%s658 + $0xa8] sm:$0xff] %vm633, -inf
      %681 = vst.msk [vmem:[%s658 + $0xb0] sm:$0xff] %vm633, -inf
      %682 = vst.msk [vmem:[%s658 + $0xb8] sm:$0xff] %vm633, -inf
      %s683 = scalar_lea.vmem [#allocation2], 192
      %684 = vst.msk [vmem:[%s683] sm:$0xff] %vm633, -inf
      %685 = vst.msk [vmem:[%s683 + $0x20] sm:$0xff] %vm633, -inf
      %686 = vst.msk [vmem:[%s683 + $0x40] sm:$0xff] %vm633, -inf
      %687 = vst.msk [vmem:[%s683 + $0x60] sm:$0xff] %vm633, -inf
      %688 = vst.msk [vmem:[%s683 + $0x80] sm:$0xff] %vm633, -inf
      %689 = vst.msk [vmem:[%s683 + $0xa0] sm:$0xff] %vm633, -inf
      %690 = vst.msk [vmem:[%s683 + $0xc0] sm:$0xff] %vm633, -inf
      %691 = vst.msk [vmem:[%s683 + $0xe0] sm:$0xff] %vm633, -inf
      %692 = vst.msk [vmem:[%s683 + $0x100] sm:$0xff] %vm633, -inf
      %693 = vst.msk [vmem:[%s683 + $0x120] sm:$0xff] %vm633, -inf
      %694 = vst.msk [vmem:[%s683 + $0x140] sm:$0xff] %vm633, -inf
      %695 = vst.msk [vmem:[%s683 + $0x160] sm:$0xff] %vm633, -inf
      %696 = vst.msk [vmem:[%s683 + $0x180] sm:$0xff] %vm633, -inf
      %697 = vst.msk [vmem:[%s683 + $0x1a0] sm:$0xff] %vm633, -inf
      %698 = vst.msk [vmem:[%s683 + $0x1c0] sm:$0xff] %vm633, -inf
      %699 = vst.msk [vmem:[%s683 + $0x1e0] sm:$0xff] %vm633, -inf
      %700 = vst.msk [vmem:[%s683 + $0x18] sm:$0xff] %vm633, -inf
      %701 = vst.msk [vmem:[%s683 + $0x38] sm:$0xff] %vm633, -inf
      %702 = vst.msk [vmem:[%s683 + $0x58] sm:$0xff] %vm633, -inf
      %703 = vst.msk [vmem:[%s683 + $0x78] sm:$0xff] %vm633, -inf
      %704 = vst.msk [vmem:[%s683 + $0x98] sm:$0xff] %vm633, -inf
      %705 = vst.msk [vmem:[%s683 + $0xb8] sm:$0xff] %vm633, -inf
      %706 = vst.msk [vmem:[%s683 + $0xd8] sm:$0xff] %vm633, -inf
      %707 = vst.msk [vmem:[%s683 + $0xf8] sm:$0xff] %vm633, -inf
      %708 = vst.msk [vmem:[%s683 + $0x118] sm:$0xff] %vm633, -inf
      %709 = vst.msk [vmem:[%s683 + $0x138] sm:$0xff] %vm633, -inf
      %710 = vst.msk [vmem:[%s683 + $0x158] sm:$0xff] %vm633, -inf
      %711 = vst.msk [vmem:[%s683 + $0x178] sm:$0xff] %vm633, -inf
      %712 = vst.msk [vmem:[%s683 + $0x198] sm:$0xff] %vm633, -inf
      %713 = vst.msk [vmem:[%s683 + $0x1b8] sm:$0xff] %vm633, -inf
      %714 = vst.msk [vmem:[%s683 + $0x1d8] sm:$0xff] %vm633, -inf
      %715 = vst.msk [vmem:[%s683 + $0x1f8] sm:$0xff] %vm633, -inf
      %716 = vst.msk [vmem:[%s683 + $0x8] sm:$0xff] %vm633, %v600
      %717 = vst.msk [vmem:[%s683 + $0x10] sm:$0xff] %vm633, %v601
      %718 = vst.msk [vmem:[%s683 + $0x28] sm:$0xff] %vm633, %v602
      %719 = vst.msk [vmem:[%s683 + $0x30] sm:$0xff] %vm633, %v603
      %720 = vst.msk [vmem:[%s683 + $0x48] sm:$0xff] %vm633, %v604
      %721 = vst.msk [vmem:[%s683 + $0x50] sm:$0xff] %vm633, %v605
      %722 = vst.msk [vmem:[%s683 + $0x68] sm:$0xff] %vm633, %v606
      %723 = vst.msk [vmem:[%s683 + $0x70] sm:$0xff] %vm633, %v607
      %724 = vst.msk [vmem:[%s683 + $0x88] sm:$0xff] %vm633, %v608
      %725 = vst.msk [vmem:[%s683 + $0x90] sm:$0xff] %vm633, %v609
      %726 = vst.msk [vmem:[%s683 + $0xa8] sm:$0xff] %vm633, %v610
      %727 = vst.msk [vmem:[%s683 + $0xb0] sm:$0xff] %vm633, %v611
      %728 = vst.msk [vmem:[%s683 + $0xc8] sm:$0xff] %vm633, %v612
      %729 = vst.msk [vmem:[%s683 + $0xd0] sm:$0xff] %vm633, %v613
      %730 = vst.msk [vmem:[%s683 + $0xe8] sm:$0xff] %vm633, %v614
      %731 = vst.msk [vmem:[%s683 + $0xf0] sm:$0xff] %vm633, %v615
      %732 = vst.msk [vmem:[%s683 + $0x108] sm:$0xff] %vm633, %v616
      %733 = vst.msk [vmem:[%s683 + $0x110] sm:$0xff] %vm633, %v617
      %734 = vst.msk [vmem:[%s683 + $0x128] sm:$0xff] %vm633, %v618
      %735 = vst.msk [vmem:[%s683 + $0x130] sm:$0xff] %vm633, %v619
      %736 = vst.msk [vmem:[%s683 + $0x148] sm:$0xff] %vm633, %v620
      %737 = vst.msk [vmem:[%s683 + $0x150] sm:$0xff] %vm633, %v621
      %738 = vst.msk [vmem:[%s683 + $0x168] sm:$0xff] %vm633, %v622
      %739 = vst.msk [vmem:[%s683 + $0x170] sm:$0xff] %vm633, %v623
      %740 = vst.msk [vmem:[%s683 + $0x188] sm:$0xff] %vm633, %v624
      %741 = vst.msk [vmem:[%s683 + $0x190] sm:$0xff] %vm633, %v625
      %742 = vst.msk [vmem:[%s683 + $0x1a8] sm:$0xff] %vm633, %v626
      %743 = vst.msk [vmem:[%s683 + $0x1b0] sm:$0xff] %vm633, %v627
      %744 = vst.msk [vmem:[%s683 + $0x1c8] sm:$0xff] %vm633, %v628
      %745 = vst.msk [vmem:[%s683 + $0x1d0] sm:$0xff] %vm633, %v629
      %746 = vst.msk [vmem:[%s683 + $0x1e8] sm:$0xff] %vm633, %v630
      %747 = vst.msk [vmem:[%s683 + $0x1f0] sm:$0xff] %vm633, %v631
      %v748 = vld [vmem:[#allocation2] sm:$0xff]
      %v749 = vld [vmem:[#allocation2 + $0x8] sm:$0xff]
      %v750 = vld [vmem:[#allocation2 + $0x10] sm:$0xff]
      %v751 = vld [vmem:[#allocation2 + $0x18] sm:$0xff]
      %v752 = vld [vmem:[#allocation2 + $0x20] sm:$0xff]
      %v753 = vld [vmem:[#allocation2 + $0x28] sm:$0xff]
      %v754 = vld [vmem:[#allocation2 + $0x30] sm:$0xff]
      %v755 = vld [vmem:[#allocation2 + $0x38] sm:$0xff]
      %v756 = vld [vmem:[#allocation2 + $0x40] sm:$0xff]
      %v757 = vld [vmem:[#allocation2 + $0x48] sm:$0xff]
      %v758 = vld [vmem:[#allocation2 + $0x50] sm:$0xff]
      %v759 = vld [vmem:[#allocation2 + $0x58] sm:$0xff]
      %v760 = vld [vmem:[#allocation2 + $0x60] sm:$0xff]
      %v761 = vld [vmem:[#allocation2 + $0x68] sm:$0xff]
      %v762 = vld [vmem:[#allocation2 + $0x70] sm:$0xff]
      %v763 = vld [vmem:[#allocation2 + $0x78] sm:$0xff]
      %v764 = vld [vmem:[#allocation2 + $0x80] sm:$0xff]
      %v765 = vld [vmem:[#allocation2 + $0x88] sm:$0xff]
      %v766 = vld [vmem:[#allocation2 + $0x90] sm:$0xff]
      %v767 = vld [vmem:[#allocation2 + $0x98] sm:$0xff]
      %v768 = vld [vmem:[#allocation2 + $0xa0] sm:$0xff]
      %v769 = vld [vmem:[#allocation2 + $0xa8] sm:$0xff]
      %v770 = vld [vmem:[#allocation2 + $0xb0] sm:$0xff]
      %v771 = vld [vmem:[#allocation2 + $0xb8] sm:$0xff]
      %v772 = vld [vmem:[#allocation2 + $0xc0] sm:$0xff]
      %v773 = vld [vmem:[#allocation2 + $0xc8] sm:$0xff]
      %v774 = vld [vmem:[#allocation2 + $0xd0] sm:$0xff]
      %v775 = vld [vmem:[#allocation2 + $0xd8] sm:$0xff]
      %v776 = vld [vmem:[#allocation2 + $0xe0] sm:$0xff]
      %v777 = vld [vmem:[#allocation2 + $0xe8] sm:$0xff]
      %v778 = vld [vmem:[#allocation2 + $0xf0] sm:$0xff]
      %v779 = vld [vmem:[#allocation2 + $0xf8] sm:$0xff]
      %v780 = vld [vmem:[#allocation2 + $0x100] sm:$0xff]
      %v781 = vld [vmem:[#allocation2 + $0x108] sm:$0xff]
      %v782 = vld [vmem:[#allocation2 + $0x110] sm:$0xff]
      %v783 = vld [vmem:[#allocation2 + $0x118] sm:$0xff]
      %v784 = vld [vmem:[#allocation2 + $0x120] sm:$0xff]
      %v785 = vld [vmem:[#allocation2 + $0x128] sm:$0xff]
      %v786 = vld [vmem:[#allocation2 + $0x130] sm:$0xff]
      %v787 = vld [vmem:[#allocation2 + $0x138] sm:$0xff]
      %v788 = vld [vmem:[#allocation2 + $0x140] sm:$0xff]
      %v789 = vld [vmem:[#allocation2 + $0x148] sm:$0xff]
      %v790 = vld [vmem:[#allocation2 + $0x150] sm:$0xff]
      %v791 = vld [vmem:[#allocation2 + $0x158] sm:$0xff]
      %v792 = vld [vmem:[#allocation2 + $0x160] sm:$0xff]
      %v793 = vld [vmem:[#allocation2 + $0x168] sm:$0xff]
      %v794 = vld [vmem:[#allocation2 + $0x170] sm:$0xff]
      %v795 = vld [vmem:[#allocation2 + $0x178] sm:$0xff]
      %v796 = vld [vmem:[#allocation2 + $0x180] sm:$0xff]
      %v797 = vld [vmem:[#allocation2 + $0x188] sm:$0xff]
      %v798 = vld [vmem:[#allocation2 + $0x190] sm:$0xff]
      %v799 = vld [vmem:[#allocation2 + $0x198] sm:$0xff]
      %v800 = vld [vmem:[#allocation2 + $0x1a0] sm:$0xff]
      %v801 = vld [vmem:[#allocation2 + $0x1a8] sm:$0xff]
      %v802 = vld [vmem:[#allocation2 + $0x1b0] sm:$0xff]
      %v803 = vld [vmem:[#allocation2 + $0x1b8] sm:$0xff]
      %v804 = vld [vmem:[#allocation2 + $0x1c0] sm:$0xff]
      %v805 = vld [vmem:[#allocation2 + $0x1c8] sm:$0xff]
      %v806 = vld [vmem:[#allocation2 + $0x1d0] sm:$0xff]
      %v807 = vld [vmem:[#allocation2 + $0x1d8] sm:$0xff]
      %v808 = vld [vmem:[#allocation2 + $0x1e0] sm:$0xff]
      %v809 = vld [vmem:[#allocation2 + $0x1e8] sm:$0xff]
      %v810 = vld [vmem:[#allocation2 + $0x1f0] sm:$0xff]
      %v811 = vld [vmem:[#allocation2 + $0x1f8] sm:$0xff]
      %v812 = vld [vmem:[#allocation2 + $0x200] sm:$0xff]
      %v813 = vld [vmem:[#allocation2 + $0x208] sm:$0xff]
      %v814 = vld [vmem:[#allocation2 + $0x210] sm:$0xff]
      %v815 = vld [vmem:[#allocation2 + $0x218] sm:$0xff]
      %v816 = vld [vmem:[#allocation2 + $0x220] sm:$0xff]
      %v817 = vld [vmem:[#allocation2 + $0x228] sm:$0xff]
      %v818 = vld [vmem:[#allocation2 + $0x230] sm:$0xff]
      %v819 = vld [vmem:[#allocation2 + $0x238] sm:$0xff]
      %v820 = vld [vmem:[#allocation2 + $0x240] sm:$0xff]
      %v821 = vld [vmem:[#allocation2 + $0x248] sm:$0xff]
      %v822 = vld [vmem:[#allocation2 + $0x250] sm:$0xff]
      %v823 = vld [vmem:[#allocation2 + $0x258] sm:$0xff]
      %v824 = vld [vmem:[#allocation2 + $0x260] sm:$0xff]
      %v825 = vld [vmem:[#allocation2 + $0x268] sm:$0xff]
      %v826 = vld [vmem:[#allocation2 + $0x270] sm:$0xff]
      %v827 = vld [vmem:[#allocation2 + $0x278] sm:$0xff]
      %v828 = vld [vmem:[#allocation2 + $0x280] sm:$0xff]
      %v829 = vld [vmem:[#allocation2 + $0x288] sm:$0xff]
      %v830 = vld [vmem:[#allocation2 + $0x290] sm:$0xff]
      %v831 = vld [vmem:[#allocation2 + $0x298] sm:$0xff]
      %v832 = vld [vmem:[#allocation2 + $0x2a0] sm:$0xff]
      %v833 = vld [vmem:[#allocation2 + $0x2a8] sm:$0xff]
      %v834 = vld [vmem:[#allocation2 + $0x2b0] sm:$0xff]
      %v835 = vld [vmem:[#allocation2 + $0x2b8] sm:$0xff]
      %v836 = vld [vmem:[#allocation2 + $0x2c0] sm:$0xff]
      %v837 = vld [vmem:[#allocation2 + $0x2c8] sm:$0xff]
      %v838 = vld [vmem:[#allocation2 + $0x2d0] sm:$0xff]
      %v839 = vld [vmem:[#allocation2 + $0x2d8] sm:$0xff]
      %v840 = vld [vmem:[#allocation2 + $0x2e0] sm:$0xff]
      %v841 = vld [vmem:[#allocation2 + $0x2e8] sm:$0xff]
      %v842 = vld [vmem:[#allocation2 + $0x2f0] sm:$0xff]
      %v843 = vld [vmem:[#allocation2 + $0x2f8] sm:$0xff]
      %v844 = vld [vmem:[#allocation2 + $0x300] sm:$0xff]
      %v845 = vld [vmem:[#allocation2 + $0x308] sm:$0xff]
      %v846 = vld [vmem:[#allocation2 + $0x310] sm:$0xff]
      %v847 = vld [vmem:[#allocation2 + $0x318] sm:$0xff]
      %v848 = vld [vmem:[#allocation2 + $0x320] sm:$0xff]
      %v849 = vld [vmem:[#allocation2 + $0x328] sm:$0xff]
      %v850 = vld [vmem:[#allocation2 + $0x330] sm:$0xff]
      %v851 = vld [vmem:[#allocation2 + $0x338] sm:$0xff]
      %v852 = vld [vmem:[#allocation2 + $0x340] sm:$0xff]
      %v853 = vld [vmem:[#allocation2 + $0x348] sm:$0xff]
      %v854 = vld [vmem:[#allocation2 + $0x350] sm:$0xff]
      %v855 = vld [vmem:[#allocation2 + $0x358] sm:$0xff]
      %v856 = vld [vmem:[#allocation2 + $0x360] sm:$0xff]
      %v857 = vld [vmem:[#allocation2 + $0x368] sm:$0xff]
      %v858 = vld [vmem:[#allocation2 + $0x370] sm:$0xff]
      %v859 = vld [vmem:[#allocation2 + $0x378] sm:$0xff]
      %v860 = vmax.f32 %v748, %v752
      %v861 = vmax.f32 %v749, %v753
      %v862 = vmax.f32 %v750, %v754
      %v863 = vmax.f32 %v751, %v755
      %v864 = vmax.f32 %v752, %v756
      %v865 = vmax.f32 %v753, %v757
      %v866 = vmax.f32 %v754, %v758
      %v867 = vmax.f32 %v755, %v759
      %v868 = vmax.f32 %v756, %v760
      %v869 = vmax.f32 %v757, %v761
      %v870 = vmax.f32 %v758, %v762
      %v871 = vmax.f32 %v759, %v763
      %v872 = vmax.f32 %v760, %v764
      %v873 = vmax.f32 %v761, %v765
      %v874 = vmax.f32 %v762, %v766
      %v875 = vmax.f32 %v763, %v767
      %v876 = vmax.f32 %v764, %v768
      %v877 = vmax.f32 %v765, %v769
      %v878 = vmax.f32 %v766, %v770
      %v879 = vmax.f32 %v767, %v771
      %v880 = vmax.f32 %v768, %v772
      %v881 = vmax.f32 %v769, %v773
      %v882 = vmax.f32 %v770, %v774
      %v883 = vmax.f32 %v771, %v775
      %v884 = vmax.f32 %v772, %v776
      %v885 = vmax.f32 %v773, %v777
      %v886 = vmax.f32 %v774, %v778
      %v887 = vmax.f32 %v775, %v779
      %v888 = vmax.f32 %v776, %v780
      %v889 = vmax.f32 %v777, %v781
      %v890 = vmax.f32 %v778, %v782
      %v891 = vmax.f32 %v779, %v783
      %v892 = vmax.f32 %v780, %v784
      %v893 = vmax.f32 %v781, %v785
      %v894 = vmax.f32 %v782, %v786
      %v895 = vmax.f32 %v783, %v787
      %v896 = vmax.f32 %v784, %v788
      %v897 = vmax.f32 %v785, %v789
      %v898 = vmax.f32 %v786, %v790
      %v899 = vmax.f32 %v787, %v791
      %v900 = vmax.f32 %v788, %v792
      %v901 = vmax.f32 %v789, %v793
      %v902 = vmax.f32 %v790, %v794
      %v903 = vmax.f32 %v791, %v795
      %v904 = vmax.f32 %v792, %v796
      %v905 = vmax.f32 %v793, %v797
      %v906 = vmax.f32 %v794, %v798
      %v907 = vmax.f32 %v795, %v799
      %v908 = vmax.f32 %v796, %v800
      %v909 = vmax.f32 %v797, %v801
      %v910 = vmax.f32 %v798, %v802
      %v911 = vmax.f32 %v799, %v803
      %v912 = vmax.f32 %v800, %v804
      %v913 = vmax.f32 %v801, %v805
      %v914 = vmax.f32 %v802, %v806
      %v915 = vmax.f32 %v803, %v807
      %v916 = vmax.f32 %v804, %v808
      %v917 = vmax.f32 %v805, %v809
      %v918 = vmax.f32 %v806, %v810
      %v919 = vmax.f32 %v807, %v811
      %v920 = vmax.f32 %v808, %v812
      %v921 = vmax.f32 %v809, %v813
      %v922 = vmax.f32 %v810, %v814
      %v923 = vmax.f32 %v811, %v815
      %v924 = vmax.f32 %v812, %v816
      %v925 = vmax.f32 %v813, %v817
      %v926 = vmax.f32 %v814, %v818
      %v927 = vmax.f32 %v815, %v819
      %v928 = vmax.f32 %v816, %v820
      %v929 = vmax.f32 %v817, %v821
      %v930 = vmax.f32 %v818, %v822
      %v931 = vmax.f32 %v819, %v823
      %v932 = vmax.f32 %v820, %v824
      %v933 = vmax.f32 %v821, %v825
      %v934 = vmax.f32 %v822, %v826
      %v935 = vmax.f32 %v823, %v827
      %v936 = vmax.f32 %v824, %v828
      %v937 = vmax.f32 %v825, %v829
      %v938 = vmax.f32 %v826, %v830
      %v939 = vmax.f32 %v827, %v831
      %v940 = vmax.f32 %v828, %v832
      %v941 = vmax.f32 %v829, %v833
      %v942 = vmax.f32 %v830, %v834
      %v943 = vmax.f32 %v831, %v835
      %v944 = vmax.f32 %v832, %v836
      %v945 = vmax.f32 %v833, %v837
      %v946 = vmax.f32 %v834, %v838
      %v947 = vmax.f32 %v835, %v839
      %v948 = vmax.f32 %v836, %v840
      %v949 = vmax.f32 %v837, %v841
      %v950 = vmax.f32 %v838, %v842
      %v951 = vmax.f32 %v839, %v843
      %v952 = vmax.f32 %v840, %v844
      %v953 = vmax.f32 %v841, %v845
      %v954 = vmax.f32 %v842, %v846
      %v955 = vmax.f32 %v843, %v847
      %v956 = vmax.f32 %v844, %v848
      %v957 = vmax.f32 %v845, %v849
      %v958 = vmax.f32 %v846, %v850
      %v959 = vmax.f32 %v847, %v851
      %v960 = vmax.f32 %v848, %v852
      %v961 = vmax.f32 %v849, %v853
      %v962 = vmax.f32 %v850, %v854
      %v963 = vmax.f32 %v851, %v855
      %v964 = vmax.f32 %v860, %v868
      %v965 = vmax.f32 %v861, %v869
      %v966 = vmax.f32 %v862, %v870
      %v967 = vmax.f32 %v863, %v871
      %v968 = vmax.f32 %v864, %v872
      %v969 = vmax.f32 %v865, %v873
      %v970 = vmax.f32 %v866, %v874
      %v971 = vmax.f32 %v867, %v875
      %v972 = vmax.f32 %v868, %v876
      %v973 = vmax.f32 %v869, %v877
      %v974 = vmax.f32 %v870, %v878
      %v975 = vmax.f32 %v871, %v879
      %v976 = vmax.f32 %v872, %v880
      %v977 = vmax.f32 %v873, %v881
      %v978 = vmax.f32 %v874, %v882
      %v979 = vmax.f32 %v875, %v883
      %v980 = vmax.f32 %v876, %v884
      %v981 = vmax.f32 %v877, %v885
      %v982 = vmax.f32 %v878, %v886
      %v983 = vmax.f32 %v879, %v887
      %v984 = vmax.f32 %v880, %v888
      %v985 = vmax.f32 %v881, %v889
      %v986 = vmax.f32 %v882, %v890
      %v987 = vmax.f32 %v883, %v891
      %v988 = vmax.f32 %v884, %v892
      %v989 = vmax.f32 %v885, %v893
      %v990 = vmax.f32 %v886, %v894
      %v991 = vmax.f32 %v887, %v895
      %v992 = vmax.f32 %v888, %v896
      %v993 = vmax.f32 %v889, %v897
      %v994 = vmax.f32 %v890, %v898
      %v995 = vmax.f32 %v891, %v899
      %v996 = vmax.f32 %v892, %v900
      %v997 = vmax.f32 %v893, %v901
      %v998 = vmax.f32 %v894, %v902
      %v999 = vmax.f32 %v895, %v903
      %v1000 = vmax.f32 %v896, %v904
      %v1001 = vmax.f32 %v897, %v905
      %v1002 = vmax.f32 %v898, %v906
      %v1003 = vmax.f32 %v899, %v907
      %v1004 = vmax.f32 %v900, %v908
      %v1005 = vmax.f32 %v901, %v909
      %v1006 = vmax.f32 %v902, %v910
      %v1007 = vmax.f32 %v903, %v911
      %v1008 = vmax.f32 %v904, %v912
      %v1009 = vmax.f32 %v905, %v913
      %v1010 = vmax.f32 %v906, %v914
      %v1011 = vmax.f32 %v907, %v915
      %v1012 = vmax.f32 %v908, %v916
      %v1013 = vmax.f32 %v909, %v917
      %v1014 = vmax.f32 %v910, %v918
      %v1015 = vmax.f32 %v911, %v919
      %v1016 = vmax.f32 %v912, %v920
      %v1017 = vmax.f32 %v913, %v921
      %v1018 = vmax.f32 %v914, %v922
      %v1019 = vmax.f32 %v915, %v923
      %v1020 = vmax.f32 %v916, %v924
      %v1021 = vmax.f32 %v917, %v925
      %v1022 = vmax.f32 %v918, %v926
      %v1023 = vmax.f32 %v919, %v927
      %v1024 = vmax.f32 %v920, %v928
      %v1025 = vmax.f32 %v921, %v929
      %v1026 = vmax.f32 %v922, %v930
      %v1027 = vmax.f32 %v923, %v931
      %v1028 = vmax.f32 %v924, %v932
      %v1029 = vmax.f32 %v925, %v933
      %v1030 = vmax.f32 %v926, %v934
      %v1031 = vmax.f32 %v927, %v935
      %v1032 = vmax.f32 %v928, %v936
      %v1033 = vmax.f32 %v929, %v937
      %v1034 = vmax.f32 %v930, %v938
      %v1035 = vmax.f32 %v931, %v939
      %v1036 = vmax.f32 %v932, %v940
      %v1037 = vmax.f32 %v933, %v941
      %v1038 = vmax.f32 %v934, %v942
      %v1039 = vmax.f32 %v935, %v943
      %v1040 = vmax.f32 %v936, %v944
      %v1041 = vmax.f32 %v937, %v945
      %v1042 = vmax.f32 %v938, %v946
      %v1043 = vmax.f32 %v939, %v947
      %v1044 = vmax.f32 %v940, %v948
      %v1045 = vmax.f32 %v941, %v949
      %v1046 = vmax.f32 %v942, %v950
      %v1047 = vmax.f32 %v943, %v951
      %v1048 = vmax.f32 %v944, %v952
      %v1049 = vmax.f32 %v945, %v953
      %v1050 = vmax.f32 %v946, %v954
      %v1051 = vmax.f32 %v947, %v955
      %v1052 = vmax.f32 %v948, %v956
      %v1053 = vmax.f32 %v949, %v957
      %v1054 = vmax.f32 %v950, %v958
      %v1055 = vmax.f32 %v951, %v959
      %v1056 = vmax.f32 %v952, %v960
      %v1057 = vmax.f32 %v953, %v961
      %v1058 = vmax.f32 %v954, %v962
      %v1059 = vmax.f32 %v955, %v963
      %v1060 = vmax.f32 %v964, %v764
      %v1061 = vmax.f32 %v965, %v765
      %v1062 = vmax.f32 %v966, %v766
      %v1063 = vmax.f32 %v967, %v767
      %v1064 = vmax.f32 %v968, %v768
      %v1065 = vmax.f32 %v969, %v769
      %v1066 = vmax.f32 %v970, %v770
      %v1067 = vmax.f32 %v971, %v771
      %v1068 = vmax.f32 %v972, %v772
      %v1069 = vmax.f32 %v973, %v773
      %v1070 = vmax.f32 %v974, %v774
      %v1071 = vmax.f32 %v975, %v775
      %v1072 = vmax.f32 %v976, %v776
      %v1073 = vmax.f32 %v977, %v777
      %v1074 = vmax.f32 %v978, %v778
      %v1075 = vmax.f32 %v979, %v779
      %v1076 = vmax.f32 %v980, %v780
      %v1077 = vmax.f32 %v981, %v781
      %v1078 = vmax.f32 %v982, %v782
      %v1079 = vmax.f32 %v983, %v783
      %v1080 = vmax.f32 %v984, %v784
      %v1081 = vmax.f32 %v985, %v785
      %v1082 = vmax.f32 %v986, %v786
      %v1083 = vmax.f32 %v987, %v787
      %v1084 = vmax.f32 %v988, %v788
      %v1085 = vmax.f32 %v989, %v789
      %v1086 = vmax.f32 %v990, %v790
      %v1087 = vmax.f32 %v991, %v791
      %v1088 = vmax.f32 %v992, %v792
      %v1089 = vmax.f32 %v993, %v793
      %v1090 = vmax.f32 %v994, %v794
      %v1091 = vmax.f32 %v995, %v795
      %v1092 = vmax.f32 %v996, %v796
      %v1093 = vmax.f32 %v997, %v797
      %v1094 = vmax.f32 %v998, %v798
      %v1095 = vmax.f32 %v999, %v799
      %v1096 = vmax.f32 %v1000, %v800
      %v1097 = vmax.f32 %v1001, %v801
      %v1098 = vmax.f32 %v1002, %v802
      %v1099 = vmax.f32 %v1003, %v803
      %v1100 = vmax.f32 %v1004, %v804
      %v1101 = vmax.f32 %v1005, %v805
      %v1102 = vmax.f32 %v1006, %v806
      %v1103 = vmax.f32 %v1007, %v807
      %v1104 = vmax.f32 %v1008, %v808
      %v1105 = vmax.f32 %v1009, %v809
      %v1106 = vmax.f32 %v1010, %v810
      %v1107 = vmax.f32 %v1011, %v811
      %v1108 = vmax.f32 %v1012, %v812
      %v1109 = vmax.f32 %v1013, %v813
      %v1110 = vmax.f32 %v1014, %v814
      %v1111 = vmax.f32 %v1015, %v815
      %v1112 = vmax.f32 %v1016, %v816
      %v1113 = vmax.f32 %v1017, %v817
      %v1114 = vmax.f32 %v1018, %v818
      %v1115 = vmax.f32 %v1019, %v819
      %v1116 = vmax.f32 %v1020, %v820
      %v1117 = vmax.f32 %v1021, %v821
      %v1118 = vmax.f32 %v1022, %v822
      %v1119 = vmax.f32 %v1023, %v823
      %v1120 = vmax.f32 %v1024, %v824
      %v1121 = vmax.f32 %v1025, %v825
      %v1122 = vmax.f32 %v1026, %v826
      %v1123 = vmax.f32 %v1027, %v827
      %v1124 = vmax.f32 %v1028, %v828
      %v1125 = vmax.f32 %v1029, %v829
      %v1126 = vmax.f32 %v1030, %v830
      %v1127 = vmax.f32 %v1031, %v831
      %v1128 = vmax.f32 %v1032, %v832
      %v1129 = vmax.f32 %v1033, %v833
      %v1130 = vmax.f32 %v1034, %v834
      %v1131 = vmax.f32 %v1035, %v835
      %v1132 = vmax.f32 %v1036, %v836
      %v1133 = vmax.f32 %v1037, %v837
      %v1134 = vmax.f32 %v1038, %v838
      %v1135 = vmax.f32 %v1039, %v839
      %v1136 = vmax.f32 %v1040, %v840
      %v1137 = vmax.f32 %v1041, %v841
      %v1138 = vmax.f32 %v1042, %v842
      %v1139 = vmax.f32 %v1043, %v843
      %v1140 = vmax.f32 %v1044, %v844
      %v1141 = vmax.f32 %v1045, %v845
      %v1142 = vmax.f32 %v1046, %v846
      %v1143 = vmax.f32 %v1047, %v847
      %v1144 = vmax.f32 %v1048, %v848
      %v1145 = vmax.f32 %v1049, %v849
      %v1146 = vmax.f32 %v1050, %v850
      %v1147 = vmax.f32 %v1051, %v851
      %v1148 = vmax.f32 %v1052, %v852
      %v1149 = vmax.f32 %v1053, %v853
      %v1150 = vmax.f32 %v1054, %v854
      %v1151 = vmax.f32 %v1055, %v855
      %v1152 = vmax.f32 %v1056, %v856
      %v1153 = vmax.f32 %v1057, %v857
      %v1154 = vmax.f32 %v1058, %v858
      %v1155 = vmax.f32 %v1059, %v859
      %v1156 = vrot.slane %v1060, 1
      %v1157 = vrot.slane %v1064, 1
      %v1158 = vrot.slane %v1068, 1
      %v1159 = vrot.slane %v1072, 1
      %v1160 = vrot.slane %v1076, 1
      %v1161 = vrot.slane %v1080, 1
      %v1162 = vrot.slane %v1084, 1
      %v1163 = vrot.slane %v1088, 1
      %v1164 = vrot.slane %v1092, 1
      %v1165 = vrot.slane %v1096, 1
      %v1166 = vrot.slane %v1100, 1
      %v1167 = vrot.slane %v1104, 1
      %v1168 = vrot.slane %v1108, 1
      %v1169 = vrot.slane %v1112, 1
      %v1170 = vrot.slane %v1116, 1
      %v1171 = vrot.slane %v1120, 1
      %v1172 = vrot.slane %v1124, 1
      %v1173 = vrot.slane %v1128, 1
      %v1174 = vrot.slane %v1132, 1
      %v1175 = vrot.slane %v1136, 1
      %v1176 = vrot.slane %v1140, 1
      %v1177 = vrot.slane %v1144, 1
      %v1178 = vrot.slane %v1148, 1
      %v1179 = vrot.slane %v1152, 1
      %v1180 = vrot.slane %v1061, 1
      %v1181 = vrot.slane %v1065, 1
      %v1182 = vrot.slane %v1069, 1
      %v1183 = vrot.slane %v1073, 1
      %v1184 = vrot.slane %v1077, 1
      %v1185 = vrot.slane %v1081, 1
      %v1186 = vrot.slane %v1085, 1
      %v1187 = vrot.slane %v1089, 1
      %v1188 = vrot.slane %v1093, 1
      %v1189 = vrot.slane %v1097, 1
      %v1190 = vrot.slane %v1101, 1
      %v1191 = vrot.slane %v1105, 1
      %v1192 = vrot.slane %v1109, 1
      %v1193 = vrot.slane %v1113, 1
      %v1194 = vrot.slane %v1117, 1
      %v1195 = vrot.slane %v1121, 1
      %v1196 = vrot.slane %v1125, 1
      %v1197 = vrot.slane %v1129, 1
      %v1198 = vrot.slane %v1133, 1
      %v1199 = vrot.slane %v1137, 1
      %v1200 = vrot.slane %v1141, 1
      %v1201 = vrot.slane %v1145, 1
      %v1202 = vrot.slane %v1149, 1
      %v1203 = vrot.slane %v1153, 1
      %v1204 = vrot.slane %v1062, 1
      %v1205 = vrot.slane %v1066, 1
      %v1206 = vrot.slane %v1070, 1
      %v1207 = vrot.slane %v1074, 1
      %v1208 = vrot.slane %v1078, 1
      %v1209 = vrot.slane %v1082, 1
      %v1210 = vrot.slane %v1086, 1
      %v1211 = vrot.slane %v1090, 1
      %v1212 = vrot.slane %v1094, 1
      %v1213 = vrot.slane %v1098, 1
      %v1214 = vrot.slane %v1102, 1
      %v1215 = vrot.slane %v1106, 1
      %v1216 = vrot.slane %v1110, 1
      %v1217 = vrot.slane %v1114, 1
      %v1218 = vrot.slane %v1118, 1
      %v1219 = vrot.slane %v1122, 1
      %v1220 = vrot.slane %v1126, 1
      %v1221 = vrot.slane %v1130, 1
      %v1222 = vrot.slane %v1134, 1
      %v1223 = vrot.slane %v1138, 1
      %v1224 = vrot.slane %v1142, 1
      %v1225 = vrot.slane %v1146, 1
      %v1226 = vrot.slane %v1150, 1
      %v1227 = vrot.slane %v1154, 1
      %v1228 = vrot.slane %v1063, 1
      %v1229 = vrot.slane %v1067, 1
      %v1230 = vrot.slane %v1071, 1
      %v1231 = vrot.slane %v1075, 1
      %v1232 = vrot.slane %v1079, 1
      %v1233 = vrot.slane %v1083, 1
      %v1234 = vrot.slane %v1087, 1
      %v1235 = vrot.slane %v1091, 1
      %v1236 = vrot.slane %v1095, 1
      %v1237 = vrot.slane %v1099, 1
      %v1238 = vrot.slane %v1103, 1
      %v1239 = vrot.slane %v1107, 1
      %v1240 = vrot.slane %v1111, 1
      %v1241 = vrot.slane %v1115, 1
      %v1242 = vrot.slane %v1119, 1
      %v1243 = vrot.slane %v1123, 1
      %v1244 = vrot.slane %v1127, 1
      %v1245 = vrot.slane %v1131, 1
      %v1246 = vrot.slane %v1135, 1
      %v1247 = vrot.slane %v1139, 1
      %v1248 = vrot.slane %v1143, 1
      %v1249 = vrot.slane %v1147, 1
      %v1250 = vrot.slane %v1151, 1
      %v1251 = vrot.slane %v1155, 1
      %v1252 = vlaneseq
      %v1253 = vshrl.u32 %v1252, 7
      %vm1254 = vcmp.lt.s32.totalorder %v1253, 7
      %v1255 = vsel %vm1254, %v1204, %v1228
      %v1256 = vsel %vm1254, %v1205, %v1229
      %v1257 = vsel %vm1254, %v1206, %v1230
      %v1258 = vsel %vm1254, %v1207, %v1231
      %v1259 = vsel %vm1254, %v1208, %v1232
      %v1260 = vsel %vm1254, %v1209, %v1233
      %v1261 = vsel %vm1254, %v1210, %v1234
      %v1262 = vsel %vm1254, %v1211, %v1235
      %v1263 = vsel %vm1254, %v1212, %v1236
      %v1264 = vsel %vm1254, %v1213, %v1237
      %v1265 = vsel %vm1254, %v1214, %v1238
      %v1266 = vsel %vm1254, %v1215, %v1239
      %v1267 = vsel %vm1254, %v1216, %v1240
      %v1268 = vsel %vm1254, %v1217, %v1241
      %v1269 = vsel %vm1254, %v1218, %v1242
      %v1270 = vsel %vm1254, %v1219, %v1243
      %v1271 = vsel %vm1254, %v1220, %v1244
      %v1272 = vsel %vm1254, %v1221, %v1245
      %v1273 = vsel %vm1254, %v1222, %v1246
      %v1274 = vsel %vm1254, %v1223, %v1247
      %v1275 = vsel %vm1254, %v1224, %v1248
      %v1276 = vsel %vm1254, %v1225, %v1249
      %v1277 = vsel %vm1254, %v1226, %v1250
      %v1278 = vsel %vm1254, %v1227, %v1251
      %v1279 = vsel %vm1254, %v1180, %v1204
      %v1280 = vsel %vm1254, %v1181, %v1205
      %v1281 = vsel %vm1254, %v1182, %v1206
      %v1282 = vsel %vm1254, %v1183, %v1207
      %v1283 = vsel %vm1254, %v1184, %v1208
      %v1284 = vsel %vm1254, %v1185, %v1209
      %v1285 = vsel %vm1254, %v1186, %v1210
      %v1286 = vsel %vm1254, %v1187, %v1211
      %v1287 = vsel %vm1254, %v1188, %v1212
      %v1288 = vsel %vm1254, %v1189, %v1213
      %v1289 = vsel %vm1254, %v1190, %v1214
      %v1290 = vsel %vm1254, %v1191, %v1215
      %v1291 = vsel %vm1254, %v1192, %v1216
      %v1292 = vsel %vm1254, %v1193, %v1217
      %v1293 = vsel %vm1254, %v1194, %v1218
      %v1294 = vsel %vm1254, %v1195, %v1219
      %v1295 = vsel %vm1254, %v1196, %v1220
      %v1296 = vsel %vm1254, %v1197, %v1221
      %v1297 = vsel %vm1254, %v1198, %v1222
      %v1298 = vsel %vm1254, %v1199, %v1223
      %v1299 = vsel %vm1254, %v1200, %v1224
      %v1300 = vsel %vm1254, %v1201, %v1225
      %v1301 = vsel %vm1254, %v1202, %v1226
      %v1302 = vsel %vm1254, %v1203, %v1227
      %v1303 = vsel %vm1254, %v1156, %v1180
      %v1304 = vsel %vm1254, %v1157, %v1181
      %v1305 = vsel %vm1254, %v1158, %v1182
      %v1306 = vsel %vm1254, %v1159, %v1183
      %v1307 = vsel %vm1254, %v1160, %v1184
      %v1308 = vsel %vm1254, %v1161, %v1185
      %v1309 = vsel %vm1254, %v1162, %v1186
      %v1310 = vsel %vm1254, %v1163, %v1187
      %v1311 = vsel %vm1254, %v1164, %v1188
      %v1312 = vsel %vm1254, %v1165, %v1189
      %v1313 = vsel %vm1254, %v1166, %v1190
      %v1314 = vsel %vm1254, %v1167, %v1191
      %v1315 = vsel %vm1254, %v1168, %v1192
      %v1316 = vsel %vm1254, %v1169, %v1193
      %v1317 = vsel %vm1254, %v1170, %v1194
      %v1318 = vsel %vm1254, %v1171, %v1195
      %v1319 = vsel %vm1254, %v1172, %v1196
      %v1320 = vsel %vm1254, %v1173, %v1197
      %v1321 = vsel %vm1254, %v1174, %v1198
      %v1322 = vsel %vm1254, %v1175, %v1199
      %v1323 = vsel %vm1254, %v1176, %v1200
      %v1324 = vsel %vm1254, %v1177, %v1201
      %v1325 = vsel %vm1254, %v1178, %v1202
      %v1326 = vsel %vm1254, %v1179, %v1203
      %v1327 = vsel %vm1254, %v1228, %v1156
      %v1328 = vsel %vm1254, %v1229, %v1157
      %v1329 = vsel %vm1254, %v1230, %v1158
      %v1330 = vsel %vm1254, %v1231, %v1159
      %v1331 = vsel %vm1254, %v1232, %v1160
      %v1332 = vsel %vm1254, %v1233, %v1161
      %v1333 = vsel %vm1254, %v1234, %v1162
      %v1334 = vsel %vm1254, %v1235, %v1163
      %v1335 = vsel %vm1254, %v1236, %v1164
      %v1336 = vsel %vm1254, %v1237, %v1165
      %v1337 = vsel %vm1254, %v1238, %v1166
      %v1338 = vsel %vm1254, %v1239, %v1167
      %v1339 = vsel %vm1254, %v1240, %v1168
      %v1340 = vsel %vm1254, %v1241, %v1169
      %v1341 = vsel %vm1254, %v1242, %v1170
      %v1342 = vsel %vm1254, %v1243, %v1171
      %v1343 = vsel %vm1254, %v1244, %v1172
      %v1344 = vsel %vm1254, %v1245, %v1173
      %v1345 = vsel %vm1254, %v1246, %v1174
      %v1346 = vsel %vm1254, %v1247, %v1175
      %v1347 = vsel %vm1254, %v1248, %v1176
      %v1348 = vsel %vm1254, %v1249, %v1177
      %v1349 = vsel %vm1254, %v1250, %v1178
      %v1350 = vsel %vm1254, %v1251, %v1179
      %v1351 = vmax.f32 %v1060, %v1303
      %v1352 = vmax.f32 %v1061, %v1279
      %v1353 = vmax.f32 %v1062, %v1255
      %v1354 = vmax.f32 %v1063, %v1327
      %v1355 = vmax.f32 %v1064, %v1304
      %v1356 = vmax.f32 %v1065, %v1280
      %v1357 = vmax.f32 %v1066, %v1256
      %v1358 = vmax.f32 %v1067, %v1328
      %v1359 = vmax.f32 %v1068, %v1305
      %v1360 = vmax.f32 %v1069, %v1281
      %v1361 = vmax.f32 %v1070, %v1257
      %v1362 = vmax.f32 %v1071, %v1329
      %v1363 = vmax.f32 %v1072, %v1306
      %v1364 = vmax.f32 %v1073, %v1282
      %v1365 = vmax.f32 %v1074, %v1258
      %v1366 = vmax.f32 %v1075, %v1330
      %v1367 = vmax.f32 %v1076, %v1307
      %v1368 = vmax.f32 %v1077, %v1283
      %v1369 = vmax.f32 %v1078, %v1259
      %v1370 = vmax.f32 %v1079, %v1331
      %v1371 = vmax.f32 %v1080, %v1308
      %v1372 = vmax.f32 %v1081, %v1284
      %v1373 = vmax.f32 %v1082, %v1260
      %v1374 = vmax.f32 %v1083, %v1332
      %v1375 = vmax.f32 %v1084, %v1309
      %v1376 = vmax.f32 %v1085, %v1285
      %v1377 = vmax.f32 %v1086, %v1261
      %v1378 = vmax.f32 %v1087, %v1333
      %v1379 = vmax.f32 %v1088, %v1310
      %v1380 = vmax.f32 %v1089, %v1286
      %v1381 = vmax.f32 %v1090, %v1262
      %v1382 = vmax.f32 %v1091, %v1334
      %v1383 = vmax.f32 %v1092, %v1311
      %v1384 = vmax.f32 %v1093, %v1287
      %v1385 = vmax.f32 %v1094, %v1263
      %v1386 = vmax.f32 %v1095, %v1335
      %v1387 = vmax.f32 %v1096, %v1312
      %v1388 = vmax.f32 %v1097, %v1288
      %v1389 = vmax.f32 %v1098, %v1264
      %v1390 = vmax.f32 %v1099, %v1336
      %v1391 = vmax.f32 %v1100, %v1313
      %v1392 = vmax.f32 %v1101, %v1289
      %v1393 = vmax.f32 %v1102, %v1265
      %v1394 = vmax.f32 %v1103, %v1337
      %v1395 = vmax.f32 %v1104, %v1314
      %v1396 = vmax.f32 %v1105, %v1290
      %v1397 = vmax.f32 %v1106, %v1266
      %v1398 = vmax.f32 %v1107, %v1338
      %v1399 = vmax.f32 %v1108, %v1315
      %v1400 = vmax.f32 %v1109, %v1291
      %v1401 = vmax.f32 %v1110, %v1267
      %v1402 = vmax.f32 %v1111, %v1339
      %v1403 = vmax.f32 %v1112, %v1316
      %v1404 = vmax.f32 %v1113, %v1292
      %v1405 = vmax.f32 %v1114, %v1268
      %v1406 = vmax.f32 %v1115, %v1340
      %v1407 = vmax.f32 %v1116, %v1317
      %v1408 = vmax.f32 %v1117, %v1293
      %v1409 = vmax.f32 %v1118, %v1269
      %v1410 = vmax.f32 %v1119, %v1341
      %v1411 = vmax.f32 %v1120, %v1318
      %v1412 = vmax.f32 %v1121, %v1294
      %v1413 = vmax.f32 %v1122, %v1270
      %v1414 = vmax.f32 %v1123, %v1342
      %v1415 = vmax.f32 %v1124, %v1319
      %v1416 = vmax.f32 %v1125, %v1295
      %v1417 = vmax.f32 %v1126, %v1271
      %v1418 = vmax.f32 %v1127, %v1343
      %v1419 = vmax.f32 %v1128, %v1320
      %v1420 = vmax.f32 %v1129, %v1296
      %v1421 = vmax.f32 %v1130, %v1272
      %v1422 = vmax.f32 %v1131, %v1344
      %v1423 = vmax.f32 %v1132, %v1321
      %v1424 = vmax.f32 %v1133, %v1297
      %v1425 = vmax.f32 %v1134, %v1273
      %v1426 = vmax.f32 %v1135, %v1345
      %v1427 = vmax.f32 %v1136, %v1322
      %v1428 = vmax.f32 %v1137, %v1298
      %v1429 = vmax.f32 %v1138, %v1274
      %v1430 = vmax.f32 %v1139, %v1346
      %v1431 = vmax.f32 %v1140, %v1323
      %v1432 = vmax.f32 %v1141, %v1299
      %v1433 = vmax.f32 %v1142, %v1275
      %v1434 = vmax.f32 %v1143, %v1347
      %v1435 = vmax.f32 %v1144, %v1324
      %v1436 = vmax.f32 %v1145, %v1300
      %v1437 = vmax.f32 %v1146, %v1276
      %v1438 = vmax.f32 %v1147, %v1348
      %v1439 = vmax.f32 %v1148, %v1325
      %v1440 = vmax.f32 %v1149, %v1301
      %v1441 = vmax.f32 %v1150, %v1277
      %v1442 = vmax.f32 %v1151, %v1349
      %v1443 = vmax.f32 %v1152, %v1326
      %v1444 = vmax.f32 %v1153, %v1302
      %v1445 = vmax.f32 %v1154, %v1278
      %v1446 = vmax.f32 %v1155, %v1350
      %v1447 = vrot.slane %v1351, 2
      %v1448 = vrot.slane %v1355, 2
      %v1449 = vrot.slane %v1359, 2
      %v1450 = vrot.slane %v1363, 2
      %v1451 = vrot.slane %v1367, 2
      %v1452 = vrot.slane %v1371, 2
      %v1453 = vrot.slane %v1375, 2
      %v1454 = vrot.slane %v1379, 2
      %v1455 = vrot.slane %v1383, 2
      %v1456 = vrot.slane %v1387, 2
      %v1457 = vrot.slane %v1391, 2
      %v1458 = vrot.slane %v1395, 2
      %v1459 = vrot.slane %v1399, 2
      %v1460 = vrot.slane %v1403, 2
      %v1461 = vrot.slane %v1407, 2
      %v1462 = vrot.slane %v1411, 2
      %v1463 = vrot.slane %v1415, 2
      %v1464 = vrot.slane %v1419, 2
      %v1465 = vrot.slane %v1423, 2
      %v1466 = vrot.slane %v1427, 2
      %v1467 = vrot.slane %v1431, 2
      %v1468 = vrot.slane %v1435, 2
      %v1469 = vrot.slane %v1439, 2
      %v1470 = vrot.slane %v1443, 2
      %v1471 = vrot.slane %v1352, 2
      %v1472 = vrot.slane %v1356, 2
      %v1473 = vrot.slane %v1360, 2
      %v1474 = vrot.slane %v1364, 2
      %v1475 = vrot.slane %v1368, 2
      %v1476 = vrot.slane %v1372, 2
      %v1477 = vrot.slane %v1376, 2
      %v1478 = vrot.slane %v1380, 2
      %v1479 = vrot.slane %v1384, 2
      %v1480 = vrot.slane %v1388, 2
      %v1481 = vrot.slane %v1392, 2
      %v1482 = vrot.slane %v1396, 2
      %v1483 = vrot.slane %v1400, 2
      %v1484 = vrot.slane %v1404, 2
      %v1485 = vrot.slane %v1408, 2
      %v1486 = vrot.slane %v1412, 2
      %v1487 = vrot.slane %v1416, 2
      %v1488 = vrot.slane %v1420, 2
      %v1489 = vrot.slane %v1424, 2
      %v1490 = vrot.slane %v1428, 2
      %v1491 = vrot.slane %v1432, 2
      %v1492 = vrot.slane %v1436, 2
      %v1493 = vrot.slane %v1440, 2
      %v1494 = vrot.slane %v1444, 2
      %v1495 = vrot.slane %v1353, 2
      %v1496 = vrot.slane %v1357, 2
      %v1497 = vrot.slane %v1361, 2
      %v1498 = vrot.slane %v1365, 2
      %v1499 = vrot.slane %v1369, 2
      %v1500 = vrot.slane %v1373, 2
      %v1501 = vrot.slane %v1377, 2
      %v1502 = vrot.slane %v1381, 2
      %v1503 = vrot.slane %v1385, 2
      %v1504 = vrot.slane %v1389, 2
      %v1505 = vrot.slane %v1393, 2
      %v1506 = vrot.slane %v1397, 2
      %v1507 = vrot.slane %v1401, 2
      %v1508 = vrot.slane %v1405, 2
      %v1509 = vrot.slane %v1409, 2
      %v1510 = vrot.slane %v1413, 2
      %v1511 = vrot.slane %v1417, 2
      %v1512 = vrot.slane %v1421, 2
      %v1513 = vrot.slane %v1425, 2
      %v1514 = vrot.slane %v1429, 2
      %v1515 = vrot.slane %v1433, 2
      %v1516 = vrot.slane %v1437, 2
      %v1517 = vrot.slane %v1441, 2
      %v1518 = vrot.slane %v1445, 2
      %v1519 = vrot.slane %v1354, 2
      %v1520 = vrot.slane %v1358, 2
      %v1521 = vrot.slane %v1362, 2
      %v1522 = vrot.slane %v1366, 2
      %v1523 = vrot.slane %v1370, 2
      %v1524 = vrot.slane %v1374, 2
      %v1525 = vrot.slane %v1378, 2
      %v1526 = vrot.slane %v1382, 2
      %v1527 = vrot.slane %v1386, 2
      %v1528 = vrot.slane %v1390, 2
      %v1529 = vrot.slane %v1394, 2
      %v1530 = vrot.slane %v1398, 2
      %v1531 = vrot.slane %v1402, 2
      %v1532 = vrot.slane %v1406, 2
      %v1533 = vrot.slane %v1410, 2
      %v1534 = vrot.slane %v1414, 2
      %v1535 = vrot.slane %v1418, 2
      %v1536 = vrot.slane %v1422, 2
      %v1537 = vrot.slane %v1426, 2
      %v1538 = vrot.slane %v1430, 2
      %v1539 = vrot.slane %v1434, 2
      %v1540 = vrot.slane %v1438, 2
      %v1541 = vrot.slane %v1442, 2
      %v1542 = vrot.slane %v1446, 2
      %vm1543 = vcmp.lt.s32.totalorder %v1253, 6
      %v1544 = vsel %vm1543, %v1495, %v1519
      %v1545 = vsel %vm1543, %v1496, %v1520
      %v1546 = vsel %vm1543, %v1497, %v1521
      %v1547 = vsel %vm1543, %v1498, %v1522
      %v1548 = vsel %vm1543, %v1499, %v1523
      %v1549 = vsel %vm1543, %v1500, %v1524
      %v1550 = vsel %vm1543, %v1501, %v1525
      %v1551 = vsel %vm1543, %v1502, %v1526
      %v1552 = vsel %vm1543, %v1503, %v1527
      %v1553 = vsel %vm1543, %v1504, %v1528
      %v1554 = vsel %vm1543, %v1505, %v1529
      %v1555 = vsel %vm1543, %v1506, %v1530
      %v1556 = vsel %vm1543, %v1507, %v1531
      %v1557 = vsel %vm1543, %v1508, %v1532
      %v1558 = vsel %vm1543, %v1509, %v1533
      %v1559 = vsel %vm1543, %v1510, %v1534
      %v1560 = vsel %vm1543, %v1511, %v1535
      %v1561 = vsel %vm1543, %v1512, %v1536
      %v1562 = vsel %vm1543, %v1513, %v1537
      %v1563 = vsel %vm1543, %v1514, %v1538
      %v1564 = vsel %vm1543, %v1515, %v1539
      %v1565 = vsel %vm1543, %v1516, %v1540
      %v1566 = vsel %vm1543, %v1517, %v1541
      %v1567 = vsel %vm1543, %v1518, %v1542
      %v1568 = vsel %vm1543, %v1471, %v1495
      %v1569 = vsel %vm1543, %v1472, %v1496
      %v1570 = vsel %vm1543, %v1473, %v1497
      %v1571 = vsel %vm1543, %v1474, %v1498
      %v1572 = vsel %vm1543, %v1475, %v1499
      %v1573 = vsel %vm1543, %v1476, %v1500
      %v1574 = vsel %vm1543, %v1477, %v1501
      %v1575 = vsel %vm1543, %v1478, %v1502
      %v1576 = vsel %vm1543, %v1479, %v1503
      %v1577 = vsel %vm1543, %v1480, %v1504
      %v1578 = vsel %vm1543, %v1481, %v1505
      %v1579 = vsel %vm1543, %v1482, %v1506
      %v1580 = vsel %vm1543, %v1483, %v1507
      %v1581 = vsel %vm1543, %v1484, %v1508
      %v1582 = vsel %vm1543, %v1485, %v1509
      %v1583 = vsel %vm1543, %v1486, %v1510
      %v1584 = vsel %vm1543, %v1487, %v1511
      %v1585 = vsel %vm1543, %v1488, %v1512
      %v1586 = vsel %vm1543, %v1489, %v1513
      %v1587 = vsel %vm1543, %v1490, %v1514
      %v1588 = vsel %vm1543, %v1491, %v1515
      %v1589 = vsel %vm1543, %v1492, %v1516
      %v1590 = vsel %vm1543, %v1493, %v1517
      %v1591 = vsel %vm1543, %v1494, %v1518
      %v1592 = vsel %vm1543, %v1447, %v1471
      %v1593 = vsel %vm1543, %v1448, %v1472
      %v1594 = vsel %vm1543, %v1449, %v1473
      %v1595 = vsel %vm1543, %v1450, %v1474
      %v1596 = vsel %vm1543, %v1451, %v1475
      %v1597 = vsel %vm1543, %v1452, %v1476
      %v1598 = vsel %vm1543, %v1453, %v1477
      %v1599 = vsel %vm1543, %v1454, %v1478
      %v1600 = vsel %vm1543, %v1455, %v1479
      %v1601 = vsel %vm1543, %v1456, %v1480
      %v1602 = vsel %vm1543, %v1457, %v1481
      %v1603 = vsel %vm1543, %v1458, %v1482
      %v1604 = vsel %vm1543, %v1459, %v1483
      %v1605 = vsel %vm1543, %v1460, %v1484
      %v1606 = vsel %vm1543, %v1461, %v1485
      %v1607 = vsel %vm1543, %v1462, %v1486
      %v1608 = vsel %vm1543, %v1463, %v1487
      %v1609 = vsel %vm1543, %v1464, %v1488
      %v1610 = vsel %vm1543, %v1465, %v1489
      %v1611 = vsel %vm1543, %v1466, %v1490
      %v1612 = vsel %vm1543, %v1467, %v1491
      %v1613 = vsel %vm1543, %v1468, %v1492
      %v1614 = vsel %vm1543, %v1469, %v1493
      %v1615 = vsel %vm1543, %v1470, %v1494
      %v1616 = vsel %vm1543, %v1519, %v1447
      %v1617 = vsel %vm1543, %v1520, %v1448
      %v1618 = vsel %vm1543, %v1521, %v1449
      %v1619 = vsel %vm1543, %v1522, %v1450
      %v1620 = vsel %vm1543, %v1523, %v1451
      %v1621 = vsel %vm1543, %v1524, %v1452
      %v1622 = vsel %vm1543, %v1525, %v1453
      %v1623 = vsel %vm1543, %v1526, %v1454
      %v1624 = vsel %vm1543, %v1527, %v1455
      %v1625 = vsel %vm1543, %v1528, %v1456
      %v1626 = vsel %vm1543, %v1529, %v1457
      %v1627 = vsel %vm1543, %v1530, %v1458
      %v1628 = vsel %vm1543, %v1531, %v1459
      %v1629 = vsel %vm1543, %v1532, %v1460
      %v1630 = vsel %vm1543, %v1533, %v1461
      %v1631 = vsel %vm1543, %v1534, %v1462
      %v1632 = vsel %vm1543, %v1535, %v1463
      %v1633 = vsel %vm1543, %v1536, %v1464
      %v1634 = vsel %vm1543, %v1537, %v1465
      %v1635 = vsel %vm1543, %v1538, %v1466
      %v1636 = vsel %vm1543, %v1539, %v1467
      %v1637 = vsel %vm1543, %v1540, %v1468
      %v1638 = vsel %vm1543, %v1541, %v1469
      %v1639 = vsel %vm1543, %v1542, %v1470
      %v1640 = vmax.f32 %v1351, %v1592
      %v1641 = vmax.f32 %v1352, %v1568
      %v1642 = vmax.f32 %v1353, %v1544
      %v1643 = vmax.f32 %v1354, %v1616
      %v1644 = vmax.f32 %v1355, %v1593
      %v1645 = vmax.f32 %v1356, %v1569
      %v1646 = vmax.f32 %v1357, %v1545
      %v1647 = vmax.f32 %v1358, %v1617
      %v1648 = vmax.f32 %v1359, %v1594
      %v1649 = vmax.f32 %v1360, %v1570
      %v1650 = vmax.f32 %v1361, %v1546
      %v1651 = vmax.f32 %v1362, %v1618
      %v1652 = vmax.f32 %v1363, %v1595
      %v1653 = vmax.f32 %v1364, %v1571
      %v1654 = vmax.f32 %v1365, %v1547
      %v1655 = vmax.f32 %v1366, %v1619
      %v1656 = vmax.f32 %v1367, %v1596
      %v1657 = vmax.f32 %v1368, %v1572
      %v1658 = vmax.f32 %v1369, %v1548
      %v1659 = vmax.f32 %v1370, %v1620
      %v1660 = vmax.f32 %v1371, %v1597
      %v1661 = vmax.f32 %v1372, %v1573
      %v1662 = vmax.f32 %v1373, %v1549
      %v1663 = vmax.f32 %v1374, %v1621
      %v1664 = vmax.f32 %v1375, %v1598
      %v1665 = vmax.f32 %v1376, %v1574
      %v1666 = vmax.f32 %v1377, %v1550
      %v1667 = vmax.f32 %v1378, %v1622
      %v1668 = vmax.f32 %v1379, %v1599
      %v1669 = vmax.f32 %v1380, %v1575
      %v1670 = vmax.f32 %v1381, %v1551
      %v1671 = vmax.f32 %v1382, %v1623
      %v1672 = vmax.f32 %v1383, %v1600
      %v1673 = vmax.f32 %v1384, %v1576
      %v1674 = vmax.f32 %v1385, %v1552
      %v1675 = vmax.f32 %v1386, %v1624
      %v1676 = vmax.f32 %v1387, %v1601
      %v1677 = vmax.f32 %v1388, %v1577
      %v1678 = vmax.f32 %v1389, %v1553
      %v1679 = vmax.f32 %v1390, %v1625
      %v1680 = vmax.f32 %v1391, %v1602
      %v1681 = vmax.f32 %v1392, %v1578
      %v1682 = vmax.f32 %v1393, %v1554
      %v1683 = vmax.f32 %v1394, %v1626
      %v1684 = vmax.f32 %v1395, %v1603
      %v1685 = vmax.f32 %v1396, %v1579
      %v1686 = vmax.f32 %v1397, %v1555
      %v1687 = vmax.f32 %v1398, %v1627
      %v1688 = vmax.f32 %v1399, %v1604
      %v1689 = vmax.f32 %v1400, %v1580
      %v1690 = vmax.f32 %v1401, %v1556
      %v1691 = vmax.f32 %v1402, %v1628
      %v1692 = vmax.f32 %v1403, %v1605
      %v1693 = vmax.f32 %v1404, %v1581
      %v1694 = vmax.f32 %v1405, %v1557
      %v1695 = vmax.f32 %v1406, %v1629
      %v1696 = vmax.f32 %v1407, %v1606
      %v1697 = vmax.f32 %v1408, %v1582
      %v1698 = vmax.f32 %v1409, %v1558
      %v1699 = vmax.f32 %v1410, %v1630
      %v1700 = vmax.f32 %v1411, %v1607
      %v1701 = vmax.f32 %v1412, %v1583
      %v1702 = vmax.f32 %v1413, %v1559
      %v1703 = vmax.f32 %v1414, %v1631
      %v1704 = vmax.f32 %v1415, %v1608
      %v1705 = vmax.f32 %v1416, %v1584
      %v1706 = vmax.f32 %v1417, %v1560
      %v1707 = vmax.f32 %v1418, %v1632
      %v1708 = vmax.f32 %v1419, %v1609
      %v1709 = vmax.f32 %v1420, %v1585
      %v1710 = vmax.f32 %v1421, %v1561
      %v1711 = vmax.f32 %v1422, %v1633
      %v1712 = vmax.f32 %v1423, %v1610
      %v1713 = vmax.f32 %v1424, %v1586
      %v1714 = vmax.f32 %v1425, %v1562
      %v1715 = vmax.f32 %v1426, %v1634
      %v1716 = vmax.f32 %v1427, %v1611
      %v1717 = vmax.f32 %v1428, %v1587
      %v1718 = vmax.f32 %v1429, %v1563
      %v1719 = vmax.f32 %v1430, %v1635
      %v1720 = vmax.f32 %v1431, %v1612
      %v1721 = vmax.f32 %v1432, %v1588
      %v1722 = vmax.f32 %v1433, %v1564
      %v1723 = vmax.f32 %v1434, %v1636
      %v1724 = vmax.f32 %v1435, %v1613
      %v1725 = vmax.f32 %v1436, %v1589
      %v1726 = vmax.f32 %v1437, %v1565
      %v1727 = vmax.f32 %v1438, %v1637
      %v1728 = vmax.f32 %v1439, %v1614
      %v1729 = vmax.f32 %v1440, %v1590
      %v1730 = vmax.f32 %v1441, %v1566
      %v1731 = vmax.f32 %v1442, %v1638
      %v1732 = vmax.f32 %v1443, %v1615
      %v1733 = vmax.f32 %v1444, %v1591
      %v1734 = vmax.f32 %v1445, %v1567
      %v1735 = vmax.f32 %v1446, %v1639
      %v1736 = vrot.slane %v1060, 4
      %v1737 = vrot.slane %v1064, 4
      %v1738 = vrot.slane %v1068, 4
      %v1739 = vrot.slane %v1072, 4
      %v1740 = vrot.slane %v1076, 4
      %v1741 = vrot.slane %v1080, 4
      %v1742 = vrot.slane %v1084, 4
      %v1743 = vrot.slane %v1088, 4
      %v1744 = vrot.slane %v1092, 4
      %v1745 = vrot.slane %v1096, 4
      %v1746 = vrot.slane %v1100, 4
      %v1747 = vrot.slane %v1104, 4
      %v1748 = vrot.slane %v1108, 4
      %v1749 = vrot.slane %v1112, 4
      %v1750 = vrot.slane %v1116, 4
      %v1751 = vrot.slane %v1120, 4
      %v1752 = vrot.slane %v1124, 4
      %v1753 = vrot.slane %v1128, 4
      %v1754 = vrot.slane %v1132, 4
      %v1755 = vrot.slane %v1136, 4
      %v1756 = vrot.slane %v1140, 4
      %v1757 = vrot.slane %v1144, 4
      %v1758 = vrot.slane %v1148, 4
      %v1759 = vrot.slane %v1152, 4
      %v1760 = vrot.slane %v1061, 4
      %v1761 = vrot.slane %v1065, 4
      %v1762 = vrot.slane %v1069, 4
      %v1763 = vrot.slane %v1073, 4
      %v1764 = vrot.slane %v1077, 4
      %v1765 = vrot.slane %v1081, 4
      %v1766 = vrot.slane %v1085, 4
      %v1767 = vrot.slane %v1089, 4
      %v1768 = vrot.slane %v1093, 4
      %v1769 = vrot.slane %v1097, 4
      %v1770 = vrot.slane %v1101, 4
      %v1771 = vrot.slane %v1105, 4
      %v1772 = vrot.slane %v1109, 4
      %v1773 = vrot.slane %v1113, 4
      %v1774 = vrot.slane %v1117, 4
      %v1775 = vrot.slane %v1121, 4
      %v1776 = vrot.slane %v1125, 4
      %v1777 = vrot.slane %v1129, 4
      %v1778 = vrot.slane %v1133, 4
      %v1779 = vrot.slane %v1137, 4
      %v1780 = vrot.slane %v1141, 4
      %v1781 = vrot.slane %v1145, 4
      %v1782 = vrot.slane %v1149, 4
      %v1783 = vrot.slane %v1153, 4
      %v1784 = vrot.slane %v1062, 4
      %v1785 = vrot.slane %v1066, 4
      %v1786 = vrot.slane %v1070, 4
      %v1787 = vrot.slane %v1074, 4
      %v1788 = vrot.slane %v1078, 4
      %v1789 = vrot.slane %v1082, 4
      %v1790 = vrot.slane %v1086, 4
      %v1791 = vrot.slane %v1090, 4
      %v1792 = vrot.slane %v1094, 4
      %v1793 = vrot.slane %v1098, 4
      %v1794 = vrot.slane %v1102, 4
      %v1795 = vrot.slane %v1106, 4
      %v1796 = vrot.slane %v1110, 4
      %v1797 = vrot.slane %v1114, 4
      %v1798 = vrot.slane %v1118, 4
      %v1799 = vrot.slane %v1122, 4
      %v1800 = vrot.slane %v1126, 4
      %v1801 = vrot.slane %v1130, 4
      %v1802 = vrot.slane %v1134, 4
      %v1803 = vrot.slane %v1138, 4
      %v1804 = vrot.slane %v1142, 4
      %v1805 = vrot.slane %v1146, 4
      %v1806 = vrot.slane %v1150, 4
      %v1807 = vrot.slane %v1154, 4
      %v1808 = vrot.slane %v1063, 4
      %v1809 = vrot.slane %v1067, 4
      %v1810 = vrot.slane %v1071, 4
      %v1811 = vrot.slane %v1075, 4
      %v1812 = vrot.slane %v1079, 4
      %v1813 = vrot.slane %v1083, 4
      %v1814 = vrot.slane %v1087, 4
      %v1815 = vrot.slane %v1091, 4
      %v1816 = vrot.slane %v1095, 4
      %v1817 = vrot.slane %v1099, 4
      %v1818 = vrot.slane %v1103, 4
      %v1819 = vrot.slane %v1107, 4
      %v1820 = vrot.slane %v1111, 4
      %v1821 = vrot.slane %v1115, 4
      %v1822 = vrot.slane %v1119, 4
      %v1823 = vrot.slane %v1123, 4
      %v1824 = vrot.slane %v1127, 4
      %v1825 = vrot.slane %v1131, 4
      %v1826 = vrot.slane %v1135, 4
      %v1827 = vrot.slane %v1139, 4
      %v1828 = vrot.slane %v1143, 4
      %v1829 = vrot.slane %v1147, 4
      %v1830 = vrot.slane %v1151, 4
      %v1831 = vrot.slane %v1155, 4
      %vm1832 = vcmp.lt.s32.totalorder %v1253, 4
      %v1833 = vsel %vm1832, %v1784, %v1808
      %v1834 = vsel %vm1832, %v1785, %v1809
      %v1835 = vsel %vm1832, %v1786, %v1810
      %v1836 = vsel %vm1832, %v1787, %v1811
      %v1837 = vsel %vm1832, %v1788, %v1812
      %v1838 = vsel %vm1832, %v1789, %v1813
      %v1839 = vsel %vm1832, %v1790, %v1814
      %v1840 = vsel %vm1832, %v1791, %v1815
      %v1841 = vsel %vm1832, %v1792, %v1816
      %v1842 = vsel %vm1832, %v1793, %v1817
      %v1843 = vsel %vm1832, %v1794, %v1818
      %v1844 = vsel %vm1832, %v1795, %v1819
      %v1845 = vsel %vm1832, %v1796, %v1820
      %v1846 = vsel %vm1832, %v1797, %v1821
      %v1847 = vsel %vm1832, %v1798, %v1822
      %v1848 = vsel %vm1832, %v1799, %v1823
      %v1849 = vsel %vm1832, %v1800, %v1824
      %v1850 = vsel %vm1832, %v1801, %v1825
      %v1851 = vsel %vm1832, %v1802, %v1826
      %v1852 = vsel %vm1832, %v1803, %v1827
      %v1853 = vsel %vm1832, %v1804, %v1828
      %v1854 = vsel %vm1832, %v1805, %v1829
      %v1855 = vsel %vm1832, %v1806, %v1830
      %v1856 = vsel %vm1832, %v1807, %v1831
      %v1857 = vsel %vm1832, %v1760, %v1784
      %v1858 = vsel %vm1832, %v1761, %v1785
      %v1859 = vsel %vm1832, %v1762, %v1786
      %v1860 = vsel %vm1832, %v1763, %v1787
      %v1861 = vsel %vm1832, %v1764, %v1788
      %v1862 = vsel %vm1832, %v1765, %v1789
      %v1863 = vsel %vm1832, %v1766, %v1790
      %v1864 = vsel %vm1832, %v1767, %v1791
      %v1865 = vsel %vm1832, %v1768, %v1792
      %v1866 = vsel %vm1832, %v1769, %v1793
      %v1867 = vsel %vm1832, %v1770, %v1794
      %v1868 = vsel %vm1832, %v1771, %v1795
      %v1869 = vsel %vm1832, %v1772, %v1796
      %v1870 = vsel %vm1832, %v1773, %v1797
      %v1871 = vsel %vm1832, %v1774, %v1798
      %v1872 = vsel %vm1832, %v1775, %v1799
      %v1873 = vsel %vm1832, %v1776, %v1800
      %v1874 = vsel %vm1832, %v1777, %v1801
      %v1875 = vsel %vm1832, %v1778, %v1802
      %v1876 = vsel %vm1832, %v1779, %v1803
      %v1877 = vsel %vm1832, %v1780, %v1804
      %v1878 = vsel %vm1832, %v1781, %v1805
      %v1879 = vsel %vm1832, %v1782, %v1806
      %v1880 = vsel %vm1832, %v1783, %v1807
      %v1881 = vsel %vm1832, %v1736, %v1760
      %v1882 = vsel %vm1832, %v1737, %v1761
      %v1883 = vsel %vm1832, %v1738, %v1762
      %v1884 = vsel %vm1832, %v1739, %v1763
      %v1885 = vsel %vm1832, %v1740, %v1764
      %v1886 = vsel %vm1832, %v1741, %v1765
      %v1887 = vsel %vm1832, %v1742, %v1766
      %v1888 = vsel %vm1832, %v1743, %v1767
      %v1889 = vsel %vm1832, %v1744, %v1768
      %v1890 = vsel %vm1832, %v1745, %v1769
      %v1891 = vsel %vm1832, %v1746, %v1770
      %v1892 = vsel %vm1832, %v1747, %v1771
      %v1893 = vsel %vm1832, %v1748, %v1772
      %v1894 = vsel %vm1832, %v1749, %v1773
      %v1895 = vsel %vm1832, %v1750, %v1774
      %v1896 = vsel %vm1832, %v1751, %v1775
      %v1897 = vsel %vm1832, %v1752, %v1776
      %v1898 = vsel %vm1832, %v1753, %v1777
      %v1899 = vsel %vm1832, %v1754, %v1778
      %v1900 = vsel %vm1832, %v1755, %v1779
      %v1901 = vsel %vm1832, %v1756, %v1780
      %v1902 = vsel %vm1832, %v1757, %v1781
      %v1903 = vsel %vm1832, %v1758, %v1782
      %v1904 = vsel %vm1832, %v1759, %v1783
      %v1905 = vsel %vm1832, %v1808, %v1736
      %v1906 = vsel %vm1832, %v1809, %v1737
      %v1907 = vsel %vm1832, %v1810, %v1738
      %v1908 = vsel %vm1832, %v1811, %v1739
      %v1909 = vsel %vm1832, %v1812, %v1740
      %v1910 = vsel %vm1832, %v1813, %v1741
      %v1911 = vsel %vm1832, %v1814, %v1742
      %v1912 = vsel %vm1832, %v1815, %v1743
      %v1913 = vsel %vm1832, %v1816, %v1744
      %v1914 = vsel %vm1832, %v1817, %v1745
      %v1915 = vsel %vm1832, %v1818, %v1746
      %v1916 = vsel %vm1832, %v1819, %v1747
      %v1917 = vsel %vm1832, %v1820, %v1748
      %v1918 = vsel %vm1832, %v1821, %v1749
      %v1919 = vsel %vm1832, %v1822, %v1750
      %v1920 = vsel %vm1832, %v1823, %v1751
      %v1921 = vsel %vm1832, %v1824, %v1752
      %v1922 = vsel %vm1832, %v1825, %v1753
      %v1923 = vsel %vm1832, %v1826, %v1754
      %v1924 = vsel %vm1832, %v1827, %v1755
      %v1925 = vsel %vm1832, %v1828, %v1756
      %v1926 = vsel %vm1832, %v1829, %v1757
      %v1927 = vsel %vm1832, %v1830, %v1758
      %v1928 = vsel %vm1832, %v1831, %v1759
      %v1929 = vmax.f32 %v1640, %v1881
      %v1930 = vmax.f32 %v1641, %v1857
      %v1931 = vmax.f32 %v1642, %v1833
      %v1932 = vmax.f32 %v1643, %v1905
      %v1933 = vmax.f32 %v1644, %v1882
      %v1934 = vmax.f32 %v1645, %v1858
      %v1935 = vmax.f32 %v1646, %v1834
      %v1936 = vmax.f32 %v1647, %v1906
      %v1937 = vmax.f32 %v1648, %v1883
      %v1938 = vmax.f32 %v1649, %v1859
      %v1939 = vmax.f32 %v1650, %v1835
      %v1940 = vmax.f32 %v1651, %v1907
      %v1941 = vmax.f32 %v1652, %v1884
      %v1942 = vmax.f32 %v1653, %v1860
      %v1943 = vmax.f32 %v1654, %v1836
      %v1944 = vmax.f32 %v1655, %v1908
      %v1945 = vmax.f32 %v1656, %v1885
      %v1946 = vmax.f32 %v1657, %v1861
      %v1947 = vmax.f32 %v1658, %v1837
      %v1948 = vmax.f32 %v1659, %v1909
      %v1949 = vmax.f32 %v1660, %v1886
      %v1950 = vmax.f32 %v1661, %v1862
      %v1951 = vmax.f32 %v1662, %v1838
      %v1952 = vmax.f32 %v1663, %v1910
      %v1953 = vmax.f32 %v1664, %v1887
      %v1954 = vmax.f32 %v1665, %v1863
      %v1955 = vmax.f32 %v1666, %v1839
      %v1956 = vmax.f32 %v1667, %v1911
      %v1957 = vmax.f32 %v1668, %v1888
      %v1958 = vmax.f32 %v1669, %v1864
      %v1959 = vmax.f32 %v1670, %v1840
      %v1960 = vmax.f32 %v1671, %v1912
      %v1961 = vmax.f32 %v1672, %v1889
      %v1962 = vmax.f32 %v1673, %v1865
      %v1963 = vmax.f32 %v1674, %v1841
      %v1964 = vmax.f32 %v1675, %v1913
      %v1965 = vmax.f32 %v1676, %v1890
      %v1966 = vmax.f32 %v1677, %v1866
      %v1967 = vmax.f32 %v1678, %v1842
      %v1968 = vmax.f32 %v1679, %v1914
      %v1969 = vmax.f32 %v1680, %v1891
      %v1970 = vmax.f32 %v1681, %v1867
      %v1971 = vmax.f32 %v1682, %v1843
      %v1972 = vmax.f32 %v1683, %v1915
      %v1973 = vmax.f32 %v1684, %v1892
      %v1974 = vmax.f32 %v1685, %v1868
      %v1975 = vmax.f32 %v1686, %v1844
      %v1976 = vmax.f32 %v1687, %v1916
      %v1977 = vmax.f32 %v1688, %v1893
      %v1978 = vmax.f32 %v1689, %v1869
      %v1979 = vmax.f32 %v1690, %v1845
      %v1980 = vmax.f32 %v1691, %v1917
      %v1981 = vmax.f32 %v1692, %v1894
      %v1982 = vmax.f32 %v1693, %v1870
      %v1983 = vmax.f32 %v1694, %v1846
      %v1984 = vmax.f32 %v1695, %v1918
      %v1985 = vmax.f32 %v1696, %v1895
      %v1986 = vmax.f32 %v1697, %v1871
      %v1987 = vmax.f32 %v1698, %v1847
      %v1988 = vmax.f32 %v1699, %v1919
      %v1989 = vmax.f32 %v1700, %v1896
      %v1990 = vmax.f32 %v1701, %v1872
      %v1991 = vmax.f32 %v1702, %v1848
      %v1992 = vmax.f32 %v1703, %v1920
      %v1993 = vmax.f32 %v1704, %v1897
      %v1994 = vmax.f32 %v1705, %v1873
      %v1995 = vmax.f32 %v1706, %v1849
      %v1996 = vmax.f32 %v1707, %v1921
      %v1997 = vmax.f32 %v1708, %v1898
      %v1998 = vmax.f32 %v1709, %v1874
      %v1999 = vmax.f32 %v1710, %v1850
      %v2000 = vmax.f32 %v1711, %v1922
      %v2001 = vmax.f32 %v1712, %v1899
      %v2002 = vmax.f32 %v1713, %v1875
      %v2003 = vmax.f32 %v1714, %v1851
      %v2004 = vmax.f32 %v1715, %v1923
      %v2005 = vmax.f32 %v1716, %v1900
      %v2006 = vmax.f32 %v1717, %v1876
      %v2007 = vmax.f32 %v1718, %v1852
      %v2008 = vmax.f32 %v1719, %v1924
      %v2009 = vmax.f32 %v1720, %v1901
      %v2010 = vmax.f32 %v1721, %v1877
      %v2011 = vmax.f32 %v1722, %v1853
      %v2012 = vmax.f32 %v1723, %v1925
      %v2013 = vmax.f32 %v1724, %v1902
      %v2014 = vmax.f32 %v1725, %v1878
      %v2015 = vmax.f32 %v1726, %v1854
      %v2016 = vmax.f32 %v1727, %v1926
      %v2017 = vmax.f32 %v1728, %v1903
      %v2018 = vmax.f32 %v1729, %v1879
      %v2019 = vmax.f32 %v1730, %v1855
      %v2020 = vmax.f32 %v1731, %v1927
      %v2021 = vmax.f32 %v1732, %v1904
      %v2022 = vmax.f32 %v1733, %v1880
      %v2023 = vmax.f32 %v1734, %v1856
      %v2024 = vmax.f32 %v1735, %v1928
      %v2025 = vrot.slane %v1929, 6
      %v2026 = vrot.slane %v1933, 6
      %v2027 = vrot.slane %v1937, 6
      %v2028 = vrot.slane %v1941, 6
      %v2029 = vrot.slane %v1945, 6
      %v2030 = vrot.slane %v1949, 6
      %v2031 = vrot.slane %v1953, 6
      %v2032 = vrot.slane %v1957, 6
      %v2033 = vrot.slane %v1961, 6
      %v2034 = vrot.slane %v1965, 6
      %v2035 = vrot.slane %v1969, 6
      %v2036 = vrot.slane %v1973, 6
      %v2037 = vrot.slane %v1977, 6
      %v2038 = vrot.slane %v1981, 6
      %v2039 = vrot.slane %v1985, 6
      %v2040 = vrot.slane %v1989, 6
      %v2041 = vrot.slane %v1993, 6
      %v2042 = vrot.slane %v1997, 6
      %v2043 = vrot.slane %v2001, 6
      %v2044 = vrot.slane %v2005, 6
      %v2045 = vrot.slane %v2009, 6
      %v2046 = vrot.slane %v2013, 6
      %v2047 = vrot.slane %v2017, 6
      %v2048 = vrot.slane %v2021, 6
      %v2049 = vrot.slane %v1930, 6
      %v2050 = vrot.slane %v1934, 6
      %v2051 = vrot.slane %v1938, 6
      %v2052 = vrot.slane %v1942, 6
      %v2053 = vrot.slane %v1946, 6
      %v2054 = vrot.slane %v1950, 6
      %v2055 = vrot.slane %v1954, 6
      %v2056 = vrot.slane %v1958, 6
      %v2057 = vrot.slane %v1962, 6
      %v2058 = vrot.slane %v1966, 6
      %v2059 = vrot.slane %v1970, 6
      %v2060 = vrot.slane %v1974, 6
      %v2061 = vrot.slane %v1978, 6
      %v2062 = vrot.slane %v1982, 6
      %v2063 = vrot.slane %v1986, 6
      %v2064 = vrot.slane %v1990, 6
      %v2065 = vrot.slane %v1994, 6
      %v2066 = vrot.slane %v1998, 6
      %v2067 = vrot.slane %v2002, 6
      %v2068 = vrot.slane %v2006, 6
      %v2069 = vrot.slane %v2010, 6
      %v2070 = vrot.slane %v2014, 6
      %v2071 = vrot.slane %v2018, 6
      %v2072 = vrot.slane %v2022, 6
      %v2073 = vrot.slane %v1931, 6
      %v2074 = vrot.slane %v1935, 6
      %v2075 = vrot.slane %v1939, 6
      %v2076 = vrot.slane %v1943, 6
      %v2077 = vrot.slane %v1947, 6
      %v2078 = vrot.slane %v1951, 6
      %v2079 = vrot.slane %v1955, 6
      %v2080 = vrot.slane %v1959, 6
      %v2081 = vrot.slane %v1963, 6
      %v2082 = vrot.slane %v1967, 6
      %v2083 = vrot.slane %v1971, 6
      %v2084 = vrot.slane %v1975, 6
      %v2085 = vrot.slane %v1979, 6
      %v2086 = vrot.slane %v1983, 6
      %v2087 = vrot.slane %v1987, 6
      %v2088 = vrot.slane %v1991, 6
      %v2089 = vrot.slane %v1995, 6
      %v2090 = vrot.slane %v1999, 6
      %v2091 = vrot.slane %v2003, 6
      %v2092 = vrot.slane %v2007, 6
      %v2093 = vrot.slane %v2011, 6
      %v2094 = vrot.slane %v2015, 6
      %v2095 = vrot.slane %v2019, 6
      %v2096 = vrot.slane %v2023, 6
      %v2097 = vrot.slane %v1932, 6
      %v2098 = vrot.slane %v1936, 6
      %v2099 = vrot.slane %v1940, 6
      %v2100 = vrot.slane %v1944, 6
      %v2101 = vrot.slane %v1948, 6
      %v2102 = vrot.slane %v1952, 6
      %v2103 = vrot.slane %v1956, 6
      %v2104 = vrot.slane %v1960, 6
      %v2105 = vrot.slane %v1964, 6
      %v2106 = vrot.slane %v1968, 6
      %v2107 = vrot.slane %v1972, 6
      %v2108 = vrot.slane %v1976, 6
      %v2109 = vrot.slane %v1980, 6
      %v2110 = vrot.slane %v1984, 6
      %v2111 = vrot.slane %v1988, 6
      %v2112 = vrot.slane %v1992, 6
      %v2113 = vrot.slane %v1996, 6
      %v2114 = vrot.slane %v2000, 6
      %v2115 = vrot.slane %v2004, 6
      %v2116 = vrot.slane %v2008, 6
      %v2117 = vrot.slane %v2012, 6
      %v2118 = vrot.slane %v2016, 6
      %v2119 = vrot.slane %v2020, 6
      %v2120 = vrot.slane %v2024, 6
      %vm2121 = vcmp.lt.s32.totalorder %v1253, 2
      %v2122 = vsel %vm2121, %v2073, %v2097
      %v2123 = vsel %vm2121, %v2074, %v2098
      %v2124 = vsel %vm2121, %v2075, %v2099
      %v2125 = vsel %vm2121, %v2076, %v2100
      %v2126 = vsel %vm2121, %v2077, %v2101
      %v2127 = vsel %vm2121, %v2078, %v2102
      %v2128 = vsel %vm2121, %v2079, %v2103
      %v2129 = vsel %vm2121, %v2080, %v2104
      %v2130 = vsel %vm2121, %v2081, %v2105
      %v2131 = vsel %vm2121, %v2082, %v2106
      %v2132 = vsel %vm2121, %v2083, %v2107
      %v2133 = vsel %vm2121, %v2084, %v2108
      %v2134 = vsel %vm2121, %v2085, %v2109
      %v2135 = vsel %vm2121, %v2086, %v2110
      %v2136 = vsel %vm2121, %v2087, %v2111
      %v2137 = vsel %vm2121, %v2088, %v2112
      %v2138 = vsel %vm2121, %v2089, %v2113
      %v2139 = vsel %vm2121, %v2090, %v2114
      %v2140 = vsel %vm2121, %v2091, %v2115
      %v2141 = vsel %vm2121, %v2092, %v2116
      %v2142 = vsel %vm2121, %v2093, %v2117
      %v2143 = vsel %vm2121, %v2094, %v2118
      %v2144 = vsel %vm2121, %v2095, %v2119
      %v2145 = vsel %vm2121, %v2096, %v2120
      %v2146 = vsel %vm2121, %v2049, %v2073
      %v2147 = vsel %vm2121, %v2050, %v2074
      %v2148 = vsel %vm2121, %v2051, %v2075
      %v2149 = vsel %vm2121, %v2052, %v2076
      %v2150 = vsel %vm2121, %v2053, %v2077
      %v2151 = vsel %vm2121, %v2054, %v2078
      %v2152 = vsel %vm2121, %v2055, %v2079
      %v2153 = vsel %vm2121, %v2056, %v2080
      %v2154 = vsel %vm2121, %v2057, %v2081
      %v2155 = vsel %vm2121, %v2058, %v2082
      %v2156 = vsel %vm2121, %v2059, %v2083
      %v2157 = vsel %vm2121, %v2060, %v2084
      %v2158 = vsel %vm2121, %v2061, %v2085
      %v2159 = vsel %vm2121, %v2062, %v2086
      %v2160 = vsel %vm2121, %v2063, %v2087
      %v2161 = vsel %vm2121, %v2064, %v2088
      %v2162 = vsel %vm2121, %v2065, %v2089
      %v2163 = vsel %vm2121, %v2066, %v2090
      %v2164 = vsel %vm2121, %v2067, %v2091
      %v2165 = vsel %vm2121, %v2068, %v2092
      %v2166 = vsel %vm2121, %v2069, %v2093
      %v2167 = vsel %vm2121, %v2070, %v2094
      %v2168 = vsel %vm2121, %v2071, %v2095
      %v2169 = vsel %vm2121, %v2072, %v2096
      %v2170 = vsel %vm2121, %v2025, %v2049
      %v2171 = vsel %vm2121, %v2026, %v2050
      %v2172 = vsel %vm2121, %v2027, %v2051
      %v2173 = vsel %vm2121, %v2028, %v2052
      %v2174 = vsel %vm2121, %v2029, %v2053
      %v2175 = vsel %vm2121, %v2030, %v2054
      %v2176 = vsel %vm2121, %v2031, %v2055
      %v2177 = vsel %vm2121, %v2032, %v2056
      %v2178 = vsel %vm2121, %v2033, %v2057
      %v2179 = vsel %vm2121, %v2034, %v2058
      %v2180 = vsel %vm2121, %v2035, %v2059
      %v2181 = vsel %vm2121, %v2036, %v2060
      %v2182 = vsel %vm2121, %v2037, %v2061
      %v2183 = vsel %vm2121, %v2038, %v2062
      %v2184 = vsel %vm2121, %v2039, %v2063
      %v2185 = vsel %vm2121, %v2040, %v2064
      %v2186 = vsel %vm2121, %v2041, %v2065
      %v2187 = vsel %vm2121, %v2042, %v2066
      %v2188 = vsel %vm2121, %v2043, %v2067
      %v2189 = vsel %vm2121, %v2044, %v2068
      %v2190 = vsel %vm2121, %v2045, %v2069
      %v2191 = vsel %vm2121, %v2046, %v2070
      %v2192 = vsel %vm2121, %v2047, %v2071
      %v2193 = vsel %vm2121, %v2048, %v2072
      %v2194 = vsel %vm2121, %v2097, %v2025
      %v2195 = vsel %vm2121, %v2098, %v2026
      %v2196 = vsel %vm2121, %v2099, %v2027
      %v2197 = vsel %vm2121, %v2100, %v2028
      %v2198 = vsel %vm2121, %v2101, %v2029
      %v2199 = vsel %vm2121, %v2102, %v2030
      %v2200 = vsel %vm2121, %v2103, %v2031
      %v2201 = vsel %vm2121, %v2104, %v2032
      %v2202 = vsel %vm2121, %v2105, %v2033
      %v2203 = vsel %vm2121, %v2106, %v2034
      %v2204 = vsel %vm2121, %v2107, %v2035
      %v2205 = vsel %vm2121, %v2108, %v2036
      %v2206 = vsel %vm2121, %v2109, %v2037
      %v2207 = vsel %vm2121, %v2110, %v2038
      %v2208 = vsel %vm2121, %v2111, %v2039
      %v2209 = vsel %vm2121, %v2112, %v2040
      %v2210 = vsel %vm2121, %v2113, %v2041
      %v2211 = vsel %vm2121, %v2114, %v2042
      %v2212 = vsel %vm2121, %v2115, %v2043
      %v2213 = vsel %vm2121, %v2116, %v2044
      %v2214 = vsel %vm2121, %v2117, %v2045
      %v2215 = vsel %vm2121, %v2118, %v2046
      %v2216 = vsel %vm2121, %v2119, %v2047
      %v2217 = vsel %vm2121, %v2120, %v2048
      %s2218 = scalar_lea.vmem %s3, 4
      %v2219 = vld [vmem:[%s2218] sm:$0xf]
      %v2221 = vsel %vm633, %v2174, 0
      %v2224 = vsel %vm633, %v2150, 0
      %v2227 = vsel %vm633, %v2175, 0
      %v2230 = vsel %vm633, %v2151, 0
      %v2233 = vsel %vm633, %v2176, 0
      %v2236 = vsel %vm633, %v2152, 0
      %v2239 = vsel %vm633, %v2177, 0
      %v2242 = vsel %vm633, %v2153, 0
      %v2245 = vsel %vm633, %v2178, 0
      %v2248 = vsel %vm633, %v2154, 0
      %v2251 = vsel %vm633, %v2179, 0
      %v2254 = vsel %vm633, %v2155, 0
      %v2257 = vsel %vm633, %v2180, 0
      %v2260 = vsel %vm633, %v2156, 0
      %v2263 = vsel %vm633, %v2181, 0
      %v2266 = vsel %vm633, %v2157, 0
      %v2269 = vsel %vm633, %v2182, 0
      %v2272 = vsel %vm633, %v2158, 0
      %v2275 = vsel %vm633, %v2183, 0
      %v2278 = vsel %vm633, %v2159, 0
      %v2281 = vsel %vm633, %v2184, 0
      %v2284 = vsel %vm633, %v2160, 0
      %v2287 = vsel %vm633, %v2185, 0
      %v2290 = vsel %vm633, %v2161, 0
      %v2293 = vsel %vm633, %v2186, 0
      %v2296 = vsel %vm633, %v2162, 0
      %v2299 = vsel %vm633, %v2187, 0
      %v2302 = vsel %vm633, %v2163, 0
      %v2305 = vsel %vm633, %v2188, 0
      %v2308 = vsel %vm633, %v2164, 0
      %v2311 = vsel %vm633, %v2189, 0
      %v2314 = vsel %vm633, %v2165, 0
      %vm2316 = vcmask 1043456
      %v2318 = vsel %vm2316, %v2219, 0
      %2320 = vmatpush.msra.mxu0 0.0
      %2321 = vmatpush.msra.mxu0 0.0
      %2322 = vmatpush.msra.mxu0 0.0
      %2323 = vmatpush.msra.mxu0 0.0
      %2324 = vmatpush.msra.mxu0 0.0
      %2325 = vmatpush.msra.mxu0 0.0
      %2326 = vmatpush.msra.mxu0 0.0
      %2327 = vmatpush.msra.mxu0 0.0
      %2328 = vmatpush.msra.mxu0 0.0
      %2329 = vmatpush.msra.mxu0 0.0
      %2330 = vmatpush.msra.mxu0 0.0
      %2331 = vmatpush.msra.mxu0 0.0
      %2332 = vmatpush.msra.mxu0 0.0
      %2333 = vmatpush.msra.mxu0 0.0
      %2334 = vmatpush.msra.mxu0 0.0
      %2335 = vmatpush.msra.mxu0 %v2318
      %2336 = vmatmul.f32.gmra.mxu0 %v2221
      %v2337 = vpop.f32.mrf.mxu0
      %v2338 = vadd.f32 0.0, %v2337
      %2339 = vmatmul.f32.gmra.mxu0 %v2224
      %v2340 = vpop.f32.mrf.mxu0
      %v2341 = vadd.f32 0.0, %v2340
      %2342 = vmatmul.f32.gmra.mxu0 %v2227
      %v2343 = vpop.f32.mrf.mxu0
      %v2344 = vadd.f32 0.0, %v2343
      %2345 = vmatmul.f32.gmra.mxu0 %v2230
      %v2346 = vpop.f32.mrf.mxu0
      %v2347 = vadd.f32 0.0, %v2346
      %2348 = vmatmul.f32.gmra.mxu0 %v2233
      %v2349 = vpop.f32.mrf.mxu0
      %v2350 = vadd.f32 0.0, %v2349
      %2351 = vmatmul.f32.gmra.mxu0 %v2236
      %v2352 = vpop.f32.mrf.mxu0
      %v2353 = vadd.f32 0.0, %v2352
      %2354 = vmatmul.f32.gmra.mxu0 %v2239
      %v2355 = vpop.f32.mrf.mxu0
      %v2356 = vadd.f32 0.0, %v2355
      %2357 = vmatmul.f32.gmra.mxu0 %v2242
      %v2358 = vpop.f32.mrf.mxu0
      %v2359 = vadd.f32 0.0, %v2358
      %2360 = vmatmul.f32.gmra.mxu0 %v2245
      %v2361 = vpop.f32.mrf.mxu0
      %v2362 = vadd.f32 0.0, %v2361
      %2363 = vmatmul.f32.gmra.mxu0 %v2248
      %v2364 = vpop.f32.mrf.mxu0
      %v2365 = vadd.f32 0.0, %v2364
      %2366 = vmatmul.f32.gmra.mxu0 %v2251
      %v2367 = vpop.f32.mrf.mxu0
      %v2368 = vadd.f32 0.0, %v2367
      %2369 = vmatmul.f32.gmra.mxu0 %v2254
      %v2370 = vpop.f32.mrf.mxu0
      %v2371 = vadd.f32 0.0, %v2370
      %2372 = vmatmul.f32.gmra.mxu0 %v2257
      %v2373 = vpop.f32.mrf.mxu0
      %v2374 = vadd.f32 0.0, %v2373
      %2375 = vmatmul.f32.gmra.mxu0 %v2260
      %v2376 = vpop.f32.mrf.mxu0
      %v2377 = vadd.f32 0.0, %v2376
      %2378 = vmatmul.f32.gmra.mxu0 %v2263
      %v2379 = vpop.f32.mrf.mxu0
      %v2380 = vadd.f32 0.0, %v2379
      %2381 = vmatmul.f32.gmra.mxu0 %v2266
      %v2382 = vpop.f32.mrf.mxu0
      %v2383 = vadd.f32 0.0, %v2382
      %2384 = vmatmul.f32.gmra.mxu0 %v2269
      %v2385 = vpop.f32.mrf.mxu0
      %v2386 = vadd.f32 0.0, %v2385
      %2387 = vmatmul.f32.gmra.mxu0 %v2272
      %v2388 = vpop.f32.mrf.mxu0
      %v2389 = vadd.f32 0.0, %v2388
      %2390 = vmatmul.f32.gmra.mxu0 %v2275
      %v2391 = vpop.f32.mrf.mxu0
      %v2392 = vadd.f32 0.0, %v2391
      %2393 = vmatmul.f32.gmra.mxu0 %v2278
      %v2394 = vpop.f32.mrf.mxu0
      %v2395 = vadd.f32 0.0, %v2394
      %2396 = vmatmul.f32.gmra.mxu0 %v2281
      %v2397 = vpop.f32.mrf.mxu0
      %v2398 = vadd.f32 0.0, %v2397
      %2399 = vmatmul.f32.gmra.mxu0 %v2284
      %v2400 = vpop.f32.mrf.mxu0
      %v2401 = vadd.f32 0.0, %v2400
      %2402 = vmatmul.f32.gmra.mxu0 %v2287
      %v2403 = vpop.f32.mrf.mxu0
      %v2404 = vadd.f32 0.0, %v2403
      %2405 = vmatmul.f32.gmra.mxu0 %v2290
      %v2406 = vpop.f32.mrf.mxu0
      %v2407 = vadd.f32 0.0, %v2406
      %2408 = vmatmul.f32.gmra.mxu0 %v2293
      %v2409 = vpop.f32.mrf.mxu0
      %v2410 = vadd.f32 0.0, %v2409
      %2411 = vmatmul.f32.gmra.mxu0 %v2296
      %v2412 = vpop.f32.mrf.mxu0
      %v2413 = vadd.f32 0.0, %v2412
      %2414 = vmatmul.f32.gmra.mxu0 %v2299
      %v2415 = vpop.f32.mrf.mxu0
      %v2416 = vadd.f32 0.0, %v2415
      %2417 = vmatmul.f32.gmra.mxu0 %v2302
      %v2418 = vpop.f32.mrf.mxu0
      %v2419 = vadd.f32 0.0, %v2418
      %2420 = vmatmul.f32.gmra.mxu0 %v2305
      %v2421 = vpop.f32.mrf.mxu0
      %v2422 = vadd.f32 0.0, %v2421
      %2423 = vmatmul.f32.gmra.mxu0 %v2308
      %v2424 = vpop.f32.mrf.mxu0
      %v2425 = vadd.f32 0.0, %v2424
      %2426 = vmatmul.f32.gmra.mxu0 %v2311
      %v2427 = vpop.f32.mrf.mxu0
      %v2428 = vadd.f32 0.0, %v2427
      %2429 = vmatmul.f32.gmra.mxu0 %v2314
      %v2430 = vpop.f32.mrf.mxu0
      %v2431 = vadd.f32 0.0, %v2430
      %2432 = vdwg.mxu0
      %v2434 = vsel %vm633, %v600, 0
      %v2437 = vsel %vm633, %v601, 0
      %v2440 = vsel %vm633, %v602, 0
      %v2443 = vsel %vm633, %v603, 0
      %v2446 = vsel %vm633, %v604, 0
      %v2449 = vsel %vm633, %v605, 0
      %v2452 = vsel %vm633, %v606, 0
      %v2455 = vsel %vm633, %v607, 0
      %v2458 = vsel %vm633, %v608, 0
      %v2461 = vsel %vm633, %v609, 0
      %v2464 = vsel %vm633, %v610, 0
      %v2467 = vsel %vm633, %v611, 0
      %v2470 = vsel %vm633, %v612, 0
      %v2473 = vsel %vm633, %v613, 0
      %v2476 = vsel %vm633, %v614, 0
      %v2479 = vsel %vm633, %v615, 0
      %v2482 = vsel %vm633, %v616, 0
      %v2485 = vsel %vm633, %v617, 0
      %v2488 = vsel %vm633, %v618, 0
      %v2491 = vsel %vm633, %v619, 0
      %v2494 = vsel %vm633, %v620, 0
      %v2497 = vsel %vm633, %v621, 0
      %v2500 = vsel %vm633, %v622, 0
      %v2503 = vsel %vm633, %v623, 0
      %v2506 = vsel %vm633, %v624, 0
      %v2509 = vsel %vm633, %v625, 0
      %v2512 = vsel %vm633, %v626, 0
      %v2515 = vsel %vm633, %v627, 0
      %v2518 = vsel %vm633, %v628, 0
      %v2521 = vsel %vm633, %v629, 0
      %v2524 = vsel %vm633, %v630, 0
      %v2527 = vsel %vm633, %v631, 0
      %v2530 = vsel %vm2316, %v632, 0
      %2532 = vmatpush.msra.mxu0 0.0
      %2533 = vmatpush.msra.mxu0 0.0
      %2534 = vmatpush.msra.mxu0 0.0
      %2535 = vmatpush.msra.mxu0 0.0
      %2536 = vmatpush.msra.mxu0 0.0
      %2537 = vmatpush.msra.mxu0 0.0
      %2538 = vmatpush.msra.mxu0 0.0
      %2539 = vmatpush.msra.mxu0 0.0
      %2540 = vmatpush.msra.mxu0 0.0
      %2541 = vmatpush.msra.mxu0 0.0
      %2542 = vmatpush.msra.mxu0 0.0
      %2543 = vmatpush.msra.mxu0 0.0
      %2544 = vmatpush.msra.mxu0 0.0
      %2545 = vmatpush.msra.mxu0 0.0
      %2546 = vmatpush.msra.mxu0 0.0
      %2547 = vmatpush.msra.mxu0 %v2530
      %2548 = vmatmul.f32.gmra.mxu0 %v2434
      %v2549 = vpop.f32.mrf.mxu0
      %v2550 = vadd.f32 %v2338, %v2549
      %2551 = vmatmul.f32.gmra.mxu0 %v2437
      %v2552 = vpop.f32.mrf.mxu0
      %v2553 = vadd.f32 %v2341, %v2552
      %2554 = vmatmul.f32.gmra.mxu0 %v2440
      %v2555 = vpop.f32.mrf.mxu0
      %v2556 = vadd.f32 %v2344, %v2555
      %2557 = vmatmul.f32.gmra.mxu0 %v2443
      %v2558 = vpop.f32.mrf.mxu0
      %v2559 = vadd.f32 %v2347, %v2558
      %2560 = vmatmul.f32.gmra.mxu0 %v2446
      %v2561 = vpop.f32.mrf.mxu0
      %v2562 = vadd.f32 %v2350, %v2561
      %2563 = vmatmul.f32.gmra.mxu0 %v2449
      %v2564 = vpop.f32.mrf.mxu0
      %v2565 = vadd.f32 %v2353, %v2564
      %2566 = vmatmul.f32.gmra.mxu0 %v2452
      %v2567 = vpop.f32.mrf.mxu0
      %v2568 = vadd.f32 %v2356, %v2567
      %2569 = vmatmul.f32.gmra.mxu0 %v2455
      %v2570 = vpop.f32.mrf.mxu0
      %v2571 = vadd.f32 %v2359, %v2570
      %2572 = vmatmul.f32.gmra.mxu0 %v2458
      %v2573 = vpop.f32.mrf.mxu0
      %v2574 = vadd.f32 %v2362, %v2573
      %2575 = vmatmul.f32.gmra.mxu0 %v2461
      %v2576 = vpop.f32.mrf.mxu0
      %v2577 = vadd.f32 %v2365, %v2576
      %2578 = vmatmul.f32.gmra.mxu0 %v2464
      %v2579 = vpop.f32.mrf.mxu0
      %v2580 = vadd.f32 %v2368, %v2579
      %2581 = vmatmul.f32.gmra.mxu0 %v2467
      %v2582 = vpop.f32.mrf.mxu0
      %v2583 = vadd.f32 %v2371, %v2582
      %2584 = vmatmul.f32.gmra.mxu0 %v2470
      %v2585 = vpop.f32.mrf.mxu0
      %v2586 = vadd.f32 %v2374, %v2585
      %2587 = vmatmul.f32.gmra.mxu0 %v2473
      %v2588 = vpop.f32.mrf.mxu0
      %v2589 = vadd.f32 %v2377, %v2588
      %2590 = vmatmul.f32.gmra.mxu0 %v2476
      %v2591 = vpop.f32.mrf.mxu0
      %v2592 = vadd.f32 %v2380, %v2591
      %2593 = vmatmul.f32.gmra.mxu0 %v2479
      %v2594 = vpop.f32.mrf.mxu0
      %v2595 = vadd.f32 %v2383, %v2594
      %2596 = vmatmul.f32.gmra.mxu0 %v2482
      %v2597 = vpop.f32.mrf.mxu0
      %v2598 = vadd.f32 %v2386, %v2597
      %2599 = vmatmul.f32.gmra.mxu0 %v2485
      %v2600 = vpop.f32.mrf.mxu0
      %v2601 = vadd.f32 %v2389, %v2600
      %2602 = vmatmul.f32.gmra.mxu0 %v2488
      %v2603 = vpop.f32.mrf.mxu0
      %v2604 = vadd.f32 %v2392, %v2603
      %2605 = vmatmul.f32.gmra.mxu0 %v2491
      %v2606 = vpop.f32.mrf.mxu0
      %v2607 = vadd.f32 %v2395, %v2606
      %2608 = vmatmul.f32.gmra.mxu0 %v2494
      %v2609 = vpop.f32.mrf.mxu0
      %v2610 = vadd.f32 %v2398, %v2609
      %2611 = vmatmul.f32.gmra.mxu0 %v2497
      %v2612 = vpop.f32.mrf.mxu0
      %v2613 = vadd.f32 %v2401, %v2612
      %2614 = vmatmul.f32.gmra.mxu0 %v2500
      %v2615 = vpop.f32.mrf.mxu0
      %v2616 = vadd.f32 %v2404, %v2615
      %2617 = vmatmul.f32.gmra.mxu0 %v2503
      %v2618 = vpop.f32.mrf.mxu0
      %v2619 = vadd.f32 %v2407, %v2618
      %2620 = vmatmul.f32.gmra.mxu0 %v2506
      %v2621 = vpop.f32.mrf.mxu0
      %v2622 = vadd.f32 %v2410, %v2621
      %2623 = vmatmul.f32.gmra.mxu0 %v2509
      %v2624 = vpop.f32.mrf.mxu0
      %v2625 = vadd.f32 %v2413, %v2624
      %2626 = vmatmul.f32.gmra.mxu0 %v2512
      %v2627 = vpop.f32.mrf.mxu0
      %v2628 = vadd.f32 %v2416, %v2627
      %2629 = vmatmul.f32.gmra.mxu0 %v2515
      %v2630 = vpop.f32.mrf.mxu0
      %v2631 = vadd.f32 %v2419, %v2630
      %2632 = vmatmul.f32.gmra.mxu0 %v2518
      %v2633 = vpop.f32.mrf.mxu0
      %v2634 = vadd.f32 %v2422, %v2633
      %2635 = vmatmul.f32.gmra.mxu0 %v2521
      %v2636 = vpop.f32.mrf.mxu0
      %v2637 = vadd.f32 %v2425, %v2636
      %2638 = vmatmul.f32.gmra.mxu0 %v2524
      %v2639 = vpop.f32.mrf.mxu0
      %v2640 = vadd.f32 %v2428, %v2639
      %2641 = vmatmul.f32.gmra.mxu0 %v2527
      %v2642 = vpop.f32.mrf.mxu0
      %v2643 = vadd.f32 %v2431, %v2642
      %2644 = vdwg.mxu0
      %v2645 = vmax.f32 %v2194, %v2195
      %v2646 = vmax.f32 %v2170, %v2171
      %v2647 = vmax.f32 %v2146, %v2147
      %v2648 = vmax.f32 %v2122, %v2123
      %v2649 = vmax.f32 %v2195, %v2196
      %v2650 = vmax.f32 %v2171, %v2172
      %v2651 = vmax.f32 %v2147, %v2148
      %v2652 = vmax.f32 %v2123, %v2124
      %v2653 = vmax.f32 %v2196, %v2197
      %v2654 = vmax.f32 %v2172, %v2173
      %v2655 = vmax.f32 %v2148, %v2149
      %v2656 = vmax.f32 %v2124, %v2125
      %v2657 = vmax.f32 %v2197, %v2198
      %v2658 = vmax.f32 %v2173, %v2174
      %v2659 = vmax.f32 %v2149, %v2150
      %v2660 = vmax.f32 %v2125, %v2126
      %v2661 = vmax.f32 %v2198, %v2199
      %v2662 = vmax.f32 %v2174, %v2175
      %v2663 = vmax.f32 %v2150, %v2151
      %v2664 = vmax.f32 %v2126, %v2127
      %v2665 = vmax.f32 %v2199, %v2200
      %v2666 = vmax.f32 %v2175, %v2176
      %v2667 = vmax.f32 %v2151, %v2152
      %v2668 = vmax.f32 %v2127, %v2128
      %v2669 = vmax.f32 %v2200, %v2201
      %v2670 = vmax.f32 %v2176, %v2177
      %v2671 = vmax.f32 %v2152, %v2153
      %v2672 = vmax.f32 %v2128, %v2129
      %v2673 = vmax.f32 %v2201, %v2202
      %v2674 = vmax.f32 %v2177, %v2178
      %v2675 = vmax.f32 %v2153, %v2154
      %v2676 = vmax.f32 %v2129, %v2130
      %v2677 = vmax.f32 %v2202, %v2203
      %v2678 = vmax.f32 %v2178, %v2179
      %v2679 = vmax.f32 %v2154, %v2155
      %v2680 = vmax.f32 %v2130, %v2131
      %v2681 = vmax.f32 %v2203, %v2204
      %v2682 = vmax.f32 %v2179, %v2180
      %v2683 = vmax.f32 %v2155, %v2156
      %v2684 = vmax.f32 %v2131, %v2132
      %v2685 = vmax.f32 %v2204, %v2205
      %v2686 = vmax.f32 %v2180, %v2181
      %v2687 = vmax.f32 %v2156, %v2157
      %v2688 = vmax.f32 %v2132, %v2133
      %v2689 = vmax.f32 %v2205, %v2206
      %v2690 = vmax.f32 %v2181, %v2182
      %v2691 = vmax.f32 %v2157, %v2158
      %v2692 = vmax.f32 %v2133, %v2134
      %v2693 = vmax.f32 %v2206, %v2207
      %v2694 = vmax.f32 %v2182, %v2183
      %v2695 = vmax.f32 %v2158, %v2159
      %v2696 = vmax.f32 %v2134, %v2135
      %v2697 = vmax.f32 %v2207, %v2208
      %v2698 = vmax.f32 %v2183, %v2184
      %v2699 = vmax.f32 %v2159, %v2160
      %v2700 = vmax.f32 %v2135, %v2136
      %v2701 = vmax.f32 %v2208, %v2209
      %v2702 = vmax.f32 %v2184, %v2185
      %v2703 = vmax.f32 %v2160, %v2161
      %v2704 = vmax.f32 %v2136, %v2137
      %v2705 = vmax.f32 %v2209, %v2210
      %v2706 = vmax.f32 %v2185, %v2186
      %v2707 = vmax.f32 %v2161, %v2162
      %v2708 = vmax.f32 %v2137, %v2138
      %v2709 = vmax.f32 %v2210, %v2211
      %v2710 = vmax.f32 %v2186, %v2187
      %v2711 = vmax.f32 %v2162, %v2163
      %v2712 = vmax.f32 %v2138, %v2139
      %v2713 = vmax.f32 %v2211, %v2212
      %v2714 = vmax.f32 %v2187, %v2188
      %v2715 = vmax.f32 %v2163, %v2164
      %v2716 = vmax.f32 %v2139, %v2140
      %v2717 = vmax.f32 %v2212, %v2213
      %v2718 = vmax.f32 %v2188, %v2189
      %v2719 = vmax.f32 %v2164, %v2165
      %v2720 = vmax.f32 %v2140, %v2141
      %v2721 = vmax.f32 %v2213, %v2214
      %v2722 = vmax.f32 %v2189, %v2190
      %v2723 = vmax.f32 %v2165, %v2166
      %v2724 = vmax.f32 %v2141, %v2142
      %v2725 = vmax.f32 %v2214, %v2215
      %v2726 = vmax.f32 %v2190, %v2191
      %v2727 = vmax.f32 %v2166, %v2167
      %v2728 = vmax.f32 %v2142, %v2143
      %v2729 = vmax.f32 %v2215, %v2216
      %v2730 = vmax.f32 %v2191, %v2192
      %v2731 = vmax.f32 %v2167, %v2168
      %v2732 = vmax.f32 %v2143, %v2144
      %v2733 = vmax.f32 %v2645, %v2653
      %v2734 = vmax.f32 %v2646, %v2654
      %v2735 = vmax.f32 %v2647, %v2655
      %v2736 = vmax.f32 %v2648, %v2656
      %v2737 = vmax.f32 %v2649, %v2657
      %v2738 = vmax.f32 %v2650, %v2658
      %v2739 = vmax.f32 %v2651, %v2659
      %v2740 = vmax.f32 %v2652, %v2660
      %v2741 = vmax.f32 %v2653, %v2661
      %v2742 = vmax.f32 %v2654, %v2662
      %v2743 = vmax.f32 %v2655, %v2663
      %v2744 = vmax.f32 %v2656, %v2664
      %v2745 = vmax.f32 %v2657, %v2665
      %v2746 = vmax.f32 %v2658, %v2666
      %v2747 = vmax.f32 %v2659, %v2667
      %v2748 = vmax.f32 %v2660, %v2668
      %v2749 = vmax.f32 %v2661, %v2669
      %v2750 = vmax.f32 %v2662, %v2670
      %v2751 = vmax.f32 %v2663, %v2671
      %v2752 = vmax.f32 %v2664, %v2672
      %v2753 = vmax.f32 %v2665, %v2673
      %v2754 = vmax.f32 %v2666, %v2674
      %v2755 = vmax.f32 %v2667, %v2675
      %v2756 = vmax.f32 %v2668, %v2676
      %v2757 = vmax.f32 %v2669, %v2677
      %v2758 = vmax.f32 %v2670, %v2678
      %v2759 = vmax.f32 %v2671, %v2679
      %v2760 = vmax.f32 %v2672, %v2680
      %v2761 = vmax.f32 %v2673, %v2681
      %v2762 = vmax.f32 %v2674, %v2682
      %v2763 = vmax.f32 %v2675, %v2683
      %v2764 = vmax.f32 %v2676, %v2684
      %v2765 = vmax.f32 %v2677, %v2685
      %v2766 = vmax.f32 %v2678, %v2686
      %v2767 = vmax.f32 %v2679, %v2687
      %v2768 = vmax.f32 %v2680, %v2688
      %v2769 = vmax.f32 %v2681, %v2689
      %v2770 = vmax.f32 %v2682, %v2690
      %v2771 = vmax.f32 %v2683, %v2691
      %v2772 = vmax.f32 %v2684, %v2692
      %v2773 = vmax.f32 %v2685, %v2693
      %v2774 = vmax.f32 %v2686, %v2694
      %v2775 = vmax.f32 %v2687, %v2695
      %v2776 = vmax.f32 %v2688, %v2696
      %v2777 = vmax.f32 %v2689, %v2697
      %v2778 = vmax.f32 %v2690, %v2698
      %v2779 = vmax.f32 %v2691, %v2699
      %v2780 = vmax.f32 %v2692, %v2700
      %v2781 = vmax.f32 %v2693, %v2701
      %v2782 = vmax.f32 %v2694, %v2702
      %v2783 = vmax.f32 %v2695, %v2703
      %v2784 = vmax.f32 %v2696, %v2704
      %v2785 = vmax.f32 %v2697, %v2705
      %v2786 = vmax.f32 %v2698, %v2706
      %v2787 = vmax.f32 %v2699, %v2707
      %v2788 = vmax.f32 %v2700, %v2708
      %v2789 = vmax.f32 %v2701, %v2709
      %v2790 = vmax.f32 %v2702, %v2710
      %v2791 = vmax.f32 %v2703, %v2711
      %v2792 = vmax.f32 %v2704, %v2712
      %v2793 = vmax.f32 %v2705, %v2713
      %v2794 = vmax.f32 %v2706, %v2714
      %v2795 = vmax.f32 %v2707, %v2715
      %v2796 = vmax.f32 %v2708, %v2716
      %v2797 = vmax.f32 %v2709, %v2717
      %v2798 = vmax.f32 %v2710, %v2718
      %v2799 = vmax.f32 %v2711, %v2719
      %v2800 = vmax.f32 %v2712, %v2720
      %v2801 = vmax.f32 %v2713, %v2721
      %v2802 = vmax.f32 %v2714, %v2722
      %v2803 = vmax.f32 %v2715, %v2723
      %v2804 = vmax.f32 %v2716, %v2724
      %v2805 = vmax.f32 %v2717, %v2725
      %v2806 = vmax.f32 %v2718, %v2726
      %v2807 = vmax.f32 %v2719, %v2727
      %v2808 = vmax.f32 %v2720, %v2728
      %v2809 = vmax.f32 %v2721, %v2729
      %v2810 = vmax.f32 %v2722, %v2730
      %v2811 = vmax.f32 %v2723, %v2731
      %v2812 = vmax.f32 %v2724, %v2732
      %v2813 = vmax.f32 %v2733, %v2198
      %v2814 = vmax.f32 %v2734, %v2174
      %v2815 = vmax.f32 %v2735, %v2150
      %v2816 = vmax.f32 %v2736, %v2126
      %v2817 = vmax.f32 %v2737, %v2199
      %v2818 = vmax.f32 %v2738, %v2175
      %v2819 = vmax.f32 %v2739, %v2151
      %v2820 = vmax.f32 %v2740, %v2127
      %v2821 = vmax.f32 %v2741, %v2200
      %v2822 = vmax.f32 %v2742, %v2176
      %v2823 = vmax.f32 %v2743, %v2152
      %v2824 = vmax.f32 %v2744, %v2128
      %v2825 = vmax.f32 %v2745, %v2201
      %v2826 = vmax.f32 %v2746, %v2177
      %v2827 = vmax.f32 %v2747, %v2153
      %v2828 = vmax.f32 %v2748, %v2129
      %v2829 = vmax.f32 %v2749, %v2202
      %v2830 = vmax.f32 %v2750, %v2178
      %v2831 = vmax.f32 %v2751, %v2154
      %v2832 = vmax.f32 %v2752, %v2130
      %v2833 = vmax.f32 %v2753, %v2203
      %v2834 = vmax.f32 %v2754, %v2179
      %v2835 = vmax.f32 %v2755, %v2155
      %v2836 = vmax.f32 %v2756, %v2131
      %v2837 = vmax.f32 %v2757, %v2204
      %v2838 = vmax.f32 %v2758, %v2180
      %v2839 = vmax.f32 %v2759, %v2156
      %v2840 = vmax.f32 %v2760, %v2132
      %v2841 = vmax.f32 %v2761, %v2205
      %v2842 = vmax.f32 %v2762, %v2181
      %v2843 = vmax.f32 %v2763, %v2157
      %v2844 = vmax.f32 %v2764, %v2133
      %v2845 = vmax.f32 %v2765, %v2206
      %v2846 = vmax.f32 %v2766, %v2182
      %v2847 = vmax.f32 %v2767, %v2158
      %v2848 = vmax.f32 %v2768, %v2134
      %v2849 = vmax.f32 %v2769, %v2207
      %v2850 = vmax.f32 %v2770, %v2183
      %v2851 = vmax.f32 %v2771, %v2159
      %v2852 = vmax.f32 %v2772, %v2135
      %v2853 = vmax.f32 %v2773, %v2208
      %v2854 = vmax.f32 %v2774, %v2184
      %v2855 = vmax.f32 %v2775, %v2160
      %v2856 = vmax.f32 %v2776, %v2136
      %v2857 = vmax.f32 %v2777, %v2209
      %v2858 = vmax.f32 %v2778, %v2185
      %v2859 = vmax.f32 %v2779, %v2161
      %v2860 = vmax.f32 %v2780, %v2137
      %v2861 = vmax.f32 %v2781, %v2210
      %v2862 = vmax.f32 %v2782, %v2186
      %v2863 = vmax.f32 %v2783, %v2162
      %v2864 = vmax.f32 %v2784, %v2138
      %v2865 = vmax.f32 %v2785, %v2211
      %v2866 = vmax.f32 %v2786, %v2187
      %v2867 = vmax.f32 %v2787, %v2163
      %v2868 = vmax.f32 %v2788, %v2139
      %v2869 = vmax.f32 %v2789, %v2212
      %v2870 = vmax.f32 %v2790, %v2188
      %v2871 = vmax.f32 %v2791, %v2164
      %v2872 = vmax.f32 %v2792, %v2140
      %v2873 = vmax.f32 %v2793, %v2213
      %v2874 = vmax.f32 %v2794, %v2189
      %v2875 = vmax.f32 %v2795, %v2165
      %v2876 = vmax.f32 %v2796, %v2141
      %v2877 = vmax.f32 %v2797, %v2214
      %v2878 = vmax.f32 %v2798, %v2190
      %v2879 = vmax.f32 %v2799, %v2166
      %v2880 = vmax.f32 %v2800, %v2142
      %v2881 = vmax.f32 %v2801, %v2215
      %v2882 = vmax.f32 %v2802, %v2191
      %v2883 = vmax.f32 %v2803, %v2167
      %v2884 = vmax.f32 %v2804, %v2143
      %v2885 = vmax.f32 %v2805, %v2216
      %v2886 = vmax.f32 %v2806, %v2192
      %v2887 = vmax.f32 %v2807, %v2168
      %v2888 = vmax.f32 %v2808, %v2144
      %v2889 = vmax.f32 %v2809, %v2217
      %v2890 = vmax.f32 %v2810, %v2193
      %v2891 = vmax.f32 %v2811, %v2169
      %v2892 = vmax.f32 %v2812, %v2145
      %v2893 = vrot.slane %v2813, 1
      %v2894 = vrot.slane %v2817, 1
      %v2895 = vrot.slane %v2821, 1
      %v2896 = vrot.slane %v2825, 1
      %v2897 = vrot.slane %v2829, 1
      %v2898 = vrot.slane %v2833, 1
      %v2899 = vrot.slane %v2837, 1
      %v2900 = vrot.slane %v2841, 1
      %v2901 = vrot.slane %v2845, 1
      %v2902 = vrot.slane %v2849, 1
      %v2903 = vrot.slane %v2853, 1
      %v2904 = vrot.slane %v2857, 1
      %v2905 = vrot.slane %v2861, 1
      %v2906 = vrot.slane %v2865, 1
      %v2907 = vrot.slane %v2869, 1
      %v2908 = vrot.slane %v2873, 1
      %v2909 = vrot.slane %v2877, 1
      %v2910 = vrot.slane %v2881, 1
      %v2911 = vrot.slane %v2885, 1
      %v2912 = vrot.slane %v2889, 1
      %v2913 = vrot.slane %v2814, 1
      %v2914 = vrot.slane %v2818, 1
      %v2915 = vrot.slane %v2822, 1
      %v2916 = vrot.slane %v2826, 1
      %v2917 = vrot.slane %v2830, 1
      %v2918 = vrot.slane %v2834, 1
      %v2919 = vrot.slane %v2838, 1
      %v2920 = vrot.slane %v2842, 1
      %v2921 = vrot.slane %v2846, 1
      %v2922 = vrot.slane %v2850, 1
      %v2923 = vrot.slane %v2854, 1
      %v2924 = vrot.slane %v2858, 1
      %v2925 = vrot.slane %v2862, 1
      %v2926 = vrot.slane %v2866, 1
      %v2927 = vrot.slane %v2870, 1
      %v2928 = vrot.slane %v2874, 1
      %v2929 = vrot.slane %v2878, 1
      %v2930 = vrot.slane %v2882, 1
      %v2931 = vrot.slane %v2886, 1
      %v2932 = vrot.slane %v2890, 1
      %v2933 = vrot.slane %v2815, 1
      %v2934 = vrot.slane %v2819, 1
      %v2935 = vrot.slane %v2823, 1
      %v2936 = vrot.slane %v2827, 1
      %v2937 = vrot.slane %v2831, 1
      %v2938 = vrot.slane %v2835, 1
      %v2939 = vrot.slane %v2839, 1
      %v2940 = vrot.slane %v2843, 1
      %v2941 = vrot.slane %v2847, 1
      %v2942 = vrot.slane %v2851, 1
      %v2943 = vrot.slane %v2855, 1
      %v2944 = vrot.slane %v2859, 1
      %v2945 = vrot.slane %v2863, 1
      %v2946 = vrot.slane %v2867, 1
      %v2947 = vrot.slane %v2871, 1
      %v2948 = vrot.slane %v2875, 1
      %v2949 = vrot.slane %v2879, 1
      %v2950 = vrot.slane %v2883, 1
      %v2951 = vrot.slane %v2887, 1
      %v2952 = vrot.slane %v2891, 1
      %v2953 = vrot.slane %v2816, 1
      %v2954 = vrot.slane %v2820, 1
      %v2955 = vrot.slane %v2824, 1
      %v2956 = vrot.slane %v2828, 1
      %v2957 = vrot.slane %v2832, 1
      %v2958 = vrot.slane %v2836, 1
      %v2959 = vrot.slane %v2840, 1
      %v2960 = vrot.slane %v2844, 1
      %v2961 = vrot.slane %v2848, 1
      %v2962 = vrot.slane %v2852, 1
      %v2963 = vrot.slane %v2856, 1
      %v2964 = vrot.slane %v2860, 1
      %v2965 = vrot.slane %v2864, 1
      %v2966 = vrot.slane %v2868, 1
      %v2967 = vrot.slane %v2872, 1
      %v2968 = vrot.slane %v2876, 1
      %v2969 = vrot.slane %v2880, 1
      %v2970 = vrot.slane %v2884, 1
      %v2971 = vrot.slane %v2888, 1
      %v2972 = vrot.slane %v2892, 1
      %v2973 = vsel %vm1254, %v2933, %v2953
      %v2974 = vsel %vm1254, %v2934, %v2954
      %v2975 = vsel %vm1254, %v2935, %v2955
      %v2976 = vsel %vm1254, %v2936, %v2956
      %v2977 = vsel %vm1254, %v2937, %v2957
      %v2978 = vsel %vm1254, %v2938, %v2958
      %v2979 = vsel %vm1254, %v2939, %v2959
      %v2980 = vsel %vm1254, %v2940, %v2960
      %v2981 = vsel %vm1254, %v2941, %v2961
      %v2982 = vsel %vm1254, %v2942, %v2962
      %v2983 = vsel %vm1254, %v2943, %v2963
      %v2984 = vsel %vm1254, %v2944, %v2964
      %v2985 = vsel %vm1254, %v2945, %v2965
      %v2986 = vsel %vm1254, %v2946, %v2966
      %v2987 = vsel %vm1254, %v2947, %v2967
      %v2988 = vsel %vm1254, %v2948, %v2968
      %v2989 = vsel %vm1254, %v2949, %v2969
      %v2990 = vsel %vm1254, %v2950, %v2970
      %v2991 = vsel %vm1254, %v2951, %v2971
      %v2992 = vsel %vm1254, %v2952, %v2972
      %v2993 = vsel %vm1254, %v2913, %v2933
      %v2994 = vsel %vm1254, %v2914, %v2934
      %v2995 = vsel %vm1254, %v2915, %v2935
      %v2996 = vsel %vm1254, %v2916, %v2936
      %v2997 = vsel %vm1254, %v2917, %v2937
      %v2998 = vsel %vm1254, %v2918, %v2938
      %v2999 = vsel %vm1254, %v2919, %v2939
      %v3000 = vsel %vm1254, %v2920, %v2940
      %v3001 = vsel %vm1254, %v2921, %v2941
      %v3002 = vsel %vm1254, %v2922, %v2942
      %v3003 = vsel %vm1254, %v2923, %v2943
      %v3004 = vsel %vm1254, %v2924, %v2944
      %v3005 = vsel %vm1254, %v2925, %v2945
      %v3006 = vsel %vm1254, %v2926, %v2946
      %v3007 = vsel %vm1254, %v2927, %v2947
      %v3008 = vsel %vm1254, %v2928, %v2948
      %v3009 = vsel %vm1254, %v2929, %v2949
      %v3010 = vsel %vm1254, %v2930, %v2950
      %v3011 = vsel %vm1254, %v2931, %v2951
      %v3012 = vsel %vm1254, %v2932, %v2952
      %v3013 = vsel %vm1254, %v2893, %v2913
      %v3014 = vsel %vm1254, %v2894, %v2914
      %v3015 = vsel %vm1254, %v2895, %v2915
      %v3016 = vsel %vm1254, %v2896, %v2916
      %v3017 = vsel %vm1254, %v2897, %v2917
      %v3018 = vsel %vm1254, %v2898, %v2918
      %v3019 = vsel %vm1254, %v2899, %v2919
      %v3020 = vsel %vm1254, %v2900, %v2920
      %v3021 = vsel %vm1254, %v2901, %v2921
      %v3022 = vsel %vm1254, %v2902, %v2922
      %v3023 = vsel %vm1254, %v2903, %v2923
      %v3024 = vsel %vm1254, %v2904, %v2924
      %v3025 = vsel %vm1254, %v2905, %v2925
      %v3026 = vsel %vm1254, %v2906, %v2926
      %v3027 = vsel %vm1254, %v2907, %v2927
      %v3028 = vsel %vm1254, %v2908, %v2928
      %v3029 = vsel %vm1254, %v2909, %v2929
      %v3030 = vsel %vm1254, %v2910, %v2930
      %v3031 = vsel %vm1254, %v2911, %v2931
      %v3032 = vsel %vm1254, %v2912, %v2932
      %v3033 = vsel %vm1254, %v2953, %v2893
      %v3034 = vsel %vm1254, %v2954, %v2894
      %v3035 = vsel %vm1254, %v2955, %v2895
      %v3036 = vsel %vm1254, %v2956, %v2896
      %v3037 = vsel %vm1254, %v2957, %v2897
      %v3038 = vsel %vm1254, %v2958, %v2898
      %v3039 = vsel %vm1254, %v2959, %v2899
      %v3040 = vsel %vm1254, %v2960, %v2900
      %v3041 = vsel %vm1254, %v2961, %v2901
      %v3042 = vsel %vm1254, %v2962, %v2902
      %v3043 = vsel %vm1254, %v2963, %v2903
      %v3044 = vsel %vm1254, %v2964, %v2904
      %v3045 = vsel %vm1254, %v2965, %v2905
      %v3046 = vsel %vm1254, %v2966, %v2906
      %v3047 = vsel %vm1254, %v2967, %v2907
      %v3048 = vsel %vm1254, %v2968, %v2908
      %v3049 = vsel %vm1254, %v2969, %v2909
      %v3050 = vsel %vm1254, %v2970, %v2910
      %v3051 = vsel %vm1254, %v2971, %v2911
      %v3052 = vsel %vm1254, %v2972, %v2912
      %v3053 = vmax.f32 %v2813, %v3013
      %v3054 = vmax.f32 %v2814, %v2993
      %v3055 = vmax.f32 %v2815, %v2973
      %v3056 = vmax.f32 %v2816, %v3033
      %v3057 = vmax.f32 %v2817, %v3014
      %v3058 = vmax.f32 %v2818, %v2994
      %v3059 = vmax.f32 %v2819, %v2974
      %v3060 = vmax.f32 %v2820, %v3034
      %v3061 = vmax.f32 %v2821, %v3015
      %v3062 = vmax.f32 %v2822, %v2995
      %v3063 = vmax.f32 %v2823, %v2975
      %v3064 = vmax.f32 %v2824, %v3035
      %v3065 = vmax.f32 %v2825, %v3016
      %v3066 = vmax.f32 %v2826, %v2996
      %v3067 = vmax.f32 %v2827, %v2976
      %v3068 = vmax.f32 %v2828, %v3036
      %v3069 = vmax.f32 %v2829, %v3017
      %v3070 = vmax.f32 %v2830, %v2997
      %v3071 = vmax.f32 %v2831, %v2977
      %v3072 = vmax.f32 %v2832, %v3037
      %v3073 = vmax.f32 %v2833, %v3018
      %v3074 = vmax.f32 %v2834, %v2998
      %v3075 = vmax.f32 %v2835, %v2978
      %v3076 = vmax.f32 %v2836, %v3038
      %v3077 = vmax.f32 %v2837, %v3019
      %v3078 = vmax.f32 %v2838, %v2999
      %v3079 = vmax.f32 %v2839, %v2979
      %v3080 = vmax.f32 %v2840, %v3039
      %v3081 = vmax.f32 %v2841, %v3020
      %v3082 = vmax.f32 %v2842, %v3000
      %v3083 = vmax.f32 %v2843, %v2980
      %v3084 = vmax.f32 %v2844, %v3040
      %v3085 = vmax.f32 %v2845, %v3021
      %v3086 = vmax.f32 %v2846, %v3001
      %v3087 = vmax.f32 %v2847, %v2981
      %v3088 = vmax.f32 %v2848, %v3041
      %v3089 = vmax.f32 %v2849, %v3022
      %v3090 = vmax.f32 %v2850, %v3002
      %v3091 = vmax.f32 %v2851, %v2982
      %v3092 = vmax.f32 %v2852, %v3042
      %v3093 = vmax.f32 %v2853, %v3023
      %v3094 = vmax.f32 %v2854, %v3003
      %v3095 = vmax.f32 %v2855, %v2983
      %v3096 = vmax.f32 %v2856, %v3043
      %v3097 = vmax.f32 %v2857, %v3024
      %v3098 = vmax.f32 %v2858, %v3004
      %v3099 = vmax.f32 %v2859, %v2984
      %v3100 = vmax.f32 %v2860, %v3044
      %v3101 = vmax.f32 %v2861, %v3025
      %v3102 = vmax.f32 %v2862, %v3005
      %v3103 = vmax.f32 %v2863, %v2985
      %v3104 = vmax.f32 %v2864, %v3045
      %v3105 = vmax.f32 %v2865, %v3026
      %v3106 = vmax.f32 %v2866, %v3006
      %v3107 = vmax.f32 %v2867, %v2986
      %v3108 = vmax.f32 %v2868, %v3046
      %v3109 = vmax.f32 %v2869, %v3027
      %v3110 = vmax.f32 %v2870, %v3007
      %v3111 = vmax.f32 %v2871, %v2987
      %v3112 = vmax.f32 %v2872, %v3047
      %v3113 = vmax.f32 %v2873, %v3028
      %v3114 = vmax.f32 %v2874, %v3008
      %v3115 = vmax.f32 %v2875, %v2988
      %v3116 = vmax.f32 %v2876, %v3048
      %v3117 = vmax.f32 %v2877, %v3029
      %v3118 = vmax.f32 %v2878, %v3009
      %v3119 = vmax.f32 %v2879, %v2989
      %v3120 = vmax.f32 %v2880, %v3049
      %v3121 = vmax.f32 %v2881, %v3030
      %v3122 = vmax.f32 %v2882, %v3010
      %v3123 = vmax.f32 %v2883, %v2990
      %v3124 = vmax.f32 %v2884, %v3050
      %v3125 = vmax.f32 %v2885, %v3031
      %v3126 = vmax.f32 %v2886, %v3011
      %v3127 = vmax.f32 %v2887, %v2991
      %v3128 = vmax.f32 %v2888, %v3051
      %v3129 = vmax.f32 %v2889, %v3032
      %v3130 = vmax.f32 %v2890, %v3012
      %v3131 = vmax.f32 %v2891, %v2992
      %v3132 = vmax.f32 %v2892, %v3052
      %v3133 = vrot.slane %v3053, 2
      %v3134 = vrot.slane %v3057, 2
      %v3135 = vrot.slane %v3061, 2
      %v3136 = vrot.slane %v3065, 2
      %v3137 = vrot.slane %v3069, 2
      %v3138 = vrot.slane %v3073, 2
      %v3139 = vrot.slane %v3077, 2
      %v3140 = vrot.slane %v3081, 2
      %v3141 = vrot.slane %v3085, 2
      %v3142 = vrot.slane %v3089, 2
      %v3143 = vrot.slane %v3093, 2
      %v3144 = vrot.slane %v3097, 2
      %v3145 = vrot.slane %v3101, 2
      %v3146 = vrot.slane %v3105, 2
      %v3147 = vrot.slane %v3109, 2
      %v3148 = vrot.slane %v3113, 2
      %v3149 = vrot.slane %v3117, 2
      %v3150 = vrot.slane %v3121, 2
      %v3151 = vrot.slane %v3125, 2
      %v3152 = vrot.slane %v3129, 2
      %v3153 = vrot.slane %v3054, 2
      %v3154 = vrot.slane %v3058, 2
      %v3155 = vrot.slane %v3062, 2
      %v3156 = vrot.slane %v3066, 2
      %v3157 = vrot.slane %v3070, 2
      %v3158 = vrot.slane %v3074, 2
      %v3159 = vrot.slane %v3078, 2
      %v3160 = vrot.slane %v3082, 2
      %v3161 = vrot.slane %v3086, 2
      %v3162 = vrot.slane %v3090, 2
      %v3163 = vrot.slane %v3094, 2
      %v3164 = vrot.slane %v3098, 2
      %v3165 = vrot.slane %v3102, 2
      %v3166 = vrot.slane %v3106, 2
      %v3167 = vrot.slane %v3110, 2
      %v3168 = vrot.slane %v3114, 2
      %v3169 = vrot.slane %v3118, 2
      %v3170 = vrot.slane %v3122, 2
      %v3171 = vrot.slane %v3126, 2
      %v3172 = vrot.slane %v3130, 2
      %v3173 = vrot.slane %v3055, 2
      %v3174 = vrot.slane %v3059, 2
      %v3175 = vrot.slane %v3063, 2
      %v3176 = vrot.slane %v3067, 2
      %v3177 = vrot.slane %v3071, 2
      %v3178 = vrot.slane %v3075, 2
      %v3179 = vrot.slane %v3079, 2
      %v3180 = vrot.slane %v3083, 2
      %v3181 = vrot.slane %v3087, 2
      %v3182 = vrot.slane %v3091, 2
      %v3183 = vrot.slane %v3095, 2
      %v3184 = vrot.slane %v3099, 2
      %v3185 = vrot.slane %v3103, 2
      %v3186 = vrot.slane %v3107, 2
      %v3187 = vrot.slane %v3111, 2
      %v3188 = vrot.slane %v3115, 2
      %v3189 = vrot.slane %v3119, 2
      %v3190 = vrot.slane %v3123, 2
      %v3191 = vrot.slane %v3127, 2
      %v3192 = vrot.slane %v3131, 2
      %v3193 = vrot.slane %v3056, 2
      %v3194 = vrot.slane %v3060, 2
      %v3195 = vrot.slane %v3064, 2
      %v3196 = vrot.slane %v3068, 2
      %v3197 = vrot.slane %v3072, 2
      %v3198 = vrot.slane %v3076, 2
      %v3199 = vrot.slane %v3080, 2
      %v3200 = vrot.slane %v3084, 2
      %v3201 = vrot.slane %v3088, 2
      %v3202 = vrot.slane %v3092, 2
      %v3203 = vrot.slane %v3096, 2
      %v3204 = vrot.slane %v3100, 2
      %v3205 = vrot.slane %v3104, 2
      %v3206 = vrot.slane %v3108, 2
      %v3207 = vrot.slane %v3112, 2
      %v3208 = vrot.slane %v3116, 2
      %v3209 = vrot.slane %v3120, 2
      %v3210 = vrot.slane %v3124, 2
      %v3211 = vrot.slane %v3128, 2
      %v3212 = vrot.slane %v3132, 2
      %v3213 = vsel %vm1543, %v3173, %v3193
      %v3214 = vsel %vm1543, %v3174, %v3194
      %v3215 = vsel %vm1543, %v3175, %v3195
      %v3216 = vsel %vm1543, %v3176, %v3196
      %v3217 = vsel %vm1543, %v3177, %v3197
      %v3218 = vsel %vm1543, %v3178, %v3198
      %v3219 = vsel %vm1543, %v3179, %v3199
      %v3220 = vsel %vm1543, %v3180, %v3200
      %v3221 = vsel %vm1543, %v3181, %v3201
      %v3222 = vsel %vm1543, %v3182, %v3202
      %v3223 = vsel %vm1543, %v3183, %v3203
      %v3224 = vsel %vm1543, %v3184, %v3204
      %v3225 = vsel %vm1543, %v3185, %v3205
      %v3226 = vsel %vm1543, %v3186, %v3206
      %v3227 = vsel %vm1543, %v3187, %v3207
      %v3228 = vsel %vm1543, %v3188, %v3208
      %v3229 = vsel %vm1543, %v3189, %v3209
      %v3230 = vsel %vm1543, %v3190, %v3210
      %v3231 = vsel %vm1543, %v3191, %v3211
      %v3232 = vsel %vm1543, %v3192, %v3212
      %v3233 = vsel %vm1543, %v3153, %v3173
      %v3234 = vsel %vm1543, %v3154, %v3174
      %v3235 = vsel %vm1543, %v3155, %v3175
      %v3236 = vsel %vm1543, %v3156, %v3176
      %v3237 = vsel %vm1543, %v3157, %v3177
      %v3238 = vsel %vm1543, %v3158, %v3178
      %v3239 = vsel %vm1543, %v3159, %v3179
      %v3240 = vsel %vm1543, %v3160, %v3180
      %v3241 = vsel %vm1543, %v3161, %v3181
      %v3242 = vsel %vm1543, %v3162, %v3182
      %v3243 = vsel %vm1543, %v3163, %v3183
      %v3244 = vsel %vm1543, %v3164, %v3184
      %v3245 = vsel %vm1543, %v3165, %v3185
      %v3246 = vsel %vm1543, %v3166, %v3186
      %v3247 = vsel %vm1543, %v3167, %v3187
      %v3248 = vsel %vm1543, %v3168, %v3188
      %v3249 = vsel %vm1543, %v3169, %v3189
      %v3250 = vsel %vm1543, %v3170, %v3190
      %v3251 = vsel %vm1543, %v3171, %v3191
      %v3252 = vsel %vm1543, %v3172, %v3192
      %v3253 = vsel %vm1543, %v3133, %v3153
      %v3254 = vsel %vm1543, %v3134, %v3154
      %v3255 = vsel %vm1543, %v3135, %v3155
      %v3256 = vsel %vm1543, %v3136, %v3156
      %v3257 = vsel %vm1543, %v3137, %v3157
      %v3258 = vsel %vm1543, %v3138, %v3158
      %v3259 = vsel %vm1543, %v3139, %v3159
      %v3260 = vsel %vm1543, %v3140, %v3160
      %v3261 = vsel %vm1543, %v3141, %v3161
      %v3262 = vsel %vm1543, %v3142, %v3162
      %v3263 = vsel %vm1543, %v3143, %v3163
      %v3264 = vsel %vm1543, %v3144, %v3164
      %v3265 = vsel %vm1543, %v3145, %v3165
      %v3266 = vsel %vm1543, %v3146, %v3166
      %v3267 = vsel %vm1543, %v3147, %v3167
      %v3268 = vsel %vm1543, %v3148, %v3168
      %v3269 = vsel %vm1543, %v3149, %v3169
      %v3270 = vsel %vm1543, %v3150, %v3170
      %v3271 = vsel %vm1543, %v3151, %v3171
      %v3272 = vsel %vm1543, %v3152, %v3172
      %v3273 = vsel %vm1543, %v3193, %v3133
      %v3274 = vsel %vm1543, %v3194, %v3134
      %v3275 = vsel %vm1543, %v3195, %v3135
      %v3276 = vsel %vm1543, %v3196, %v3136
      %v3277 = vsel %vm1543, %v3197, %v3137
      %v3278 = vsel %vm1543, %v3198, %v3138
      %v3279 = vsel %vm1543, %v3199, %v3139
      %v3280 = vsel %vm1543, %v3200, %v3140
      %v3281 = vsel %vm1543, %v3201, %v3141
      %v3282 = vsel %vm1543, %v3202, %v3142
      %v3283 = vsel %vm1543, %v3203, %v3143
      %v3284 = vsel %vm1543, %v3204, %v3144
      %v3285 = vsel %vm1543, %v3205, %v3145
      %v3286 = vsel %vm1543, %v3206, %v3146
      %v3287 = vsel %vm1543, %v3207, %v3147
      %v3288 = vsel %vm1543, %v3208, %v3148
      %v3289 = vsel %vm1543, %v3209, %v3149
      %v3290 = vsel %vm1543, %v3210, %v3150
      %v3291 = vsel %vm1543, %v3211, %v3151
      %v3292 = vsel %vm1543, %v3212, %v3152
      %v3293 = vmax.f32 %v3053, %v3253
      %v3294 = vmax.f32 %v3054, %v3233
      %v3295 = vmax.f32 %v3055, %v3213
      %v3296 = vmax.f32 %v3056, %v3273
      %v3297 = vmax.f32 %v3057, %v3254
      %v3298 = vmax.f32 %v3058, %v3234
      %v3299 = vmax.f32 %v3059, %v3214
      %v3300 = vmax.f32 %v3060, %v3274
      %v3301 = vmax.f32 %v3061, %v3255
      %v3302 = vmax.f32 %v3062, %v3235
      %v3303 = vmax.f32 %v3063, %v3215
      %v3304 = vmax.f32 %v3064, %v3275
      %v3305 = vmax.f32 %v3065, %v3256
      %v3306 = vmax.f32 %v3066, %v3236
      %v3307 = vmax.f32 %v3067, %v3216
      %v3308 = vmax.f32 %v3068, %v3276
      %v3309 = vmax.f32 %v3069, %v3257
      %v3310 = vmax.f32 %v3070, %v3237
      %v3311 = vmax.f32 %v3071, %v3217
      %v3312 = vmax.f32 %v3072, %v3277
      %v3313 = vmax.f32 %v3073, %v3258
      %v3314 = vmax.f32 %v3074, %v3238
      %v3315 = vmax.f32 %v3075, %v3218
      %v3316 = vmax.f32 %v3076, %v3278
      %v3317 = vmax.f32 %v3077, %v3259
      %v3318 = vmax.f32 %v3078, %v3239
      %v3319 = vmax.f32 %v3079, %v3219
      %v3320 = vmax.f32 %v3080, %v3279
      %v3321 = vmax.f32 %v3081, %v3260
      %v3322 = vmax.f32 %v3082, %v3240
      %v3323 = vmax.f32 %v3083, %v3220
      %v3324 = vmax.f32 %v3084, %v3280
      %v3325 = vmax.f32 %v3085, %v3261
      %v3326 = vmax.f32 %v3086, %v3241
      %v3327 = vmax.f32 %v3087, %v3221
      %v3328 = vmax.f32 %v3088, %v3281
      %v3329 = vmax.f32 %v3089, %v3262
      %v3330 = vmax.f32 %v3090, %v3242
      %v3331 = vmax.f32 %v3091, %v3222
      %v3332 = vmax.f32 %v3092, %v3282
      %v3333 = vmax.f32 %v3093, %v3263
      %v3334 = vmax.f32 %v3094, %v3243
      %v3335 = vmax.f32 %v3095, %v3223
      %v3336 = vmax.f32 %v3096, %v3283
      %v3337 = vmax.f32 %v3097, %v3264
      %v3338 = vmax.f32 %v3098, %v3244
      %v3339 = vmax.f32 %v3099, %v3224
      %v3340 = vmax.f32 %v3100, %v3284
      %v3341 = vmax.f32 %v3101, %v3265
      %v3342 = vmax.f32 %v3102, %v3245
      %v3343 = vmax.f32 %v3103, %v3225
      %v3344 = vmax.f32 %v3104, %v3285
      %v3345 = vmax.f32 %v3105, %v3266
      %v3346 = vmax.f32 %v3106, %v3246
      %v3347 = vmax.f32 %v3107, %v3226
      %v3348 = vmax.f32 %v3108, %v3286
      %v3349 = vmax.f32 %v3109, %v3267
      %v3350 = vmax.f32 %v3110, %v3247
      %v3351 = vmax.f32 %v3111, %v3227
      %v3352 = vmax.f32 %v3112, %v3287
      %v3353 = vmax.f32 %v3113, %v3268
      %v3354 = vmax.f32 %v3114, %v3248
      %v3355 = vmax.f32 %v3115, %v3228
      %v3356 = vmax.f32 %v3116, %v3288
      %v3357 = vmax.f32 %v3117, %v3269
      %v3358 = vmax.f32 %v3118, %v3249
      %v3359 = vmax.f32 %v3119, %v3229
      %v3360 = vmax.f32 %v3120, %v3289
      %v3361 = vmax.f32 %v3121, %v3270
      %v3362 = vmax.f32 %v3122, %v3250
      %v3363 = vmax.f32 %v3123, %v3230
      %v3364 = vmax.f32 %v3124, %v3290
      %v3365 = vmax.f32 %v3125, %v3271
      %v3366 = vmax.f32 %v3126, %v3251
      %v3367 = vmax.f32 %v3127, %v3231
      %v3368 = vmax.f32 %v3128, %v3291
      %v3369 = vmax.f32 %v3129, %v3272
      %v3370 = vmax.f32 %v3130, %v3252
      %v3371 = vmax.f32 %v3131, %v3232
      %v3372 = vmax.f32 %v3132, %v3292
      %v3373 = vrot.slane %v2813, 4
      %v3374 = vrot.slane %v2817, 4
      %v3375 = vrot.slane %v2821, 4
      %v3376 = vrot.slane %v2825, 4
      %v3377 = vrot.slane %v2829, 4
      %v3378 = vrot.slane %v2833, 4
      %v3379 = vrot.slane %v2837, 4
      %v3380 = vrot.slane %v2841, 4
      %v3381 = vrot.slane %v2845, 4
      %v3382 = vrot.slane %v2849, 4
      %v3383 = vrot.slane %v2853, 4
      %v3384 = vrot.slane %v2857, 4
      %v3385 = vrot.slane %v2861, 4
      %v3386 = vrot.slane %v2865, 4
      %v3387 = vrot.slane %v2869, 4
      %v3388 = vrot.slane %v2873, 4
      %v3389 = vrot.slane %v2877, 4
      %v3390 = vrot.slane %v2881, 4
      %v3391 = vrot.slane %v2885, 4
      %v3392 = vrot.slane %v2889, 4
      %v3393 = vrot.slane %v2814, 4
      %v3394 = vrot.slane %v2818, 4
      %v3395 = vrot.slane %v2822, 4
      %v3396 = vrot.slane %v2826, 4
      %v3397 = vrot.slane %v2830, 4
      %v3398 = vrot.slane %v2834, 4
      %v3399 = vrot.slane %v2838, 4
      %v3400 = vrot.slane %v2842, 4
      %v3401 = vrot.slane %v2846, 4
      %v3402 = vrot.slane %v2850, 4
      %v3403 = vrot.slane %v2854, 4
      %v3404 = vrot.slane %v2858, 4
      %v3405 = vrot.slane %v2862, 4
      %v3406 = vrot.slane %v2866, 4
      %v3407 = vrot.slane %v2870, 4
      %v3408 = vrot.slane %v2874, 4
      %v3409 = vrot.slane %v2878, 4
      %v3410 = vrot.slane %v2882, 4
      %v3411 = vrot.slane %v2886, 4
      %v3412 = vrot.slane %v2890, 4
      %v3413 = vrot.slane %v2815, 4
      %v3414 = vrot.slane %v2819, 4
      %v3415 = vrot.slane %v2823, 4
      %v3416 = vrot.slane %v2827, 4
      %v3417 = vrot.slane %v2831, 4
      %v3418 = vrot.slane %v2835, 4
      %v3419 = vrot.slane %v2839, 4
      %v3420 = vrot.slane %v2843, 4
      %v3421 = vrot.slane %v2847, 4
      %v3422 = vrot.slane %v2851, 4
      %v3423 = vrot.slane %v2855, 4
      %v3424 = vrot.slane %v2859, 4
      %v3425 = vrot.slane %v2863, 4
      %v3426 = vrot.slane %v2867, 4
      %v3427 = vrot.slane %v2871, 4
      %v3428 = vrot.slane %v2875, 4
      %v3429 = vrot.slane %v2879, 4
      %v3430 = vrot.slane %v2883, 4
      %v3431 = vrot.slane %v2887, 4
      %v3432 = vrot.slane %v2891, 4
      %v3433 = vrot.slane %v2816, 4
      %v3434 = vrot.slane %v2820, 4
      %v3435 = vrot.slane %v2824, 4
      %v3436 = vrot.slane %v2828, 4
      %v3437 = vrot.slane %v2832, 4
      %v3438 = vrot.slane %v2836, 4
      %v3439 = vrot.slane %v2840, 4
      %v3440 = vrot.slane %v2844, 4
      %v3441 = vrot.slane %v2848, 4
      %v3442 = vrot.slane %v2852, 4
      %v3443 = vrot.slane %v2856, 4
      %v3444 = vrot.slane %v2860, 4
      %v3445 = vrot.slane %v2864, 4
      %v3446 = vrot.slane %v2868, 4
      %v3447 = vrot.slane %v2872, 4
      %v3448 = vrot.slane %v2876, 4
      %v3449 = vrot.slane %v2880, 4
      %v3450 = vrot.slane %v2884, 4
      %v3451 = vrot.slane %v2888, 4
      %v3452 = vrot.slane %v2892, 4
      %v3453 = vsel %vm1832, %v3413, %v3433
      %v3454 = vsel %vm1832, %v3414, %v3434
      %v3455 = vsel %vm1832, %v3415, %v3435
      %v3456 = vsel %vm1832, %v3416, %v3436
      %v3457 = vsel %vm1832, %v3417, %v3437
      %v3458 = vsel %vm1832, %v3418, %v3438
      %v3459 = vsel %vm1832, %v3419, %v3439
      %v3460 = vsel %vm1832, %v3420, %v3440
      %v3461 = vsel %vm1832, %v3421, %v3441
      %v3462 = vsel %vm1832, %v3422, %v3442
      %v3463 = vsel %vm1832, %v3423, %v3443
      %v3464 = vsel %vm1832, %v3424, %v3444
      %v3465 = vsel %vm1832, %v3425, %v3445
      %v3466 = vsel %vm1832, %v3426, %v3446
      %v3467 = vsel %vm1832, %v3427, %v3447
      %v3468 = vsel %vm1832, %v3428, %v3448
      %v3469 = vsel %vm1832, %v3429, %v3449
      %v3470 = vsel %vm1832, %v3430, %v3450
      %v3471 = vsel %vm1832, %v3431, %v3451
      %v3472 = vsel %vm1832, %v3432, %v3452
      %v3473 = vsel %vm1832, %v3393, %v3413
      %v3474 = vsel %vm1832, %v3394, %v3414
      %v3475 = vsel %vm1832, %v3395, %v3415
      %v3476 = vsel %vm1832, %v3396, %v3416
      %v3477 = vsel %vm1832, %v3397, %v3417
      %v3478 = vsel %vm1832, %v3398, %v3418
      %v3479 = vsel %vm1832, %v3399, %v3419
      %v3480 = vsel %vm1832, %v3400, %v3420
      %v3481 = vsel %vm1832, %v3401, %v3421
      %v3482 = vsel %vm1832, %v3402, %v3422
      %v3483 = vsel %vm1832, %v3403, %v3423
      %v3484 = vsel %vm1832, %v3404, %v3424
      %v3485 = vsel %vm1832, %v3405, %v3425
      %v3486 = vsel %vm1832, %v3406, %v3426
      %v3487 = vsel %vm1832, %v3407, %v3427
      %v3488 = vsel %vm1832, %v3408, %v3428
      %v3489 = vsel %vm1832, %v3409, %v3429
      %v3490 = vsel %vm1832, %v3410, %v3430
      %v3491 = vsel %vm1832, %v3411, %v3431
      %v3492 = vsel %vm1832, %v3412, %v3432
      %v3493 = vsel %vm1832, %v3373, %v3393
      %v3494 = vsel %vm1832, %v3374, %v3394
      %v3495 = vsel %vm1832, %v3375, %v3395
      %v3496 = vsel %vm1832, %v3376, %v3396
      %v3497 = vsel %vm1832, %v3377, %v3397
      %v3498 = vsel %vm1832, %v3378, %v3398
      %v3499 = vsel %vm1832, %v3379, %v3399
      %v3500 = vsel %vm1832, %v3380, %v3400
      %v3501 = vsel %vm1832, %v3381, %v3401
      %v3502 = vsel %vm1832, %v3382, %v3402
      %v3503 = vsel %vm1832, %v3383, %v3403
      %v3504 = vsel %vm1832, %v3384, %v3404
      %v3505 = vsel %vm1832, %v3385, %v3405
      %v3506 = vsel %vm1832, %v3386, %v3406
      %v3507 = vsel %vm1832, %v3387, %v3407
      %v3508 = vsel %vm1832, %v3388, %v3408
      %v3509 = vsel %vm1832, %v3389, %v3409
      %v3510 = vsel %vm1832, %v3390, %v3410
      %v3511 = vsel %vm1832, %v3391, %v3411
      %v3512 = vsel %vm1832, %v3392, %v3412
      %v3513 = vsel %vm1832, %v3433, %v3373
      %v3514 = vsel %vm1832, %v3434, %v3374
      %v3515 = vsel %vm1832, %v3435, %v3375
      %v3516 = vsel %vm1832, %v3436, %v3376
      %v3517 = vsel %vm1832, %v3437, %v3377
      %v3518 = vsel %vm1832, %v3438, %v3378
      %v3519 = vsel %vm1832, %v3439, %v3379
      %v3520 = vsel %vm1832, %v3440, %v3380
      %v3521 = vsel %vm1832, %v3441, %v3381
      %v3522 = vsel %vm1832, %v3442, %v3382
      %v3523 = vsel %vm1832, %v3443, %v3383
      %v3524 = vsel %vm1832, %v3444, %v3384
      %v3525 = vsel %vm1832, %v3445, %v3385
      %v3526 = vsel %vm1832, %v3446, %v3386
      %v3527 = vsel %vm1832, %v3447, %v3387
      %v3528 = vsel %vm1832, %v3448, %v3388
      %v3529 = vsel %vm1832, %v3449, %v3389
      %v3530 = vsel %vm1832, %v3450, %v3390
      %v3531 = vsel %vm1832, %v3451, %v3391
      %v3532 = vsel %vm1832, %v3452, %v3392
      %v3533 = vmax.f32 %v3293, %v3493
      %v3534 = vmax.f32 %v3294, %v3473
      %v3535 = vmax.f32 %v3295, %v3453
      %v3536 = vmax.f32 %v3296, %v3513
      %v3537 = vmax.f32 %v3297, %v3494
      %v3538 = vmax.f32 %v3298, %v3474
      %v3539 = vmax.f32 %v3299, %v3454
      %v3540 = vmax.f32 %v3300, %v3514
      %v3541 = vmax.f32 %v3301, %v3495
      %v3542 = vmax.f32 %v3302, %v3475
      %v3543 = vmax.f32 %v3303, %v3455
      %v3544 = vmax.f32 %v3304, %v3515
      %v3545 = vmax.f32 %v3305, %v3496
      %v3546 = vmax.f32 %v3306, %v3476
      %v3547 = vmax.f32 %v3307, %v3456
      %v3548 = vmax.f32 %v3308, %v3516
      %v3549 = vmax.f32 %v3309, %v3497
      %v3550 = vmax.f32 %v3310, %v3477
      %v3551 = vmax.f32 %v3311, %v3457
      %v3552 = vmax.f32 %v3312, %v3517
      %v3553 = vmax.f32 %v3313, %v3498
      %v3554 = vmax.f32 %v3314, %v3478
      %v3555 = vmax.f32 %v3315, %v3458
      %v3556 = vmax.f32 %v3316, %v3518
      %v3557 = vmax.f32 %v3317, %v3499
      %v3558 = vmax.f32 %v3318, %v3479
      %v3559 = vmax.f32 %v3319, %v3459
      %v3560 = vmax.f32 %v3320, %v3519
      %v3561 = vmax.f32 %v3321, %v3500
      %v3562 = vmax.f32 %v3322, %v3480
      %v3563 = vmax.f32 %v3323, %v3460
      %v3564 = vmax.f32 %v3324, %v3520
      %v3565 = vmax.f32 %v3325, %v3501
      %v3566 = vmax.f32 %v3326, %v3481
      %v3567 = vmax.f32 %v3327, %v3461
      %v3568 = vmax.f32 %v3328, %v3521
      %v3569 = vmax.f32 %v3329, %v3502
      %v3570 = vmax.f32 %v3330, %v3482
      %v3571 = vmax.f32 %v3331, %v3462
      %v3572 = vmax.f32 %v3332, %v3522
      %v3573 = vmax.f32 %v3333, %v3503
      %v3574 = vmax.f32 %v3334, %v3483
      %v3575 = vmax.f32 %v3335, %v3463
      %v3576 = vmax.f32 %v3336, %v3523
      %v3577 = vmax.f32 %v3337, %v3504
      %v3578 = vmax.f32 %v3338, %v3484
      %v3579 = vmax.f32 %v3339, %v3464
      %v3580 = vmax.f32 %v3340, %v3524
      %v3581 = vmax.f32 %v3341, %v3505
      %v3582 = vmax.f32 %v3342, %v3485
      %v3583 = vmax.f32 %v3343, %v3465
      %v3584 = vmax.f32 %v3344, %v3525
      %v3585 = vmax.f32 %v3345, %v3506
      %v3586 = vmax.f32 %v3346, %v3486
      %v3587 = vmax.f32 %v3347, %v3466
      %v3588 = vmax.f32 %v3348, %v3526
      %v3589 = vmax.f32 %v3349, %v3507
      %v3590 = vmax.f32 %v3350, %v3487
      %v3591 = vmax.f32 %v3351, %v3467
      %v3592 = vmax.f32 %v3352, %v3527
      %v3593 = vmax.f32 %v3353, %v3508
      %v3594 = vmax.f32 %v3354, %v3488
      %v3595 = vmax.f32 %v3355, %v3468
      %v3596 = vmax.f32 %v3356, %v3528
      %v3597 = vmax.f32 %v3357, %v3509
      %v3598 = vmax.f32 %v3358, %v3489
      %v3599 = vmax.f32 %v3359, %v3469
      %v3600 = vmax.f32 %v3360, %v3529
      %v3601 = vmax.f32 %v3361, %v3510
      %v3602 = vmax.f32 %v3362, %v3490
      %v3603 = vmax.f32 %v3363, %v3470
      %v3604 = vmax.f32 %v3364, %v3530
      %v3605 = vmax.f32 %v3365, %v3511
      %v3606 = vmax.f32 %v3366, %v3491
      %v3607 = vmax.f32 %v3367, %v3471
      %v3608 = vmax.f32 %v3368, %v3531
      %v3609 = vmax.f32 %v3369, %v3512
      %v3610 = vmax.f32 %v3370, %v3492
      %v3611 = vmax.f32 %v3371, %v3472
      %v3612 = vmax.f32 %v3372, %v3532
      %v3613 = vrot.slane %v3533, 6
      %v3614 = vrot.slane %v3537, 6
      %v3615 = vrot.slane %v3541, 6
      %v3616 = vrot.slane %v3545, 6
      %v3617 = vrot.slane %v3549, 6
      %v3618 = vrot.slane %v3553, 6
      %v3619 = vrot.slane %v3557, 6
      %v3620 = vrot.slane %v3561, 6
      %v3621 = vrot.slane %v3565, 6
      %v3622 = vrot.slane %v3569, 6
      %v3623 = vrot.slane %v3573, 6
      %v3624 = vrot.slane %v3577, 6
      %v3625 = vrot.slane %v3581, 6
      %v3626 = vrot.slane %v3585, 6
      %v3627 = vrot.slane %v3589, 6
      %v3628 = vrot.slane %v3593, 6
      %v3629 = vrot.slane %v3597, 6
      %v3630 = vrot.slane %v3601, 6
      %v3631 = vrot.slane %v3605, 6
      %v3632 = vrot.slane %v3609, 6
      %v3633 = vrot.slane %v3534, 6
      %v3634 = vrot.slane %v3538, 6
      %v3635 = vrot.slane %v3542, 6
      %v3636 = vrot.slane %v3546, 6
      %v3637 = vrot.slane %v3550, 6
      %v3638 = vrot.slane %v3554, 6
      %v3639 = vrot.slane %v3558, 6
      %v3640 = vrot.slane %v3562, 6
      %v3641 = vrot.slane %v3566, 6
      %v3642 = vrot.slane %v3570, 6
      %v3643 = vrot.slane %v3574, 6
      %v3644 = vrot.slane %v3578, 6
      %v3645 = vrot.slane %v3582, 6
      %v3646 = vrot.slane %v3586, 6
      %v3647 = vrot.slane %v3590, 6
      %v3648 = vrot.slane %v3594, 6
      %v3649 = vrot.slane %v3598, 6
      %v3650 = vrot.slane %v3602, 6
      %v3651 = vrot.slane %v3606, 6
      %v3652 = vrot.slane %v3610, 6
      %v3653 = vrot.slane %v3535, 6
      %v3654 = vrot.slane %v3539, 6
      %v3655 = vrot.slane %v3543, 6
      %v3656 = vrot.slane %v3547, 6
      %v3657 = vrot.slane %v3551, 6
      %v3658 = vrot.slane %v3555, 6
      %v3659 = vrot.slane %v3559, 6
      %v3660 = vrot.slane %v3563, 6
      %v3661 = vrot.slane %v3567, 6
      %v3662 = vrot.slane %v3571, 6
      %v3663 = vrot.slane %v3575, 6
      %v3664 = vrot.slane %v3579, 6
      %v3665 = vrot.slane %v3583, 6
      %v3666 = vrot.slane %v3587, 6
      %v3667 = vrot.slane %v3591, 6
      %v3668 = vrot.slane %v3595, 6
      %v3669 = vrot.slane %v3599, 6
      %v3670 = vrot.slane %v3603, 6
      %v3671 = vrot.slane %v3607, 6
      %v3672 = vrot.slane %v3611, 6
      %v3673 = vrot.slane %v3536, 6
      %v3674 = vrot.slane %v3540, 6
      %v3675 = vrot.slane %v3544, 6
      %v3676 = vrot.slane %v3548, 6
      %v3677 = vrot.slane %v3552, 6
      %v3678 = vrot.slane %v3556, 6
      %v3679 = vrot.slane %v3560, 6
      %v3680 = vrot.slane %v3564, 6
      %v3681 = vrot.slane %v3568, 6
      %v3682 = vrot.slane %v3572, 6
      %v3683 = vrot.slane %v3576, 6
      %v3684 = vrot.slane %v3580, 6
      %v3685 = vrot.slane %v3584, 6
      %v3686 = vrot.slane %v3588, 6
      %v3687 = vrot.slane %v3592, 6
      %v3688 = vrot.slane %v3596, 6
      %v3689 = vrot.slane %v3600, 6
      %v3690 = vrot.slane %v3604, 6
      %v3691 = vrot.slane %v3608, 6
      %v3692 = vrot.slane %v3612, 6
      %v3693 = vsel %vm2121, %v3653, %v3673
      %v3694 = vsel %vm2121, %v3654, %v3674
      %v3695 = vsel %vm2121, %v3655, %v3675
      %v3696 = vsel %vm2121, %v3656, %v3676
      %v3697 = vsel %vm2121, %v3657, %v3677
      %v3698 = vsel %vm2121, %v3658, %v3678
      %v3699 = vsel %vm2121, %v3659, %v3679
      %v3700 = vsel %vm2121, %v3660, %v3680
      %v3701 = vsel %vm2121, %v3661, %v3681
      %v3702 = vsel %vm2121, %v3662, %v3682
      %v3703 = vsel %vm2121, %v3663, %v3683
      %v3704 = vsel %vm2121, %v3664, %v3684
      %v3705 = vsel %vm2121, %v3665, %v3685
      %v3706 = vsel %vm2121, %v3666, %v3686
      %v3707 = vsel %vm2121, %v3667, %v3687
      %v3708 = vsel %vm2121, %v3668, %v3688
      %v3709 = vsel %vm2121, %v3669, %v3689
      %v3710 = vsel %vm2121, %v3670, %v3690
      %v3711 = vsel %vm2121, %v3671, %v3691
      %v3712 = vsel %vm2121, %v3672, %v3692
      %v3713 = vsel %vm2121, %v3633, %v3653
      %v3714 = vsel %vm2121, %v3634, %v3654
      %v3715 = vsel %vm2121, %v3635, %v3655
      %v3716 = vsel %vm2121, %v3636, %v3656
      %v3717 = vsel %vm2121, %v3637, %v3657
      %v3718 = vsel %vm2121, %v3638, %v3658
      %v3719 = vsel %vm2121, %v3639, %v3659
      %v3720 = vsel %vm2121, %v3640, %v3660
      %v3721 = vsel %vm2121, %v3641, %v3661
      %v3722 = vsel %vm2121, %v3642, %v3662
      %v3723 = vsel %vm2121, %v3643, %v3663
      %v3724 = vsel %vm2121, %v3644, %v3664
      %v3725 = vsel %vm2121, %v3645, %v3665
      %v3726 = vsel %vm2121, %v3646, %v3666
      %v3727 = vsel %vm2121, %v3647, %v3667
      %v3728 = vsel %vm2121, %v3648, %v3668
      %v3729 = vsel %vm2121, %v3649, %v3669
      %v3730 = vsel %vm2121, %v3650, %v3670
      %v3731 = vsel %vm2121, %v3651, %v3671
      %v3732 = vsel %vm2121, %v3652, %v3672
      %v3733 = vsel %vm2121, %v3613, %v3633
      %v3734 = vsel %vm2121, %v3614, %v3634
      %v3735 = vsel %vm2121, %v3615, %v3635
      %v3736 = vsel %vm2121, %v3616, %v3636
      %v3737 = vsel %vm2121, %v3617, %v3637
      %v3738 = vsel %vm2121, %v3618, %v3638
      %v3739 = vsel %vm2121, %v3619, %v3639
      %v3740 = vsel %vm2121, %v3620, %v3640
      %v3741 = vsel %vm2121, %v3621, %v3641
      %v3742 = vsel %vm2121, %v3622, %v3642
      %v3743 = vsel %vm2121, %v3623, %v3643
      %v3744 = vsel %vm2121, %v3624, %v3644
      %v3745 = vsel %vm2121, %v3625, %v3645
      %v3746 = vsel %vm2121, %v3626, %v3646
      %v3747 = vsel %vm2121, %v3627, %v3647
      %v3748 = vsel %vm2121, %v3628, %v3648
      %v3749 = vsel %vm2121, %v3629, %v3649
      %v3750 = vsel %vm2121, %v3630, %v3650
      %v3751 = vsel %vm2121, %v3631, %v3651
      %v3752 = vsel %vm2121, %v3632, %v3652
      %v3753 = vsel %vm2121, %v3673, %v3613
      %v3754 = vsel %vm2121, %v3674, %v3614
      %v3755 = vsel %vm2121, %v3675, %v3615
      %v3756 = vsel %vm2121, %v3676, %v3616
      %v3757 = vsel %vm2121, %v3677, %v3617
      %v3758 = vsel %vm2121, %v3678, %v3618
      %v3759 = vsel %vm2121, %v3679, %v3619
      %v3760 = vsel %vm2121, %v3680, %v3620
      %v3761 = vsel %vm2121, %v3681, %v3621
      %v3762 = vsel %vm2121, %v3682, %v3622
      %v3763 = vsel %vm2121, %v3683, %v3623
      %v3764 = vsel %vm2121, %v3684, %v3624
      %v3765 = vsel %vm2121, %v3685, %v3625
      %v3766 = vsel %vm2121, %v3686, %v3626
      %v3767 = vsel %vm2121, %v3687, %v3627
      %v3768 = vsel %vm2121, %v3688, %v3628
      %v3769 = vsel %vm2121, %v3689, %v3629
      %v3770 = vsel %vm2121, %v3690, %v3630
      %v3771 = vsel %vm2121, %v3691, %v3631
      %v3772 = vsel %vm2121, %v3692, %v3632
      %s3773 = scalar_lea.vmem %s3, 8
      %v3774 = vld [vmem:[%s3773] sm:$0xf]
      %v3776 = vsel %vm633, %v3735, 0
      %v3779 = vsel %vm633, %v3715, 0
      %v3782 = vsel %vm633, %v3736, 0
      %v3785 = vsel %vm633, %v3716, 0
      %v3788 = vsel %vm633, %v3737, 0
      %v3791 = vsel %vm633, %v3717, 0
      %v3794 = vsel %vm633, %v3738, 0
      %v3797 = vsel %vm633, %v3718, 0
      %v3800 = vsel %vm633, %v3739, 0
      %v3803 = vsel %vm633, %v3719, 0
      %v3806 = vsel %vm633, %v3740, 0
      %v3809 = vsel %vm633, %v3720, 0
      %v3812 = vsel %vm633, %v3741, 0
      %v3815 = vsel %vm633, %v3721, 0
      %v3818 = vsel %vm633, %v3742, 0
      %v3821 = vsel %vm633, %v3722, 0
      %v3824 = vsel %vm633, %v3743, 0
      %v3827 = vsel %vm633, %v3723, 0
      %v3830 = vsel %vm633, %v3744, 0
      %v3833 = vsel %vm633, %v3724, 0
      %v3836 = vsel %vm633, %v3745, 0
      %v3839 = vsel %vm633, %v3725, 0
      %v3842 = vsel %vm633, %v3746, 0
      %v3845 = vsel %vm633, %v3726, 0
      %v3848 = vsel %vm633, %v3747, 0
      %v3851 = vsel %vm633, %v3727, 0
      %v3854 = vsel %vm633, %v3748, 0
      %v3857 = vsel %vm633, %v3728, 0
      %v3860 = vsel %vm633, %v3749, 0
      %v3863 = vsel %vm633, %v3729, 0
      %v3866 = vsel %vm633, %v3750, 0
      %v3869 = vsel %vm633, %v3730, 0
      %v3872 = vsel %vm2316, %v3774, 0
      %3874 = vmatpush.msra.mxu0 0.0
      %3875 = vmatpush.msra.mxu0 0.0
      %3876 = vmatpush.msra.mxu0 0.0
      %3877 = vmatpush.msra.mxu0 0.0
      %3878 = vmatpush.msra.mxu0 0.0
      %3879 = vmatpush.msra.mxu0 0.0
      %3880 = vmatpush.msra.mxu0 0.0
      %3881 = vmatpush.msra.mxu0 0.0
      %3882 = vmatpush.msra.mxu0 0.0
      %3883 = vmatpush.msra.mxu0 0.0
      %3884 = vmatpush.msra.mxu0 0.0
      %3885 = vmatpush.msra.mxu0 0.0
      %3886 = vmatpush.msra.mxu0 0.0
      %3887 = vmatpush.msra.mxu0 0.0
      %3888 = vmatpush.msra.mxu0 0.0
      %3889 = vmatpush.msra.mxu0 %v3872
      %3890 = vmatmul.f32.gmra.mxu0 %v3776
      %v3891 = vpop.f32.mrf.mxu0
      %v3892 = vadd.f32 0.0, %v3891
      %3893 = vmatmul.f32.gmra.mxu0 %v3779
      %v3894 = vpop.f32.mrf.mxu0
      %v3895 = vadd.f32 0.0, %v3894
      %3896 = vmatmul.f32.gmra.mxu0 %v3782
      %v3897 = vpop.f32.mrf.mxu0
      %v3898 = vadd.f32 0.0, %v3897
      %3899 = vmatmul.f32.gmra.mxu0 %v3785
      %v3900 = vpop.f32.mrf.mxu0
      %v3901 = vadd.f32 0.0, %v3900
      %3902 = vmatmul.f32.gmra.mxu0 %v3788
      %v3903 = vpop.f32.mrf.mxu0
      %v3904 = vadd.f32 0.0, %v3903
      %3905 = vmatmul.f32.gmra.mxu0 %v3791
      %v3906 = vpop.f32.mrf.mxu0
      %v3907 = vadd.f32 0.0, %v3906
      %3908 = vmatmul.f32.gmra.mxu0 %v3794
      %v3909 = vpop.f32.mrf.mxu0
      %v3910 = vadd.f32 0.0, %v3909
      %3911 = vmatmul.f32.gmra.mxu0 %v3797
      %v3912 = vpop.f32.mrf.mxu0
      %v3913 = vadd.f32 0.0, %v3912
      %3914 = vmatmul.f32.gmra.mxu0 %v3800
      %v3915 = vpop.f32.mrf.mxu0
      %v3916 = vadd.f32 0.0, %v3915
      %3917 = vmatmul.f32.gmra.mxu0 %v3803
      %v3918 = vpop.f32.mrf.mxu0
      %v3919 = vadd.f32 0.0, %v3918
      %3920 = vmatmul.f32.gmra.mxu0 %v3806
      %v3921 = vpop.f32.mrf.mxu0
      %v3922 = vadd.f32 0.0, %v3921
      %3923 = vmatmul.f32.gmra.mxu0 %v3809
      %v3924 = vpop.f32.mrf.mxu0
      %v3925 = vadd.f32 0.0, %v3924
      %3926 = vmatmul.f32.gmra.mxu0 %v3812
      %v3927 = vpop.f32.mrf.mxu0
      %v3928 = vadd.f32 0.0, %v3927
      %3929 = vmatmul.f32.gmra.mxu0 %v3815
      %v3930 = vpop.f32.mrf.mxu0
      %v3931 = vadd.f32 0.0, %v3930
      %3932 = vmatmul.f32.gmra.mxu0 %v3818
      %v3933 = vpop.f32.mrf.mxu0
      %v3934 = vadd.f32 0.0, %v3933
      %3935 = vmatmul.f32.gmra.mxu0 %v3821
      %v3936 = vpop.f32.mrf.mxu0
      %v3937 = vadd.f32 0.0, %v3936
      %3938 = vmatmul.f32.gmra.mxu0 %v3824
      %v3939 = vpop.f32.mrf.mxu0
      %v3940 = vadd.f32 0.0, %v3939
      %3941 = vmatmul.f32.gmra.mxu0 %v3827
      %v3942 = vpop.f32.mrf.mxu0
      %v3943 = vadd.f32 0.0, %v3942
      %3944 = vmatmul.f32.gmra.mxu0 %v3830
      %v3945 = vpop.f32.mrf.mxu0
      %v3946 = vadd.f32 0.0, %v3945
      %3947 = vmatmul.f32.gmra.mxu0 %v3833
      %v3948 = vpop.f32.mrf.mxu0
      %v3949 = vadd.f32 0.0, %v3948
      %3950 = vmatmul.f32.gmra.mxu0 %v3836
      %v3951 = vpop.f32.mrf.mxu0
      %v3952 = vadd.f32 0.0, %v3951
      %3953 = vmatmul.f32.gmra.mxu0 %v3839
      %v3954 = vpop.f32.mrf.mxu0
      %v3955 = vadd.f32 0.0, %v3954
      %3956 = vmatmul.f32.gmra.mxu0 %v3842
      %v3957 = vpop.f32.mrf.mxu0
      %v3958 = vadd.f32 0.0, %v3957
      %3959 = vmatmul.f32.gmra.mxu0 %v3845
      %v3960 = vpop.f32.mrf.mxu0
      %v3961 = vadd.f32 0.0, %v3960
      %3962 = vmatmul.f32.gmra.mxu0 %v3848
      %v3963 = vpop.f32.mrf.mxu0
      %v3964 = vadd.f32 0.0, %v3963
      %3965 = vmatmul.f32.gmra.mxu0 %v3851
      %v3966 = vpop.f32.mrf.mxu0
      %v3967 = vadd.f32 0.0, %v3966
      %3968 = vmatmul.f32.gmra.mxu0 %v3854
      %v3969 = vpop.f32.mrf.mxu0
      %v3970 = vadd.f32 0.0, %v3969
      %3971 = vmatmul.f32.gmra.mxu0 %v3857
      %v3972 = vpop.f32.mrf.mxu0
      %v3973 = vadd.f32 0.0, %v3972
      %3974 = vmatmul.f32.gmra.mxu0 %v3860
      %v3975 = vpop.f32.mrf.mxu0
      %v3976 = vadd.f32 0.0, %v3975
      %3977 = vmatmul.f32.gmra.mxu0 %v3863
      %v3978 = vpop.f32.mrf.mxu0
      %v3979 = vadd.f32 0.0, %v3978
      %3980 = vmatmul.f32.gmra.mxu0 %v3866
      %v3981 = vpop.f32.mrf.mxu0
      %v3982 = vadd.f32 0.0, %v3981
      %3983 = vmatmul.f32.gmra.mxu0 %v3869
      %v3984 = vpop.f32.mrf.mxu0
      %v3985 = vadd.f32 0.0, %v3984
      %3986 = vdwg.mxu0
      %v3987 = vadd.f32 %v2550, %v3892
      %v3988 = vadd.f32 %v2553, %v3895
      %v3989 = vadd.f32 %v2556, %v3898
      %v3990 = vadd.f32 %v2559, %v3901
      %v3991 = vadd.f32 %v2562, %v3904
      %v3992 = vadd.f32 %v2565, %v3907
      %v3993 = vadd.f32 %v2568, %v3910
      %v3994 = vadd.f32 %v2571, %v3913
      %v3995 = vadd.f32 %v2574, %v3916
      %v3996 = vadd.f32 %v2577, %v3919
      %v3997 = vadd.f32 %v2580, %v3922
      %v3998 = vadd.f32 %v2583, %v3925
      %v3999 = vadd.f32 %v2586, %v3928
      %v4000 = vadd.f32 %v2589, %v3931
      %v4001 = vadd.f32 %v2592, %v3934
      %v4002 = vadd.f32 %v2595, %v3937
      %v4003 = vadd.f32 %v2598, %v3940
      %v4004 = vadd.f32 %v2601, %v3943
      %v4005 = vadd.f32 %v2604, %v3946
      %v4006 = vadd.f32 %v2607, %v3949
      %v4007 = vadd.f32 %v2610, %v3952
      %v4008 = vadd.f32 %v2613, %v3955
      %v4009 = vadd.f32 %v2616, %v3958
      %v4010 = vadd.f32 %v2619, %v3961
      %v4011 = vadd.f32 %v2622, %v3964
      %v4012 = vadd.f32 %v2625, %v3967
      %v4013 = vadd.f32 %v2628, %v3970
      %v4014 = vadd.f32 %v2631, %v3973
      %v4015 = vadd.f32 %v2634, %v3976
      %v4016 = vadd.f32 %v2637, %v3979
      %v4017 = vadd.f32 %v2640, %v3982
      %v4018 = vadd.f32 %v2643, %v3985
      %v4019 = vmax.f32 %v3753, %v3754
      %v4020 = vmax.f32 %v3733, %v3734
      %v4021 = vmax.f32 %v3713, %v3714
      %v4022 = vmax.f32 %v3693, %v3694
      %v4023 = vmax.f32 %v3754, %v3755
      %v4024 = vmax.f32 %v3734, %v3735
      %v4025 = vmax.f32 %v3714, %v3715
      %v4026 = vmax.f32 %v3694, %v3695
      %v4027 = vmax.f32 %v3755, %v3756
      %v4028 = vmax.f32 %v3735, %v3736
      %v4029 = vmax.f32 %v3715, %v3716
      %v4030 = vmax.f32 %v3695, %v3696
      %v4031 = vmax.f32 %v3756, %v3757
      %v4032 = vmax.f32 %v3736, %v3737
      %v4033 = vmax.f32 %v3716, %v3717
      %v4034 = vmax.f32 %v3696, %v3697
      %v4035 = vmax.f32 %v3757, %v3758
      %v4036 = vmax.f32 %v3737, %v3738
      %v4037 = vmax.f32 %v3717, %v3718
      %v4038 = vmax.f32 %v3697, %v3698
      %v4039 = vmax.f32 %v3758, %v3759
      %v4040 = vmax.f32 %v3738, %v3739
      %v4041 = vmax.f32 %v3718, %v3719
      %v4042 = vmax.f32 %v3698, %v3699
      %v4043 = vmax.f32 %v3759, %v3760
      %v4044 = vmax.f32 %v3739, %v3740
      %v4045 = vmax.f32 %v3719, %v3720
      %v4046 = vmax.f32 %v3699, %v3700
      %v4047 = vmax.f32 %v3760, %v3761
      %v4048 = vmax.f32 %v3740, %v3741
      %v4049 = vmax.f32 %v3720, %v3721
      %v4050 = vmax.f32 %v3700, %v3701
      %v4051 = vmax.f32 %v3761, %v3762
      %v4052 = vmax.f32 %v3741, %v3742
      %v4053 = vmax.f32 %v3721, %v3722
      %v4054 = vmax.f32 %v3701, %v3702
      %v4055 = vmax.f32 %v3762, %v3763
      %v4056 = vmax.f32 %v3742, %v3743
      %v4057 = vmax.f32 %v3722, %v3723
      %v4058 = vmax.f32 %v3702, %v3703
      %v4059 = vmax.f32 %v3763, %v3764
      %v4060 = vmax.f32 %v3743, %v3744
      %v4061 = vmax.f32 %v3723, %v3724
      %v4062 = vmax.f32 %v3703, %v3704
      %v4063 = vmax.f32 %v3764, %v3765
      %v4064 = vmax.f32 %v3744, %v3745
      %v4065 = vmax.f32 %v3724, %v3725
      %v4066 = vmax.f32 %v3704, %v3705
      %v4067 = vmax.f32 %v3765, %v3766
      %v4068 = vmax.f32 %v3745, %v3746
      %v4069 = vmax.f32 %v3725, %v3726
      %v4070 = vmax.f32 %v3705, %v3706
      %v4071 = vmax.f32 %v3766, %v3767
      %v4072 = vmax.f32 %v3746, %v3747
      %v4073 = vmax.f32 %v3726, %v3727
      %v4074 = vmax.f32 %v3706, %v3707
      %v4075 = vmax.f32 %v3767, %v3768
      %v4076 = vmax.f32 %v3747, %v3748
      %v4077 = vmax.f32 %v3727, %v3728
      %v4078 = vmax.f32 %v3707, %v3708
      %v4079 = vmax.f32 %v3768, %v3769
      %v4080 = vmax.f32 %v3748, %v3749
      %v4081 = vmax.f32 %v3728, %v3729
      %v4082 = vmax.f32 %v3708, %v3709
      %v4083 = vmax.f32 %v3769, %v3770
      %v4084 = vmax.f32 %v3749, %v3750
      %v4085 = vmax.f32 %v3729, %v3730
      %v4086 = vmax.f32 %v3709, %v3710
      %v4087 = vmax.f32 %v3770, %v3771
      %v4088 = vmax.f32 %v3750, %v3751
      %v4089 = vmax.f32 %v3730, %v3731
      %v4090 = vmax.f32 %v3710, %v3711
      %v4091 = vmax.f32 %v4019, %v4027
      %v4092 = vmax.f32 %v4020, %v4028
      %v4093 = vmax.f32 %v4021, %v4029
      %v4094 = vmax.f32 %v4022, %v4030
      %v4095 = vmax.f32 %v4023, %v4031
      %v4096 = vmax.f32 %v4024, %v4032
      %v4097 = vmax.f32 %v4025, %v4033
      %v4098 = vmax.f32 %v4026, %v4034
      %v4099 = vmax.f32 %v4027, %v4035
      %v4100 = vmax.f32 %v4028, %v4036
      %v4101 = vmax.f32 %v4029, %v4037
      %v4102 = vmax.f32 %v4030, %v4038
      %v4103 = vmax.f32 %v4031, %v4039
      %v4104 = vmax.f32 %v4032, %v4040
      %v4105 = vmax.f32 %v4033, %v4041
      %v4106 = vmax.f32 %v4034, %v4042
      %v4107 = vmax.f32 %v4035, %v4043
      %v4108 = vmax.f32 %v4036, %v4044
      %v4109 = vmax.f32 %v4037, %v4045
      %v4110 = vmax.f32 %v4038, %v4046
      %v4111 = vmax.f32 %v4039, %v4047
      %v4112 = vmax.f32 %v4040, %v4048
      %v4113 = vmax.f32 %v4041, %v4049
      %v4114 = vmax.f32 %v4042, %v4050
      %v4115 = vmax.f32 %v4043, %v4051
      %v4116 = vmax.f32 %v4044, %v4052
      %v4117 = vmax.f32 %v4045, %v4053
      %v4118 = vmax.f32 %v4046, %v4054
      %v4119 = vmax.f32 %v4047, %v4055
      %v4120 = vmax.f32 %v4048, %v4056
      %v4121 = vmax.f32 %v4049, %v4057
      %v4122 = vmax.f32 %v4050, %v4058
      %v4123 = vmax.f32 %v4051, %v4059
      %v4124 = vmax.f32 %v4052, %v4060
      %v4125 = vmax.f32 %v4053, %v4061
      %v4126 = vmax.f32 %v4054, %v4062
      %v4127 = vmax.f32 %v4055, %v4063
      %v4128 = vmax.f32 %v4056, %v4064
      %v4129 = vmax.f32 %v4057, %v4065
      %v4130 = vmax.f32 %v4058, %v4066
      %v4131 = vmax.f32 %v4059, %v4067
      %v4132 = vmax.f32 %v4060, %v4068
      %v4133 = vmax.f32 %v4061, %v4069
      %v4134 = vmax.f32 %v4062, %v4070
      %v4135 = vmax.f32 %v4063, %v4071
      %v4136 = vmax.f32 %v4064, %v4072
      %v4137 = vmax.f32 %v4065, %v4073
      %v4138 = vmax.f32 %v4066, %v4074
      %v4139 = vmax.f32 %v4067, %v4075
      %v4140 = vmax.f32 %v4068, %v4076
      %v4141 = vmax.f32 %v4069, %v4077
      %v4142 = vmax.f32 %v4070, %v4078
      %v4143 = vmax.f32 %v4071, %v4079
      %v4144 = vmax.f32 %v4072, %v4080
      %v4145 = vmax.f32 %v4073, %v4081
      %v4146 = vmax.f32 %v4074, %v4082
      %v4147 = vmax.f32 %v4075, %v4083
      %v4148 = vmax.f32 %v4076, %v4084
      %v4149 = vmax.f32 %v4077, %v4085
      %v4150 = vmax.f32 %v4078, %v4086
      %v4151 = vmax.f32 %v4079, %v4087
      %v4152 = vmax.f32 %v4080, %v4088
      %v4153 = vmax.f32 %v4081, %v4089
      %v4154 = vmax.f32 %v4082, %v4090
      %v4155 = vmax.f32 %v4091, %v3757
      %v4156 = vmax.f32 %v4092, %v3737
      %v4157 = vmax.f32 %v4093, %v3717
      %v4158 = vmax.f32 %v4094, %v3697
      %v4159 = vmax.f32 %v4095, %v3758
      %v4160 = vmax.f32 %v4096, %v3738
      %v4161 = vmax.f32 %v4097, %v3718
      %v4162 = vmax.f32 %v4098, %v3698
      %v4163 = vmax.f32 %v4099, %v3759
      %v4164 = vmax.f32 %v4100, %v3739
      %v4165 = vmax.f32 %v4101, %v3719
      %v4166 = vmax.f32 %v4102, %v3699
      %v4167 = vmax.f32 %v4103, %v3760
      %v4168 = vmax.f32 %v4104, %v3740
      %v4169 = vmax.f32 %v4105, %v3720
      %v4170 = vmax.f32 %v4106, %v3700
      %v4171 = vmax.f32 %v4107, %v3761
      %v4172 = vmax.f32 %v4108, %v3741
      %v4173 = vmax.f32 %v4109, %v3721
      %v4174 = vmax.f32 %v4110, %v3701
      %v4175 = vmax.f32 %v4111, %v3762
      %v4176 = vmax.f32 %v4112, %v3742
      %v4177 = vmax.f32 %v4113, %v3722
      %v4178 = vmax.f32 %v4114, %v3702
      %v4179 = vmax.f32 %v4115, %v3763
      %v4180 = vmax.f32 %v4116, %v3743
      %v4181 = vmax.f32 %v4117, %v3723
      %v4182 = vmax.f32 %v4118, %v3703
      %v4183 = vmax.f32 %v4119, %v3764
      %v4184 = vmax.f32 %v4120, %v3744
      %v4185 = vmax.f32 %v4121, %v3724
      %v4186 = vmax.f32 %v4122, %v3704
      %v4187 = vmax.f32 %v4123, %v3765
      %v4188 = vmax.f32 %v4124, %v3745
      %v4189 = vmax.f32 %v4125, %v3725
      %v4190 = vmax.f32 %v4126, %v3705
      %v4191 = vmax.f32 %v4127, %v3766
      %v4192 = vmax.f32 %v4128, %v3746
      %v4193 = vmax.f32 %v4129, %v3726
      %v4194 = vmax.f32 %v4130, %v3706
      %v4195 = vmax.f32 %v4131, %v3767
      %v4196 = vmax.f32 %v4132, %v3747
      %v4197 = vmax.f32 %v4133, %v3727
      %v4198 = vmax.f32 %v4134, %v3707
      %v4199 = vmax.f32 %v4135, %v3768
      %v4200 = vmax.f32 %v4136, %v3748
      %v4201 = vmax.f32 %v4137, %v3728
      %v4202 = vmax.f32 %v4138, %v3708
      %v4203 = vmax.f32 %v4139, %v3769
      %v4204 = vmax.f32 %v4140, %v3749
      %v4205 = vmax.f32 %v4141, %v3729
      %v4206 = vmax.f32 %v4142, %v3709
      %v4207 = vmax.f32 %v4143, %v3770
      %v4208 = vmax.f32 %v4144, %v3750
      %v4209 = vmax.f32 %v4145, %v3730
      %v4210 = vmax.f32 %v4146, %v3710
      %v4211 = vmax.f32 %v4147, %v3771
      %v4212 = vmax.f32 %v4148, %v3751
      %v4213 = vmax.f32 %v4149, %v3731
      %v4214 = vmax.f32 %v4150, %v3711
      %v4215 = vmax.f32 %v4151, %v3772
      %v4216 = vmax.f32 %v4152, %v3752
      %v4217 = vmax.f32 %v4153, %v3732
      %v4218 = vmax.f32 %v4154, %v3712
      %v4219 = vrot.slane %v4155, 1
      %v4220 = vrot.slane %v4159, 1
      %v4221 = vrot.slane %v4163, 1
      %v4222 = vrot.slane %v4167, 1
      %v4223 = vrot.slane %v4171, 1
      %v4224 = vrot.slane %v4175, 1
      %v4225 = vrot.slane %v4179, 1
      %v4226 = vrot.slane %v4183, 1
      %v4227 = vrot.slane %v4187, 1
      %v4228 = vrot.slane %v4191, 1
      %v4229 = vrot.slane %v4195, 1
      %v4230 = vrot.slane %v4199, 1
      %v4231 = vrot.slane %v4203, 1
      %v4232 = vrot.slane %v4207, 1
      %v4233 = vrot.slane %v4211, 1
      %v4234 = vrot.slane %v4215, 1
      %v4235 = vrot.slane %v4156, 1
      %v4236 = vrot.slane %v4160, 1
      %v4237 = vrot.slane %v4164, 1
      %v4238 = vrot.slane %v4168, 1
      %v4239 = vrot.slane %v4172, 1
      %v4240 = vrot.slane %v4176, 1
      %v4241 = vrot.slane %v4180, 1
      %v4242 = vrot.slane %v4184, 1
      %v4243 = vrot.slane %v4188, 1
      %v4244 = vrot.slane %v4192, 1
      %v4245 = vrot.slane %v4196, 1
      %v4246 = vrot.slane %v4200, 1
      %v4247 = vrot.slane %v4204, 1
      %v4248 = vrot.slane %v4208, 1
      %v4249 = vrot.slane %v4212, 1
      %v4250 = vrot.slane %v4216, 1
      %v4251 = vrot.slane %v4157, 1
      %v4252 = vrot.slane %v4161, 1
      %v4253 = vrot.slane %v4165, 1
      %v4254 = vrot.slane %v4169, 1
      %v4255 = vrot.slane %v4173, 1
      %v4256 = vrot.slane %v4177, 1
      %v4257 = vrot.slane %v4181, 1
      %v4258 = vrot.slane %v4185, 1
      %v4259 = vrot.slane %v4189, 1
      %v4260 = vrot.slane %v4193, 1
      %v4261 = vrot.slane %v4197, 1
      %v4262 = vrot.slane %v4201, 1
      %v4263 = vrot.slane %v4205, 1
      %v4264 = vrot.slane %v4209, 1
      %v4265 = vrot.slane %v4213, 1
      %v4266 = vrot.slane %v4217, 1
      %v4267 = vrot.slane %v4158, 1
      %v4268 = vrot.slane %v4162, 1
      %v4269 = vrot.slane %v4166, 1
      %v4270 = vrot.slane %v4170, 1
      %v4271 = vrot.slane %v4174, 1
      %v4272 = vrot.slane %v4178, 1
      %v4273 = vrot.slane %v4182, 1
      %v4274 = vrot.slane %v4186, 1
      %v4275 = vrot.slane %v4190, 1
      %v4276 = vrot.slane %v4194, 1
      %v4277 = vrot.slane %v4198, 1
      %v4278 = vrot.slane %v4202, 1
      %v4279 = vrot.slane %v4206, 1
      %v4280 = vrot.slane %v4210, 1
      %v4281 = vrot.slane %v4214, 1
      %v4282 = vrot.slane %v4218, 1
      %v4283 = vsel %vm1254, %v4251, %v4267
      %v4284 = vsel %vm1254, %v4252, %v4268
      %v4285 = vsel %vm1254, %v4253, %v4269
      %v4286 = vsel %vm1254, %v4254, %v4270
      %v4287 = vsel %vm1254, %v4255, %v4271
      %v4288 = vsel %vm1254, %v4256, %v4272
      %v4289 = vsel %vm1254, %v4257, %v4273
      %v4290 = vsel %vm1254, %v4258, %v4274
      %v4291 = vsel %vm1254, %v4259, %v4275
      %v4292 = vsel %vm1254, %v4260, %v4276
      %v4293 = vsel %vm1254, %v4261, %v4277
      %v4294 = vsel %vm1254, %v4262, %v4278
      %v4295 = vsel %vm1254, %v4263, %v4279
      %v4296 = vsel %vm1254, %v4264, %v4280
      %v4297 = vsel %vm1254, %v4265, %v4281
      %v4298 = vsel %vm1254, %v4266, %v4282
      %v4299 = vsel %vm1254, %v4235, %v4251
      %v4300 = vsel %vm1254, %v4236, %v4252
      %v4301 = vsel %vm1254, %v4237, %v4253
      %v4302 = vsel %vm1254, %v4238, %v4254
      %v4303 = vsel %vm1254, %v4239, %v4255
      %v4304 = vsel %vm1254, %v4240, %v4256
      %v4305 = vsel %vm1254, %v4241, %v4257
      %v4306 = vsel %vm1254, %v4242, %v4258
      %v4307 = vsel %vm1254, %v4243, %v4259
      %v4308 = vsel %vm1254, %v4244, %v4260
      %v4309 = vsel %vm1254, %v4245, %v4261
      %v4310 = vsel %vm1254, %v4246, %v4262
      %v4311 = vsel %vm1254, %v4247, %v4263
      %v4312 = vsel %vm1254, %v4248, %v4264
      %v4313 = vsel %vm1254, %v4249, %v4265
      %v4314 = vsel %vm1254, %v4250, %v4266
      %v4315 = vsel %vm1254, %v4219, %v4235
      %v4316 = vsel %vm1254, %v4220, %v4236
      %v4317 = vsel %vm1254, %v4221, %v4237
      %v4318 = vsel %vm1254, %v4222, %v4238
      %v4319 = vsel %vm1254, %v4223, %v4239
      %v4320 = vsel %vm1254, %v4224, %v4240
      %v4321 = vsel %vm1254, %v4225, %v4241
      %v4322 = vsel %vm1254, %v4226, %v4242
      %v4323 = vsel %vm1254, %v4227, %v4243
      %v4324 = vsel %vm1254, %v4228, %v4244
      %v4325 = vsel %vm1254, %v4229, %v4245
      %v4326 = vsel %vm1254, %v4230, %v4246
      %v4327 = vsel %vm1254, %v4231, %v4247
      %v4328 = vsel %vm1254, %v4232, %v4248
      %v4329 = vsel %vm1254, %v4233, %v4249
      %v4330 = vsel %vm1254, %v4234, %v4250
      %v4331 = vsel %vm1254, %v4267, %v4219
      %v4332 = vsel %vm1254, %v4268, %v4220
      %v4333 = vsel %vm1254, %v4269, %v4221
      %v4334 = vsel %vm1254, %v4270, %v4222
      %v4335 = vsel %vm1254, %v4271, %v4223
      %v4336 = vsel %vm1254, %v4272, %v4224
      %v4337 = vsel %vm1254, %v4273, %v4225
      %v4338 = vsel %vm1254, %v4274, %v4226
      %v4339 = vsel %vm1254, %v4275, %v4227
      %v4340 = vsel %vm1254, %v4276, %v4228
      %v4341 = vsel %vm1254, %v4277, %v4229
      %v4342 = vsel %vm1254, %v4278, %v4230
      %v4343 = vsel %vm1254, %v4279, %v4231
      %v4344 = vsel %vm1254, %v4280, %v4232
      %v4345 = vsel %vm1254, %v4281, %v4233
      %v4346 = vsel %vm1254, %v4282, %v4234
      %v4347 = vmax.f32 %v4155, %v4315
      %v4348 = vmax.f32 %v4156, %v4299
      %v4349 = vmax.f32 %v4157, %v4283
      %v4350 = vmax.f32 %v4158, %v4331
      %v4351 = vmax.f32 %v4159, %v4316
      %v4352 = vmax.f32 %v4160, %v4300
      %v4353 = vmax.f32 %v4161, %v4284
      %v4354 = vmax.f32 %v4162, %v4332
      %v4355 = vmax.f32 %v4163, %v4317
      %v4356 = vmax.f32 %v4164, %v4301
      %v4357 = vmax.f32 %v4165, %v4285
      %v4358 = vmax.f32 %v4166, %v4333
      %v4359 = vmax.f32 %v4167, %v4318
      %v4360 = vmax.f32 %v4168, %v4302
      %v4361 = vmax.f32 %v4169, %v4286
      %v4362 = vmax.f32 %v4170, %v4334
      %v4363 = vmax.f32 %v4171, %v4319
      %v4364 = vmax.f32 %v4172, %v4303
      %v4365 = vmax.f32 %v4173, %v4287
      %v4366 = vmax.f32 %v4174, %v4335
      %v4367 = vmax.f32 %v4175, %v4320
      %v4368 = vmax.f32 %v4176, %v4304
      %v4369 = vmax.f32 %v4177, %v4288
      %v4370 = vmax.f32 %v4178, %v4336
      %v4371 = vmax.f32 %v4179, %v4321
      %v4372 = vmax.f32 %v4180, %v4305
      %v4373 = vmax.f32 %v4181, %v4289
      %v4374 = vmax.f32 %v4182, %v4337
      %v4375 = vmax.f32 %v4183, %v4322
      %v4376 = vmax.f32 %v4184, %v4306
      %v4377 = vmax.f32 %v4185, %v4290
      %v4378 = vmax.f32 %v4186, %v4338
      %v4379 = vmax.f32 %v4187, %v4323
      %v4380 = vmax.f32 %v4188, %v4307
      %v4381 = vmax.f32 %v4189, %v4291
      %v4382 = vmax.f32 %v4190, %v4339
      %v4383 = vmax.f32 %v4191, %v4324
      %v4384 = vmax.f32 %v4192, %v4308
      %v4385 = vmax.f32 %v4193, %v4292
      %v4386 = vmax.f32 %v4194, %v4340
      %v4387 = vmax.f32 %v4195, %v4325
      %v4388 = vmax.f32 %v4196, %v4309
      %v4389 = vmax.f32 %v4197, %v4293
      %v4390 = vmax.f32 %v4198, %v4341
      %v4391 = vmax.f32 %v4199, %v4326
      %v4392 = vmax.f32 %v4200, %v4310
      %v4393 = vmax.f32 %v4201, %v4294
      %v4394 = vmax.f32 %v4202, %v4342
      %v4395 = vmax.f32 %v4203, %v4327
      %v4396 = vmax.f32 %v4204, %v4311
      %v4397 = vmax.f32 %v4205, %v4295
      %v4398 = vmax.f32 %v4206, %v4343
      %v4399 = vmax.f32 %v4207, %v4328
      %v4400 = vmax.f32 %v4208, %v4312
      %v4401 = vmax.f32 %v4209, %v4296
      %v4402 = vmax.f32 %v4210, %v4344
      %v4403 = vmax.f32 %v4211, %v4329
      %v4404 = vmax.f32 %v4212, %v4313
      %v4405 = vmax.f32 %v4213, %v4297
      %v4406 = vmax.f32 %v4214, %v4345
      %v4407 = vmax.f32 %v4215, %v4330
      %v4408 = vmax.f32 %v4216, %v4314
      %v4409 = vmax.f32 %v4217, %v4298
      %v4410 = vmax.f32 %v4218, %v4346
      %v4411 = vrot.slane %v4347, 2
      %v4412 = vrot.slane %v4351, 2
      %v4413 = vrot.slane %v4355, 2
      %v4414 = vrot.slane %v4359, 2
      %v4415 = vrot.slane %v4363, 2
      %v4416 = vrot.slane %v4367, 2
      %v4417 = vrot.slane %v4371, 2
      %v4418 = vrot.slane %v4375, 2
      %v4419 = vrot.slane %v4379, 2
      %v4420 = vrot.slane %v4383, 2
      %v4421 = vrot.slane %v4387, 2
      %v4422 = vrot.slane %v4391, 2
      %v4423 = vrot.slane %v4395, 2
      %v4424 = vrot.slane %v4399, 2
      %v4425 = vrot.slane %v4403, 2
      %v4426 = vrot.slane %v4407, 2
      %v4427 = vrot.slane %v4348, 2
      %v4428 = vrot.slane %v4352, 2
      %v4429 = vrot.slane %v4356, 2
      %v4430 = vrot.slane %v4360, 2
      %v4431 = vrot.slane %v4364, 2
      %v4432 = vrot.slane %v4368, 2
      %v4433 = vrot.slane %v4372, 2
      %v4434 = vrot.slane %v4376, 2
      %v4435 = vrot.slane %v4380, 2
      %v4436 = vrot.slane %v4384, 2
      %v4437 = vrot.slane %v4388, 2
      %v4438 = vrot.slane %v4392, 2
      %v4439 = vrot.slane %v4396, 2
      %v4440 = vrot.slane %v4400, 2
      %v4441 = vrot.slane %v4404, 2
      %v4442 = vrot.slane %v4408, 2
      %v4443 = vrot.slane %v4349, 2
      %v4444 = vrot.slane %v4353, 2
      %v4445 = vrot.slane %v4357, 2
      %v4446 = vrot.slane %v4361, 2
      %v4447 = vrot.slane %v4365, 2
      %v4448 = vrot.slane %v4369, 2
      %v4449 = vrot.slane %v4373, 2
      %v4450 = vrot.slane %v4377, 2
      %v4451 = vrot.slane %v4381, 2
      %v4452 = vrot.slane %v4385, 2
      %v4453 = vrot.slane %v4389, 2
      %v4454 = vrot.slane %v4393, 2
      %v4455 = vrot.slane %v4397, 2
      %v4456 = vrot.slane %v4401, 2
      %v4457 = vrot.slane %v4405, 2
      %v4458 = vrot.slane %v4409, 2
      %v4459 = vrot.slane %v4350, 2
      %v4460 = vrot.slane %v4354, 2
      %v4461 = vrot.slane %v4358, 2
      %v4462 = vrot.slane %v4362, 2
      %v4463 = vrot.slane %v4366, 2
      %v4464 = vrot.slane %v4370, 2
      %v4465 = vrot.slane %v4374, 2
      %v4466 = vrot.slane %v4378, 2
      %v4467 = vrot.slane %v4382, 2
      %v4468 = vrot.slane %v4386, 2
      %v4469 = vrot.slane %v4390, 2
      %v4470 = vrot.slane %v4394, 2
      %v4471 = vrot.slane %v4398, 2
      %v4472 = vrot.slane %v4402, 2
      %v4473 = vrot.slane %v4406, 2
      %v4474 = vrot.slane %v4410, 2
      %v4475 = vsel %vm1543, %v4443, %v4459
      %v4476 = vsel %vm1543, %v4444, %v4460
      %v4477 = vsel %vm1543, %v4445, %v4461
      %v4478 = vsel %vm1543, %v4446, %v4462
      %v4479 = vsel %vm1543, %v4447, %v4463
      %v4480 = vsel %vm1543, %v4448, %v4464
      %v4481 = vsel %vm1543, %v4449, %v4465
      %v4482 = vsel %vm1543, %v4450, %v4466
      %v4483 = vsel %vm1543, %v4451, %v4467
      %v4484 = vsel %vm1543, %v4452, %v4468
      %v4485 = vsel %vm1543, %v4453, %v4469
      %v4486 = vsel %vm1543, %v4454, %v4470
      %v4487 = vsel %vm1543, %v4455, %v4471
      %v4488 = vsel %vm1543, %v4456, %v4472
      %v4489 = vsel %vm1543, %v4457, %v4473
      %v4490 = vsel %vm1543, %v4458, %v4474
      %v4491 = vsel %vm1543, %v4427, %v4443
      %v4492 = vsel %vm1543, %v4428, %v4444
      %v4493 = vsel %vm1543, %v4429, %v4445
      %v4494 = vsel %vm1543, %v4430, %v4446
      %v4495 = vsel %vm1543, %v4431, %v4447
      %v4496 = vsel %vm1543, %v4432, %v4448
      %v4497 = vsel %vm1543, %v4433, %v4449
      %v4498 = vsel %vm1543, %v4434, %v4450
      %v4499 = vsel %vm1543, %v4435, %v4451
      %v4500 = vsel %vm1543, %v4436, %v4452
      %v4501 = vsel %vm1543, %v4437, %v4453
      %v4502 = vsel %vm1543, %v4438, %v4454
      %v4503 = vsel %vm1543, %v4439, %v4455
      %v4504 = vsel %vm1543, %v4440, %v4456
      %v4505 = vsel %vm1543, %v4441, %v4457
      %v4506 = vsel %vm1543, %v4442, %v4458
      %v4507 = vsel %vm1543, %v4411, %v4427
      %v4508 = vsel %vm1543, %v4412, %v4428
      %v4509 = vsel %vm1543, %v4413, %v4429
      %v4510 = vsel %vm1543, %v4414, %v4430
      %v4511 = vsel %vm1543, %v4415, %v4431
      %v4512 = vsel %vm1543, %v4416, %v4432
      %v4513 = vsel %vm1543, %v4417, %v4433
      %v4514 = vsel %vm1543, %v4418, %v4434
      %v4515 = vsel %vm1543, %v4419, %v4435
      %v4516 = vsel %vm1543, %v4420, %v4436
      %v4517 = vsel %vm1543, %v4421, %v4437
      %v4518 = vsel %vm1543, %v4422, %v4438
      %v4519 = vsel %vm1543, %v4423, %v4439
      %v4520 = vsel %vm1543, %v4424, %v4440
      %v4521 = vsel %vm1543, %v4425, %v4441
      %v4522 = vsel %vm1543, %v4426, %v4442
      %v4523 = vmax.f32 %v4347, %v4507
      %v4524 = vmax.f32 %v4348, %v4491
      %v4525 = vmax.f32 %v4349, %v4475
      %v4526 = vmax.f32 %v4351, %v4508
      %v4527 = vmax.f32 %v4352, %v4492
      %v4528 = vmax.f32 %v4353, %v4476
      %v4529 = vmax.f32 %v4355, %v4509
      %v4530 = vmax.f32 %v4356, %v4493
      %v4531 = vmax.f32 %v4357, %v4477
      %v4532 = vmax.f32 %v4359, %v4510
      %v4533 = vmax.f32 %v4360, %v4494
      %v4534 = vmax.f32 %v4361, %v4478
      %v4535 = vmax.f32 %v4363, %v4511
      %v4536 = vmax.f32 %v4364, %v4495
      %v4537 = vmax.f32 %v4365, %v4479
      %v4538 = vmax.f32 %v4367, %v4512
      %v4539 = vmax.f32 %v4368, %v4496
      %v4540 = vmax.f32 %v4369, %v4480
      %v4541 = vmax.f32 %v4371, %v4513
      %v4542 = vmax.f32 %v4372, %v4497
      %v4543 = vmax.f32 %v4373, %v4481
      %v4544 = vmax.f32 %v4375, %v4514
      %v4545 = vmax.f32 %v4376, %v4498
      %v4546 = vmax.f32 %v4377, %v4482
      %v4547 = vmax.f32 %v4379, %v4515
      %v4548 = vmax.f32 %v4380, %v4499
      %v4549 = vmax.f32 %v4381, %v4483
      %v4550 = vmax.f32 %v4383, %v4516
      %v4551 = vmax.f32 %v4384, %v4500
      %v4552 = vmax.f32 %v4385, %v4484
      %v4553 = vmax.f32 %v4387, %v4517
      %v4554 = vmax.f32 %v4388, %v4501
      %v4555 = vmax.f32 %v4389, %v4485
      %v4556 = vmax.f32 %v4391, %v4518
      %v4557 = vmax.f32 %v4392, %v4502
      %v4558 = vmax.f32 %v4393, %v4486
      %v4559 = vmax.f32 %v4395, %v4519
      %v4560 = vmax.f32 %v4396, %v4503
      %v4561 = vmax.f32 %v4397, %v4487
      %v4562 = vmax.f32 %v4399, %v4520
      %v4563 = vmax.f32 %v4400, %v4504
      %v4564 = vmax.f32 %v4401, %v4488
      %v4565 = vmax.f32 %v4403, %v4521
      %v4566 = vmax.f32 %v4404, %v4505
      %v4567 = vmax.f32 %v4405, %v4489
      %v4568 = vmax.f32 %v4407, %v4522
      %v4569 = vmax.f32 %v4408, %v4506
      %v4570 = vmax.f32 %v4409, %v4490
      %v4571 = vrot.slane %v4155, 4
      %v4572 = vrot.slane %v4159, 4
      %v4573 = vrot.slane %v4163, 4
      %v4574 = vrot.slane %v4167, 4
      %v4575 = vrot.slane %v4171, 4
      %v4576 = vrot.slane %v4175, 4
      %v4577 = vrot.slane %v4179, 4
      %v4578 = vrot.slane %v4183, 4
      %v4579 = vrot.slane %v4187, 4
      %v4580 = vrot.slane %v4191, 4
      %v4581 = vrot.slane %v4195, 4
      %v4582 = vrot.slane %v4199, 4
      %v4583 = vrot.slane %v4203, 4
      %v4584 = vrot.slane %v4207, 4
      %v4585 = vrot.slane %v4211, 4
      %v4586 = vrot.slane %v4215, 4
      %v4587 = vrot.slane %v4156, 4
      %v4588 = vrot.slane %v4160, 4
      %v4589 = vrot.slane %v4164, 4
      %v4590 = vrot.slane %v4168, 4
      %v4591 = vrot.slane %v4172, 4
      %v4592 = vrot.slane %v4176, 4
      %v4593 = vrot.slane %v4180, 4
      %v4594 = vrot.slane %v4184, 4
      %v4595 = vrot.slane %v4188, 4
      %v4596 = vrot.slane %v4192, 4
      %v4597 = vrot.slane %v4196, 4
      %v4598 = vrot.slane %v4200, 4
      %v4599 = vrot.slane %v4204, 4
      %v4600 = vrot.slane %v4208, 4
      %v4601 = vrot.slane %v4212, 4
      %v4602 = vrot.slane %v4216, 4
      %v4603 = vrot.slane %v4157, 4
      %v4604 = vrot.slane %v4161, 4
      %v4605 = vrot.slane %v4165, 4
      %v4606 = vrot.slane %v4169, 4
      %v4607 = vrot.slane %v4173, 4
      %v4608 = vrot.slane %v4177, 4
      %v4609 = vrot.slane %v4181, 4
      %v4610 = vrot.slane %v4185, 4
      %v4611 = vrot.slane %v4189, 4
      %v4612 = vrot.slane %v4193, 4
      %v4613 = vrot.slane %v4197, 4
      %v4614 = vrot.slane %v4201, 4
      %v4615 = vrot.slane %v4205, 4
      %v4616 = vrot.slane %v4209, 4
      %v4617 = vrot.slane %v4213, 4
      %v4618 = vrot.slane %v4217, 4
      %v4619 = vrot.slane %v4158, 4
      %v4620 = vrot.slane %v4162, 4
      %v4621 = vrot.slane %v4166, 4
      %v4622 = vrot.slane %v4170, 4
      %v4623 = vrot.slane %v4174, 4
      %v4624 = vrot.slane %v4178, 4
      %v4625 = vrot.slane %v4182, 4
      %v4626 = vrot.slane %v4186, 4
      %v4627 = vrot.slane %v4190, 4
      %v4628 = vrot.slane %v4194, 4
      %v4629 = vrot.slane %v4198, 4
      %v4630 = vrot.slane %v4202, 4
      %v4631 = vrot.slane %v4206, 4
      %v4632 = vrot.slane %v4210, 4
      %v4633 = vrot.slane %v4214, 4
      %v4634 = vrot.slane %v4218, 4
      %v4635 = vsel %vm1832, %v4603, %v4619
      %v4636 = vsel %vm1832, %v4604, %v4620
      %v4637 = vsel %vm1832, %v4605, %v4621
      %v4638 = vsel %vm1832, %v4606, %v4622
      %v4639 = vsel %vm1832, %v4607, %v4623
      %v4640 = vsel %vm1832, %v4608, %v4624
      %v4641 = vsel %vm1832, %v4609, %v4625
      %v4642 = vsel %vm1832, %v4610, %v4626
      %v4643 = vsel %vm1832, %v4611, %v4627
      %v4644 = vsel %vm1832, %v4612, %v4628
      %v4645 = vsel %vm1832, %v4613, %v4629
      %v4646 = vsel %vm1832, %v4614, %v4630
      %v4647 = vsel %vm1832, %v4615, %v4631
      %v4648 = vsel %vm1832, %v4616, %v4632
      %v4649 = vsel %vm1832, %v4617, %v4633
      %v4650 = vsel %vm1832, %v4618, %v4634
      %v4651 = vsel %vm1832, %v4587, %v4603
      %v4652 = vsel %vm1832, %v4588, %v4604
      %v4653 = vsel %vm1832, %v4589, %v4605
      %v4654 = vsel %vm1832, %v4590, %v4606
      %v4655 = vsel %vm1832, %v4591, %v4607
      %v4656 = vsel %vm1832, %v4592, %v4608
      %v4657 = vsel %vm1832, %v4593, %v4609
      %v4658 = vsel %vm1832, %v4594, %v4610
      %v4659 = vsel %vm1832, %v4595, %v4611
      %v4660 = vsel %vm1832, %v4596, %v4612
      %v4661 = vsel %vm1832, %v4597, %v4613
      %v4662 = vsel %vm1832, %v4598, %v4614
      %v4663 = vsel %vm1832, %v4599, %v4615
      %v4664 = vsel %vm1832, %v4600, %v4616
      %v4665 = vsel %vm1832, %v4601, %v4617
      %v4666 = vsel %vm1832, %v4602, %v4618
      %v4667 = vsel %vm1832, %v4571, %v4587
      %v4668 = vsel %vm1832, %v4572, %v4588
      %v4669 = vsel %vm1832, %v4573, %v4589
      %v4670 = vsel %vm1832, %v4574, %v4590
      %v4671 = vsel %vm1832, %v4575, %v4591
      %v4672 = vsel %vm1832, %v4576, %v4592
      %v4673 = vsel %vm1832, %v4577, %v4593
      %v4674 = vsel %vm1832, %v4578, %v4594
      %v4675 = vsel %vm1832, %v4579, %v4595
      %v4676 = vsel %vm1832, %v4580, %v4596
      %v4677 = vsel %vm1832, %v4581, %v4597
      %v4678 = vsel %vm1832, %v4582, %v4598
      %v4679 = vsel %vm1832, %v4583, %v4599
      %v4680 = vsel %vm1832, %v4584, %v4600
      %v4681 = vsel %vm1832, %v4585, %v4601
      %v4682 = vsel %vm1832, %v4586, %v4602
      %v4683 = vmax.f32 %v4523, %v4667
      %v4684 = vmax.f32 %v4524, %v4651
      %v4685 = vmax.f32 %v4525, %v4635
      %v4686 = vmax.f32 %v4526, %v4668
      %v4687 = vmax.f32 %v4527, %v4652
      %v4688 = vmax.f32 %v4528, %v4636
      %v4689 = vmax.f32 %v4529, %v4669
      %v4690 = vmax.f32 %v4530, %v4653
      %v4691 = vmax.f32 %v4531, %v4637
      %v4692 = vmax.f32 %v4532, %v4670
      %v4693 = vmax.f32 %v4533, %v4654
      %v4694 = vmax.f32 %v4534, %v4638
      %v4695 = vmax.f32 %v4535, %v4671
      %v4696 = vmax.f32 %v4536, %v4655
      %v4697 = vmax.f32 %v4537, %v4639
      %v4698 = vmax.f32 %v4538, %v4672
      %v4699 = vmax.f32 %v4539, %v4656
      %v4700 = vmax.f32 %v4540, %v4640
      %v4701 = vmax.f32 %v4541, %v4673
      %v4702 = vmax.f32 %v4542, %v4657
      %v4703 = vmax.f32 %v4543, %v4641
      %v4704 = vmax.f32 %v4544, %v4674
      %v4705 = vmax.f32 %v4545, %v4658
      %v4706 = vmax.f32 %v4546, %v4642
      %v4707 = vmax.f32 %v4547, %v4675
      %v4708 = vmax.f32 %v4548, %v4659
      %v4709 = vmax.f32 %v4549, %v4643
      %v4710 = vmax.f32 %v4550, %v4676
      %v4711 = vmax.f32 %v4551, %v4660
      %v4712 = vmax.f32 %v4552, %v4644
      %v4713 = vmax.f32 %v4553, %v4677
      %v4714 = vmax.f32 %v4554, %v4661
      %v4715 = vmax.f32 %v4555, %v4645
      %v4716 = vmax.f32 %v4556, %v4678
      %v4717 = vmax.f32 %v4557, %v4662
      %v4718 = vmax.f32 %v4558, %v4646
      %v4719 = vmax.f32 %v4559, %v4679
      %v4720 = vmax.f32 %v4560, %v4663
      %v4721 = vmax.f32 %v4561, %v4647
      %v4722 = vmax.f32 %v4562, %v4680
      %v4723 = vmax.f32 %v4563, %v4664
      %v4724 = vmax.f32 %v4564, %v4648
      %v4725 = vmax.f32 %v4565, %v4681
      %v4726 = vmax.f32 %v4566, %v4665
      %v4727 = vmax.f32 %v4567, %v4649
      %v4728 = vmax.f32 %v4568, %v4682
      %v4729 = vmax.f32 %v4569, %v4666
      %v4730 = vmax.f32 %v4570, %v4650
      %v4731 = vrot.slane %v4683, 6
      %v4732 = vrot.slane %v4686, 6
      %v4733 = vrot.slane %v4689, 6
      %v4734 = vrot.slane %v4692, 6
      %v4735 = vrot.slane %v4695, 6
      %v4736 = vrot.slane %v4698, 6
      %v4737 = vrot.slane %v4701, 6
      %v4738 = vrot.slane %v4704, 6
      %v4739 = vrot.slane %v4707, 6
      %v4740 = vrot.slane %v4710, 6
      %v4741 = vrot.slane %v4713, 6
      %v4742 = vrot.slane %v4716, 6
      %v4743 = vrot.slane %v4719, 6
      %v4744 = vrot.slane %v4722, 6
      %v4745 = vrot.slane %v4725, 6
      %v4746 = vrot.slane %v4728, 6
      %v4747 = vrot.slane %v4684, 6
      %v4748 = vrot.slane %v4687, 6
      %v4749 = vrot.slane %v4690, 6
      %v4750 = vrot.slane %v4693, 6
      %v4751 = vrot.slane %v4696, 6
      %v4752 = vrot.slane %v4699, 6
      %v4753 = vrot.slane %v4702, 6
      %v4754 = vrot.slane %v4705, 6
      %v4755 = vrot.slane %v4708, 6
      %v4756 = vrot.slane %v4711, 6
      %v4757 = vrot.slane %v4714, 6
      %v4758 = vrot.slane %v4717, 6
      %v4759 = vrot.slane %v4720, 6
      %v4760 = vrot.slane %v4723, 6
      %v4761 = vrot.slane %v4726, 6
      %v4762 = vrot.slane %v4729, 6
      %v4763 = vrot.slane %v4685, 6
      %v4764 = vrot.slane %v4688, 6
      %v4765 = vrot.slane %v4691, 6
      %v4766 = vrot.slane %v4694, 6
      %v4767 = vrot.slane %v4697, 6
      %v4768 = vrot.slane %v4700, 6
      %v4769 = vrot.slane %v4703, 6
      %v4770 = vrot.slane %v4706, 6
      %v4771 = vrot.slane %v4709, 6
      %v4772 = vrot.slane %v4712, 6
      %v4773 = vrot.slane %v4715, 6
      %v4774 = vrot.slane %v4718, 6
      %v4775 = vrot.slane %v4721, 6
      %v4776 = vrot.slane %v4724, 6
      %v4777 = vrot.slane %v4727, 6
      %v4778 = vrot.slane %v4730, 6
      %v4779 = vsel %vm2121, %v4747, %v4763
      %v4780 = vsel %vm2121, %v4748, %v4764
      %v4781 = vsel %vm2121, %v4749, %v4765
      %v4782 = vsel %vm2121, %v4750, %v4766
      %v4783 = vsel %vm2121, %v4751, %v4767
      %v4784 = vsel %vm2121, %v4752, %v4768
      %v4785 = vsel %vm2121, %v4753, %v4769
      %v4786 = vsel %vm2121, %v4754, %v4770
      %v4787 = vsel %vm2121, %v4755, %v4771
      %v4788 = vsel %vm2121, %v4756, %v4772
      %v4789 = vsel %vm2121, %v4757, %v4773
      %v4790 = vsel %vm2121, %v4758, %v4774
      %v4791 = vsel %vm2121, %v4759, %v4775
      %v4792 = vsel %vm2121, %v4760, %v4776
      %v4793 = vsel %vm2121, %v4761, %v4777
      %v4794 = vsel %vm2121, %v4762, %v4778
      %v4795 = vsel %vm2121, %v4731, %v4747
      %v4796 = vsel %vm2121, %v4732, %v4748
      %v4797 = vsel %vm2121, %v4733, %v4749
      %v4798 = vsel %vm2121, %v4734, %v4750
      %v4799 = vsel %vm2121, %v4735, %v4751
      %v4800 = vsel %vm2121, %v4736, %v4752
      %v4801 = vsel %vm2121, %v4737, %v4753
      %v4802 = vsel %vm2121, %v4738, %v4754
      %v4803 = vsel %vm2121, %v4739, %v4755
      %v4804 = vsel %vm2121, %v4740, %v4756
      %v4805 = vsel %vm2121, %v4741, %v4757
      %v4806 = vsel %vm2121, %v4742, %v4758
      %v4807 = vsel %vm2121, %v4743, %v4759
      %v4808 = vsel %vm2121, %v4744, %v4760
      %v4809 = vsel %vm2121, %v4745, %v4761
      %v4810 = vsel %vm2121, %v4746, %v4762
      %s4811 = scalar_lea.vmem %s3, 12
      %v4812 = vld [vmem:[%s4811] sm:$0xf]
      %v4814 = vsel %vm633, %v4795, 0
      %v4817 = vsel %vm633, %v4779, 0
      %v4820 = vsel %vm633, %v4796, 0
      %v4823 = vsel %vm633, %v4780, 0
      %v4826 = vsel %vm633, %v4797, 0
      %v4829 = vsel %vm633, %v4781, 0
      %v4832 = vsel %vm633, %v4798, 0
      %v4835 = vsel %vm633, %v4782, 0
      %v4838 = vsel %vm633, %v4799, 0
      %v4841 = vsel %vm633, %v4783, 0
      %v4844 = vsel %vm633, %v4800, 0
      %v4847 = vsel %vm633, %v4784, 0
      %v4850 = vsel %vm633, %v4801, 0
      %v4853 = vsel %vm633, %v4785, 0
      %v4856 = vsel %vm633, %v4802, 0
      %v4859 = vsel %vm633, %v4786, 0
      %v4862 = vsel %vm633, %v4803, 0
      %v4865 = vsel %vm633, %v4787, 0
      %v4868 = vsel %vm633, %v4804, 0
      %v4871 = vsel %vm633, %v4788, 0
      %v4874 = vsel %vm633, %v4805, 0
      %v4877 = vsel %vm633, %v4789, 0
      %v4880 = vsel %vm633, %v4806, 0
      %v4883 = vsel %vm633, %v4790, 0
      %v4886 = vsel %vm633, %v4807, 0
      %v4889 = vsel %vm633, %v4791, 0
      %v4892 = vsel %vm633, %v4808, 0
      %v4895 = vsel %vm633, %v4792, 0
      %v4898 = vsel %vm633, %v4809, 0
      %v4901 = vsel %vm633, %v4793, 0
      %v4904 = vsel %vm633, %v4810, 0
      %v4907 = vsel %vm633, %v4794, 0
      %v4910 = vsel %vm2316, %v4812, 0
      %4912 = vmatpush.msra.mxu0 0.0
      %4913 = vmatpush.msra.mxu0 0.0
      %4914 = vmatpush.msra.mxu0 0.0
      %4915 = vmatpush.msra.mxu0 0.0
      %4916 = vmatpush.msra.mxu0 0.0
      %4917 = vmatpush.msra.mxu0 0.0
      %4918 = vmatpush.msra.mxu0 0.0
      %4919 = vmatpush.msra.mxu0 0.0
      %4920 = vmatpush.msra.mxu0 0.0
      %4921 = vmatpush.msra.mxu0 0.0
      %4922 = vmatpush.msra.mxu0 0.0
      %4923 = vmatpush.msra.mxu0 0.0
      %4924 = vmatpush.msra.mxu0 0.0
      %4925 = vmatpush.msra.mxu0 0.0
      %4926 = vmatpush.msra.mxu0 0.0
      %4927 = vmatpush.msra.mxu0 %v4910
      %4928 = vmatmul.f32.gmra.mxu0 %v4814
      %v4929 = vpop.f32.mrf.mxu0
      %v4930 = vadd.f32 0.0, %v4929
      %4931 = vmatmul.f32.gmra.mxu0 %v4817
      %v4932 = vpop.f32.mrf.mxu0
      %v4933 = vadd.f32 0.0, %v4932
      %4934 = vmatmul.f32.gmra.mxu0 %v4820
      %v4935 = vpop.f32.mrf.mxu0
      %v4936 = vadd.f32 0.0, %v4935
      %4937 = vmatmul.f32.gmra.mxu0 %v4823
      %v4938 = vpop.f32.mrf.mxu0
      %v4939 = vadd.f32 0.0, %v4938
      %4940 = vmatmul.f32.gmra.mxu0 %v4826
      %v4941 = vpop.f32.mrf.mxu0
      %v4942 = vadd.f32 0.0, %v4941
      %4943 = vmatmul.f32.gmra.mxu0 %v4829
      %v4944 = vpop.f32.mrf.mxu0
      %v4945 = vadd.f32 0.0, %v4944
      %4946 = vmatmul.f32.gmra.mxu0 %v4832
      %v4947 = vpop.f32.mrf.mxu0
      %v4948 = vadd.f32 0.0, %v4947
      %4949 = vmatmul.f32.gmra.mxu0 %v4835
      %v4950 = vpop.f32.mrf.mxu0
      %v4951 = vadd.f32 0.0, %v4950
      %4952 = vmatmul.f32.gmra.mxu0 %v4838
      %v4953 = vpop.f32.mrf.mxu0
      %v4954 = vadd.f32 0.0, %v4953
      %4955 = vmatmul.f32.gmra.mxu0 %v4841
      %v4956 = vpop.f32.mrf.mxu0
      %v4957 = vadd.f32 0.0, %v4956
      %4958 = vmatmul.f32.gmra.mxu0 %v4844
      %v4959 = vpop.f32.mrf.mxu0
      %v4960 = vadd.f32 0.0, %v4959
      %4961 = vmatmul.f32.gmra.mxu0 %v4847
      %v4962 = vpop.f32.mrf.mxu0
      %v4963 = vadd.f32 0.0, %v4962
      %4964 = vmatmul.f32.gmra.mxu0 %v4850
      %v4965 = vpop.f32.mrf.mxu0
      %v4966 = vadd.f32 0.0, %v4965
      %4967 = vmatmul.f32.gmra.mxu0 %v4853
      %v4968 = vpop.f32.mrf.mxu0
      %v4969 = vadd.f32 0.0, %v4968
      %4970 = vmatmul.f32.gmra.mxu0 %v4856
      %v4971 = vpop.f32.mrf.mxu0
      %v4972 = vadd.f32 0.0, %v4971
      %4973 = vmatmul.f32.gmra.mxu0 %v4859
      %v4974 = vpop.f32.mrf.mxu0
      %v4975 = vadd.f32 0.0, %v4974
      %4976 = vmatmul.f32.gmra.mxu0 %v4862
      %v4977 = vpop.f32.mrf.mxu0
      %v4978 = vadd.f32 0.0, %v4977
      %4979 = vmatmul.f32.gmra.mxu0 %v4865
      %v4980 = vpop.f32.mrf.mxu0
      %v4981 = vadd.f32 0.0, %v4980
      %4982 = vmatmul.f32.gmra.mxu0 %v4868
      %v4983 = vpop.f32.mrf.mxu0
      %v4984 = vadd.f32 0.0, %v4983
      %4985 = vmatmul.f32.gmra.mxu0 %v4871
      %v4986 = vpop.f32.mrf.mxu0
      %v4987 = vadd.f32 0.0, %v4986
      %4988 = vmatmul.f32.gmra.mxu0 %v4874
      %v4989 = vpop.f32.mrf.mxu0
      %v4990 = vadd.f32 0.0, %v4989
      %4991 = vmatmul.f32.gmra.mxu0 %v4877
      %v4992 = vpop.f32.mrf.mxu0
      %v4993 = vadd.f32 0.0, %v4992
      %4994 = vmatmul.f32.gmra.mxu0 %v4880
      %v4995 = vpop.f32.mrf.mxu0
      %v4996 = vadd.f32 0.0, %v4995
      %4997 = vmatmul.f32.gmra.mxu0 %v4883
      %v4998 = vpop.f32.mrf.mxu0
      %v4999 = vadd.f32 0.0, %v4998
      %5000 = vmatmul.f32.gmra.mxu0 %v4886
      %v5001 = vpop.f32.mrf.mxu0
      %v5002 = vadd.f32 0.0, %v5001
      %5003 = vmatmul.f32.gmra.mxu0 %v4889
      %v5004 = vpop.f32.mrf.mxu0
      %v5005 = vadd.f32 0.0, %v5004
      %5006 = vmatmul.f32.gmra.mxu0 %v4892
      %v5007 = vpop.f32.mrf.mxu0
      %v5008 = vadd.f32 0.0, %v5007
      %5009 = vmatmul.f32.gmra.mxu0 %v4895
      %v5010 = vpop.f32.mrf.mxu0
      %v5011 = vadd.f32 0.0, %v5010
      %5012 = vmatmul.f32.gmra.mxu0 %v4898
      %v5013 = vpop.f32.mrf.mxu0
      %v5014 = vadd.f32 0.0, %v5013
      %5015 = vmatmul.f32.gmra.mxu0 %v4901
      %v5016 = vpop.f32.mrf.mxu0
      %v5017 = vadd.f32 0.0, %v5016
      %5018 = vmatmul.f32.gmra.mxu0 %v4904
      %v5019 = vpop.f32.mrf.mxu0
      %v5020 = vadd.f32 0.0, %v5019
      %5021 = vmatmul.f32.gmra.mxu0 %v4907
      %v5022 = vpop.f32.mrf.mxu0
      %v5023 = vadd.f32 0.0, %v5022
      %5024 = vdwg.mxu0
      %v5025 = vadd.f32 %v3987, %v4930
      %v5026 = vadd.f32 %v3988, %v4933
      %v5027 = vadd.f32 %v3989, %v4936
      %v5028 = vadd.f32 %v3990, %v4939
      %v5029 = vadd.f32 %v3991, %v4942
      %v5030 = vadd.f32 %v3992, %v4945
      %v5031 = vadd.f32 %v3993, %v4948
      %v5032 = vadd.f32 %v3994, %v4951
      %v5033 = vadd.f32 %v3995, %v4954
      %v5034 = vadd.f32 %v3996, %v4957
      %v5035 = vadd.f32 %v3997, %v4960
      %v5036 = vadd.f32 %v3998, %v4963
      %v5037 = vadd.f32 %v3999, %v4966
      %v5038 = vadd.f32 %v4000, %v4969
      %v5039 = vadd.f32 %v4001, %v4972
      %v5040 = vadd.f32 %v4002, %v4975
      %v5041 = vadd.f32 %v4003, %v4978
      %v5042 = vadd.f32 %v4004, %v4981
      %v5043 = vadd.f32 %v4005, %v4984
      %v5044 = vadd.f32 %v4006, %v4987
      %v5045 = vadd.f32 %v4007, %v4990
      %v5046 = vadd.f32 %v4008, %v4993
      %v5047 = vadd.f32 %v4009, %v4996
      %v5048 = vadd.f32 %v4010, %v4999
      %v5049 = vadd.f32 %v4011, %v5002
      %v5050 = vadd.f32 %v4012, %v5005
      %v5051 = vadd.f32 %v4013, %v5008
      %v5052 = vadd.f32 %v4014, %v5011
      %v5053 = vadd.f32 %v4015, %v5014
      %v5054 = vadd.f32 %v4016, %v5017
      %v5055 = vadd.f32 %v4017, %v5020
      %v5056 = vadd.f32 %v4018, %v5023
      %v5057 = vld [vmem:[%s4] sm:$0x1]
      %v5059 = vperm.slane %v5057, 0
      %v5061 = vadd.f32 %v5025, %v5059
      %v5062 = vadd.f32 %v5026, %v5059
      %v5063 = vadd.f32 %v5027, %v5059
      %v5064 = vadd.f32 %v5028, %v5059
      %v5065 = vadd.f32 %v5029, %v5059
      %v5066 = vadd.f32 %v5030, %v5059
      %v5067 = vadd.f32 %v5031, %v5059
      %v5068 = vadd.f32 %v5032, %v5059
      %v5069 = vadd.f32 %v5033, %v5059
      %v5070 = vadd.f32 %v5034, %v5059
      %v5071 = vadd.f32 %v5035, %v5059
      %v5072 = vadd.f32 %v5036, %v5059
      %v5073 = vadd.f32 %v5037, %v5059
      %v5074 = vadd.f32 %v5038, %v5059
      %v5075 = vadd.f32 %v5039, %v5059
      %v5076 = vadd.f32 %v5040, %v5059
      %v5077 = vadd.f32 %v5041, %v5059
      %v5078 = vadd.f32 %v5042, %v5059
      %v5079 = vadd.f32 %v5043, %v5059
      %v5080 = vadd.f32 %v5044, %v5059
      %v5081 = vadd.f32 %v5045, %v5059
      %v5082 = vadd.f32 %v5046, %v5059
      %v5083 = vadd.f32 %v5047, %v5059
      %v5084 = vadd.f32 %v5048, %v5059
      %v5085 = vadd.f32 %v5049, %v5059
      %v5086 = vadd.f32 %v5050, %v5059
      %v5087 = vadd.f32 %v5051, %v5059
      %v5088 = vadd.f32 %v5052, %v5059
      %v5089 = vadd.f32 %v5053, %v5059
      %v5090 = vadd.f32 %v5054, %v5059
      %v5091 = vadd.f32 %v5055, %v5059
      %v5092 = vadd.f32 %v5056, %v5059
      %v5093 = vadd.f32 %v5061, 3.0
      %v5094 = vadd.f32 %v5062, 3.0
      %v5095 = vadd.f32 %v5063, 3.0
      %v5096 = vadd.f32 %v5064, 3.0
      %v5097 = vadd.f32 %v5065, 3.0
      %v5098 = vadd.f32 %v5066, 3.0
      %v5099 = vadd.f32 %v5067, 3.0
      %v5100 = vadd.f32 %v5068, 3.0
      %v5101 = vadd.f32 %v5069, 3.0
      %v5102 = vadd.f32 %v5070, 3.0
      %v5103 = vadd.f32 %v5071, 3.0
      %v5104 = vadd.f32 %v5072, 3.0
      %v5105 = vadd.f32 %v5073, 3.0
      %v5106 = vadd.f32 %v5074, 3.0
      %v5107 = vadd.f32 %v5075, 3.0
      %v5108 = vadd.f32 %v5076, 3.0
      %v5109 = vadd.f32 %v5077, 3.0
      %v5110 = vadd.f32 %v5078, 3.0
      %v5111 = vadd.f32 %v5079, 3.0
      %v5112 = vadd.f32 %v5080, 3.0
      %v5113 = vadd.f32 %v5081, 3.0
      %v5114 = vadd.f32 %v5082, 3.0
      %v5115 = vadd.f32 %v5083, 3.0
      %v5116 = vadd.f32 %v5084, 3.0
      %v5117 = vadd.f32 %v5085, 3.0
      %v5118 = vadd.f32 %v5086, 3.0
      %v5119 = vadd.f32 %v5087, 3.0
      %v5120 = vadd.f32 %v5088, 3.0
      %v5121 = vadd.f32 %v5089, 3.0
      %v5122 = vadd.f32 %v5090, 3.0
      %v5123 = vadd.f32 %v5091, 3.0
      %v5124 = vadd.f32 %v5092, 3.0
      %v5125 = vmax.f32 %v5093, 0.0
      %v5126 = vmax.f32 %v5094, 0.0
      %v5127 = vmax.f32 %v5095, 0.0
      %v5128 = vmax.f32 %v5096, 0.0
      %v5129 = vmax.f32 %v5097, 0.0
      %v5130 = vmax.f32 %v5098, 0.0
      %v5131 = vmax.f32 %v5099, 0.0
      %v5132 = vmax.f32 %v5100, 0.0
      %v5133 = vmax.f32 %v5101, 0.0
      %v5134 = vmax.f32 %v5102, 0.0
      %v5135 = vmax.f32 %v5103, 0.0
      %v5136 = vmax.f32 %v5104, 0.0
      %v5137 = vmax.f32 %v5105, 0.0
      %v5138 = vmax.f32 %v5106, 0.0
      %v5139 = vmax.f32 %v5107, 0.0
      %v5140 = vmax.f32 %v5108, 0.0
      %v5141 = vmax.f32 %v5109, 0.0
      %v5142 = vmax.f32 %v5110, 0.0
      %v5143 = vmax.f32 %v5111, 0.0
      %v5144 = vmax.f32 %v5112, 0.0
      %v5145 = vmax.f32 %v5113, 0.0
      %v5146 = vmax.f32 %v5114, 0.0
      %v5147 = vmax.f32 %v5115, 0.0
      %v5148 = vmax.f32 %v5116, 0.0
      %v5149 = vmax.f32 %v5117, 0.0
      %v5150 = vmax.f32 %v5118, 0.0
      %v5151 = vmax.f32 %v5119, 0.0
      %v5152 = vmax.f32 %v5120, 0.0
      %v5153 = vmax.f32 %v5121, 0.0
      %v5154 = vmax.f32 %v5122, 0.0
      %v5155 = vmax.f32 %v5123, 0.0
      %v5156 = vmax.f32 %v5124, 0.0
      %v5157 = vmin.f32 %v5125, 6.0
      %v5158 = vmin.f32 %v5126, 6.0
      %v5159 = vmin.f32 %v5127, 6.0
      %v5160 = vmin.f32 %v5128, 6.0
      %v5161 = vmin.f32 %v5129, 6.0
      %v5162 = vmin.f32 %v5130, 6.0
      %v5163 = vmin.f32 %v5131, 6.0
      %v5164 = vmin.f32 %v5132, 6.0
      %v5165 = vmin.f32 %v5133, 6.0
      %v5166 = vmin.f32 %v5134, 6.0
      %v5167 = vmin.f32 %v5135, 6.0
      %v5168 = vmin.f32 %v5136, 6.0
      %v5169 = vmin.f32 %v5137, 6.0
      %v5170 = vmin.f32 %v5138, 6.0
      %v5171 = vmin.f32 %v5139, 6.0
      %v5172 = vmin.f32 %v5140, 6.0
      %v5173 = vmin.f32 %v5141, 6.0
      %v5174 = vmin.f32 %v5142, 6.0
      %v5175 = vmin.f32 %v5143, 6.0
      %v5176 = vmin.f32 %v5144, 6.0
      %v5177 = vmin.f32 %v5145, 6.0
      %v5178 = vmin.f32 %v5146, 6.0
      %v5179 = vmin.f32 %v5147, 6.0
      %v5180 = vmin.f32 %v5148, 6.0
      %v5181 = vmin.f32 %v5149, 6.0
      %v5182 = vmin.f32 %v5150, 6.0
      %v5183 = vmin.f32 %v5151, 6.0
      %v5184 = vmin.f32 %v5152, 6.0
      %v5185 = vmin.f32 %v5153, 6.0
      %v5186 = vmin.f32 %v5154, 6.0
      %v5187 = vmin.f32 %v5155, 6.0
      %v5188 = vmin.f32 %v5156, 6.0
      %v5189 = vmul.f32 %v5061, %v5157
      %v5190 = vmul.f32 %v5062, %v5158
      %v5191 = vmul.f32 %v5063, %v5159
      %v5192 = vmul.f32 %v5064, %v5160
      %v5193 = vmul.f32 %v5065, %v5161
      %v5194 = vmul.f32 %v5066, %v5162
      %v5195 = vmul.f32 %v5067, %v5163
      %v5196 = vmul.f32 %v5068, %v5164
      %v5197 = vmul.f32 %v5069, %v5165
      %v5198 = vmul.f32 %v5070, %v5166
      %v5199 = vmul.f32 %v5071, %v5167
      %v5200 = vmul.f32 %v5072, %v5168
      %v5201 = vmul.f32 %v5073, %v5169
      %v5202 = vmul.f32 %v5074, %v5170
      %v5203 = vmul.f32 %v5075, %v5171
      %v5204 = vmul.f32 %v5076, %v5172
      %v5205 = vmul.f32 %v5077, %v5173
      %v5206 = vmul.f32 %v5078, %v5174
      %v5207 = vmul.f32 %v5079, %v5175
      %v5208 = vmul.f32 %v5080, %v5176
      %v5209 = vmul.f32 %v5081, %v5177
      %v5210 = vmul.f32 %v5082, %v5178
      %v5211 = vmul.f32 %v5083, %v5179
      %v5212 = vmul.f32 %v5084, %v5180
      %v5213 = vmul.f32 %v5085, %v5181
      %v5214 = vmul.f32 %v5086, %v5182
      %v5215 = vmul.f32 %v5087, %v5183
      %v5216 = vmul.f32 %v5088, %v5184
      %v5217 = vmul.f32 %v5089, %v5185
      %v5218 = vmul.f32 %v5090, %v5186
      %v5219 = vmul.f32 %v5091, %v5187
      %v5220 = vmul.f32 %v5092, %v5188
      %v5221 = vmul.f32 %v5189, 0.16666667
      %v5222 = vmul.f32 %v5190, 0.16666667
      %v5223 = vmul.f32 %v5191, 0.16666667
      %v5224 = vmul.f32 %v5192, 0.16666667
      %v5225 = vmul.f32 %v5193, 0.16666667
      %v5226 = vmul.f32 %v5194, 0.16666667
      %v5227 = vmul.f32 %v5195, 0.16666667
      %v5228 = vmul.f32 %v5196, 0.16666667
      %v5229 = vmul.f32 %v5197, 0.16666667
      %v5230 = vmul.f32 %v5198, 0.16666667
      %v5231 = vmul.f32 %v5199, 0.16666667
      %v5232 = vmul.f32 %v5200, 0.16666667
      %v5233 = vmul.f32 %v5201, 0.16666667
      %v5234 = vmul.f32 %v5202, 0.16666667
      %v5235 = vmul.f32 %v5203, 0.16666667
      %v5236 = vmul.f32 %v5204, 0.16666667
      %v5237 = vmul.f32 %v5205, 0.16666667
      %v5238 = vmul.f32 %v5206, 0.16666667
      %v5239 = vmul.f32 %v5207, 0.16666667
      %v5240 = vmul.f32 %v5208, 0.16666667
      %v5241 = vmul.f32 %v5209, 0.16666667
      %v5242 = vmul.f32 %v5210, 0.16666667
      %v5243 = vmul.f32 %v5211, 0.16666667
      %v5244 = vmul.f32 %v5212, 0.16666667
      %v5245 = vmul.f32 %v5213, 0.16666667
      %v5246 = vmul.f32 %v5214, 0.16666667
      %v5247 = vmul.f32 %v5215, 0.16666667
      %v5248 = vmul.f32 %v5216, 0.16666667
      %v5249 = vmul.f32 %v5217, 0.16666667
      %v5250 = vmul.f32 %v5218, 0.16666667
      %v5251 = vmul.f32 %v5219, 0.16666667
      %v5252 = vmul.f32 %v5220, 0.16666667
      %5253 = vst.msk [vmem:[%s224] sm:$0xff] %vm262, %v5221
      %5254 = vst.msk [vmem:[%s224 + $0x8] sm:$0xff] %vm262, %v5222
      %5255 = vst.msk [vmem:[%s224 + $0x10] sm:$0xff] %vm262, %v5223
      %5256 = vst.msk [vmem:[%s224 + $0x18] sm:$0xff] %vm262, %v5224
      %5257 = vst.msk [vmem:[%s224 + $0x20] sm:$0xff] %vm262, %v5225
      %5258 = vst.msk [vmem:[%s224 + $0x28] sm:$0xff] %vm262, %v5226
      %5259 = vst.msk [vmem:[%s224 + $0x30] sm:$0xff] %vm262, %v5227
      %5260 = vst.msk [vmem:[%s224 + $0x38] sm:$0xff] %vm262, %v5228
      %5261 = vst.msk [vmem:[%s224 + $0x40] sm:$0xff] %vm262, %v5229
      %5262 = vst.msk [vmem:[%s224 + $0x48] sm:$0xff] %vm262, %v5230
      %5263 = vst.msk [vmem:[%s224 + $0x50] sm:$0xff] %vm262, %v5231
      %5264 = vst.msk [vmem:[%s224 + $0x58] sm:$0xff] %vm262, %v5232
      %5265 = vst.msk [vmem:[%s224 + $0x60] sm:$0xff] %vm262, %v5233
      %5266 = vst.msk [vmem:[%s224 + $0x68] sm:$0xff] %vm262, %v5234
      %5267 = vst.msk [vmem:[%s224 + $0x70] sm:$0xff] %vm262, %v5235
      %5268 = vst.msk [vmem:[%s224 + $0x78] sm:$0xff] %vm262, %v5236
      %5269 = vst.msk [vmem:[%s224 + $0x80] sm:$0xff] %vm262, %v5237
      %5270 = vst.msk [vmem:[%s224 + $0x88] sm:$0xff] %vm262, %v5238
      %5271 = vst.msk [vmem:[%s224 + $0x90] sm:$0xff] %vm262, %v5239
      %5272 = vst.msk [vmem:[%s224 + $0x98] sm:$0xff] %vm262, %v5240
      %5273 = vst.msk [vmem:[%s224 + $0xa0] sm:$0xff] %vm262, %v5241
      %5274 = vst.msk [vmem:[%s224 + $0xa8] sm:$0xff] %vm262, %v5242
      %5275 = vst.msk [vmem:[%s224 + $0xb0] sm:$0xff] %vm262, %v5243
      %5276 = vst.msk [vmem:[%s224 + $0xb8] sm:$0xff] %vm262, %v5244
      %5277 = vst.msk [vmem:[%s224 + $0xc0] sm:$0xff] %vm262, %v5245
      %5278 = vst.msk [vmem:[%s224 + $0xc8] sm:$0xff] %vm262, %v5246
      %5279 = vst.msk [vmem:[%s224 + $0xd0] sm:$0xff] %vm262, %v5247
      %5280 = vst.msk [vmem:[%s224 + $0xd8] sm:$0xff] %vm262, %v5248
      %5281 = vst.msk [vmem:[%s224 + $0xe0] sm:$0xff] %vm262, %v5249
      %5282 = vst.msk [vmem:[%s224 + $0xe8] sm:$0xff] %vm262, %v5250
      %5283 = vst.msk [vmem:[%s224 + $0xf0] sm:$0xff] %vm262, %v5251
      %5284 = vst.msk [vmem:[%s224 + $0xf8] sm:$0xff] %vm262, %v5252
      %p5285 = scmp.lt.s32.totalorder %s16, 1
      %s5286 = scalar_select %p5285, %s16, 1
      %s5287 = smul.addr %s5286, 32
      %s5288 = smul.addr %s5287, 8
      %s5289 = scalar_lea.vmem %s5, %s5288
      // Predicated region
      $region41: #{tpu_custom_call.1} parent=39 // pred_check
        %p5290 = pneg %p144
      $region42: #{tpu_custom_call.1} parent=39 // pred_check_branch
        %5292 = sbr.rel (%p5290) target = $region44
      $region43: #{tpu_custom_call.1} parent=39 // pred_region
        _
      $region44: #{tpu_custom_call.1} parent=39 // pred_fallthru
        _
    $region40: #{tpu_custom_call.1} parent=5 // pred_fallthru
      _
    %p5293 = scmp.le.s32.totalorder 2, %s11
    // Predicated region
    $region45: #{tpu_custom_call.1} parent=5 // pred_check
      %p5294 = pneg %p5293
    $region46: #{tpu_custom_call.1} parent=5 // pred_check_branch
      %5296 = sbr.rel (%p5294) target = $region48
    $region47: #{tpu_custom_call.1} parent=5 // pred_region
      %s5297 = ssub.s32 %s11, 2
      // Predicated region
      $region49: #{tpu_custom_call.1} parent=47 // pred_check
        %p5298 = pneg %p150
      $region50: #{tpu_custom_call.1} parent=47 // pred_check_branch
        %5300 = sbr.rel (%p5298) target = $region52
      $region51: #{tpu_custom_call.1} parent=47 // pred_region
        %p5301 = scmp.lt.s32.totalorder %s17, 1
        %s5302 = scalar_select %p5301, %s17, 1
        %s5303 = smul.addr %s5302, 32
        %s5304 = smul.addr %s5303, 8
        %s5305 = scalar_lea.vmem %s5, %s5304
      $region52: #{tpu_custom_call.1} parent=47 // pred_fallthru
        _
    $region48: #{tpu_custom_call.1} parent=5 // pred_fallthru
      _
  $region6: #{tpu_custom_call.1} parent=0 // loop_footer
    %s15 = sadd.s32 1, %s11
  $region7: #{tpu_custom_call.1} parent=0 // loop_footer_branch
    %10 = sbr.rel target = $region3
  $region8: #{tpu_custom_call.1} parent=0 // loop_exit
    _

</llo_original>
